<compile_context>
chip_gen: v7x
topology: tpu7x:2x2x1
jax: 0.10.0
libtpu: 0.0.40
codegen_flags: <defaults>
</compile_context>

<pallas_src>
import math

import jax
import jax.numpy as jnp
from jax.experimental import pallas as pl
from jax.experimental.pallas import tpu as pltpu


def _round_up(v, m):
    return ((v + m - 1) // m) * m


def _kernel(x_ref, w_ref, phase_ref, o_ref):
    # x_ref:     (tm, pack)   packed scalar values (pack spatial points / row)
    # w_ref:     (pack, PD)   block-diagonal 1/dim_t (row p nonzero only on
    #                         lanes [p*D, (p+1)*D))
    # phase_ref: (1, PD)      0 on even feature lanes, pi/2 on odd lanes
    # o_ref:     (tm, PD)     lane-dense interleaved sin/cos embedding
    #
    # The scale-by-1/dim_t lands on the otherwise idle MXU; HIGHEST precision
    # keeps it at f32 accuracy.  The only VPU work left is one sin polynomial.
    arg = jnp.dot(x_ref[...], w_ref[...],
                  preferred_element_type=jnp.float32,
                  precision=jax.lax.Precision.HIGHEST) + phase_ref[...]
    o_ref[...] = jnp.sin(arg).astype(o_ref.dtype)


def scalar_embedding_sine(x, num_pos_feats=64, temperature=10000.0,
                          tm=8192, out_dtype=jnp.float32):
    """Pallas implementation of ScalarEmbeddingSine.forward.

    x: (B, H, W) -> (B, H, W, num_pos_feats).
    (`normalize`/`scale` are never used in the reference forward.)
    out_dtype=jnp.bfloat16 halves HBM writeback (the dominant traffic) at the
    cost of diverging from the f32 PyTorch reference.
    """
    B, H, W = x.shape
    D = int(num_pos_feats)
    assert D % 2 == 0, "num_pos_feats must be even (interleaved sin/cos)"
    M = B * H * W

    # --- lane packing --------------------------------------------------------
    pack_base = 128 // math.gcd(D, 128)      # smallest pack with pack*D % 128 == 0
    if pack_base * D > 1024:                 # pathological D: give up lane density
        pack_base = 1
    pack = pack_base
    # Widen the output tile up to 512 lanes when a divisor of M allows it:
    # fewer rows -> less (tm,128) lane-padding waste on the x block, fewer
    # store ops; the extra matmul K is free on the MXU.
    for mult in (8, 4, 2):
        cand = mult * pack_base
        if cand * D <= 512 and M % cand == 0:
            pack = cand
            break
    PD = pack * D

    # Pad M up to a multiple of pack (dummy rows, sliced off after) so the
    # output tile stays lane-dense instead of dropping to masked stores.
    Mp = _round_up(M, pack)
    x_flat = x.reshape(M).astype(jnp.float32)
    if Mp != M:
        x_flat = jnp.pad(x_flat, (0, Mp - M))
    Mrows = Mp // pack
    x2 = x_flat.reshape(Mrows, pack)

    # --- constants derived from __init__ args --------------------------------
    k = jnp.arange(D, dtype=jnp.float32)
    inv_dim_t = 1.0 / (temperature ** (2.0 * jnp.floor(k / 2.0) / D))      # (D,)
    phase = jnp.where(jnp.arange(D) % 2 == 1,
                      jnp.float32(math.pi / 2.0), jnp.float32(0.0))        # (D,)
    w = (jnp.eye(pack, dtype=jnp.float32)[:, :, None]
         * inv_dim_t[None, None, :]).reshape(pack, PD)                     # (pack, PD)
    phase_t = jnp.tile(phase, (pack,)).reshape(1, PD)                      # (1, PD)

    # --- row-tile selection ---------------------------------------------------
    out_itemsize = jnp.dtype(out_dtype).itemsize
    # Double-buffered VMEM per row: output tile + lane-padded (tm,128) x tile.
    bytes_per_row = 2 * PD * out_itemsize + 2 * 128 * 4
    vmem_budget = 24 * 1024 * 1024           # headroom under the 32 MiB limit
    vmem_cap = max(16, (vmem_budget // bytes_per_row) // 16 * 16)
    tm = max(16, min(int(tm), vmem_cap, _round_up(Mrows, 16)))
    tm = max(16, (tm // 16) * 16)            # multiple of 16: bf16-safe sublanes
    grid = pl.cdiv(Mrows, tm)
    # A small odd grid leaves one of v7x's two TensorCores idle for a whole
    # step under dimension_semantics=("parallel",); rebalance to an even grid.
    if 1 < grid < 16 and grid % 2 == 1:
        tm = max(16, _round_up(pl.cdiv(Mrows, grid + 1), 16))
        grid = pl.cdiv(Mrows, tm)

    out = pl.pallas_call(
        _kernel,
        out_shape=jax.ShapeDtypeStruct((Mrows, PD), out_dtype),
        grid_spec=pltpu.PrefetchScalarGridSpec(
            num_scalar_prefetch=0,
            grid=(grid,),
            in_specs=[
                pl.BlockSpec((tm, pack), lambda i: (i, 0)),   # packed scalars
                pl.BlockSpec((pack, PD), lambda i: (0, 0)),   # block-diag 1/dim_t
                pl.BlockSpec((1, PD), lambda i: (0, 0)),      # phase offsets
            ],
            out_specs=pl.BlockSpec((tm, PD), lambda i: (i, 0)),
        ),
        compiler_params=pltpu.CompilerParams(
            dimension_semantics=("parallel",),
            vmem_limit_bytes=32 * 1024 * 1024,
        ),
    )(x2, w, phase_t)

    # (Mrows, pack*D) is row-major identical to (Mp, D): metadata-only reshape.
    out = out.reshape(Mp, D)
    if Mp != M:
        out = out[:M]      # only taken when M % pack != 0 (rare)
    return out.reshape(B, H, W, D)


def _reference(x, num_pos_feats=64, temperature=10000.0):
    # Pure-JAX transcription of the PyTorch forward, for verification.
    D = num_pos_feats
    k = jnp.arange(D, dtype=jnp.float32)
    dim_t = temperature ** (2.0 * jnp.floor(k / 2.0) / D)
    pos = x.astype(jnp.float32)[..., None] / dim_t
    s = jnp.sin(pos[..., 0::2])
    c = jnp.cos(pos[..., 1::2])
    return jnp.stack([s, c], axis=4).reshape(*x.shape, D)


if __name__ == "__main__":
    key = jax.random.PRNGKey(0)
    B, H, W = 2, 16, 16
    num_pos_feats = 64
    x = jax.random.uniform(key, (B, H, W), dtype=jnp.float32) * 10.0

    out = scalar_embedding_sine(x, num_pos_feats=num_pos_feats)
    out = jax.block_until_ready(out)

    ref = _reference(x, num_pos_feats=num_pos_feats)
    assert out.shape == (B, H, W, num_pos_feats), out.shape
    assert jnp.allclose(out, ref, atol=2e-5, rtol=2e-5), "mismatch vs reference"
    print("KERNEL_OK")
</pallas_src>

<mosaic_0001>
module attributes {stable_mosaic.version = 11 : i64} {
  func.func @_kernel(%arg0: i32, %arg1: memref<64x8xf32, #tpu.memory_space<vmem>>, %arg2: memref<8x512xf32, #tpu.memory_space<vmem>>, %arg3: memref<1x512xf32, #tpu.memory_space<vmem>>, %arg4: memref<64x512xf32, #tpu.memory_space<vmem>>) attributes {dimension_semantics = [#tpu.dimension_semantics<parallel>], iteration_bounds = array<i64: 1>, scalar_prefetch = 0 : i64, scratch_operands = 0 : i64, tpu.core_type = #tpu.core_type<tc>, window_params = [{transform_indices = @transform_0, window_bounds = array<i64: 64, 8>}, {pipeline_mode = #tpu.pipeline_mode<synchronous>, transform_indices = @transform_1, window_bounds = array<i64: 8, 512>}, {pipeline_mode = #tpu.pipeline_mode<synchronous>, transform_indices = @transform_2, window_bounds = array<i64: 1, 512>}, {transform_indices = @transform_3, window_bounds = array<i64: 64, 512>}]} {
    %c0 = arith.constant 0 : index
    %c0_0 = arith.constant 0 : index
    %0 = vector.load %arg1[%c0, %c0_0] : memref<64x8xf32, #tpu.memory_space<vmem>>, vector<64x8xf32>
    %c0_1 = arith.constant 0 : index
    %c0_2 = arith.constant 0 : index
    %1 = vector.load %arg2[%c0_1, %c0_2] : memref<8x512xf32, #tpu.memory_space<vmem>>, vector<8x512xf32>
    %cst = arith.constant dense<0.000000e+00> : vector<64x512xf32>
    %2 = tpu.matmul %0, %1, %cst {dimension_numbers = #tpu.dot_dimension_numbers<[1], [0], [0], [1], [0, 0, 1, 1], [], []>, precision = #tpu.contract_precision<fp32>} : vector<64x8xf32>, vector<8x512xf32>, vector<64x512xf32> -> vector<64x512xf32>
    %c0_3 = arith.constant 0 : index
    %c0_4 = arith.constant 0 : index
    %3 = vector.load %arg3[%c0_3, %c0_4] : memref<1x512xf32, #tpu.memory_space<vmem>>, vector<1x512xf32>
    %4 = vector.broadcast %3 : vector<1x512xf32> to vector<64x512xf32>
    %5 = arith.addf %2, %4 : vector<64x512xf32>
    %6 = math.sin %5 : vector<64x512xf32>
    %c0_5 = arith.constant 0 : index
    %c0_6 = arith.constant 0 : index
    %7 = vector.load %arg4[%c0_5, %c0_6] : memref<64x512xf32, #tpu.memory_space<vmem>>, vector<64x512xf32>
    tpu.vector_store %arg4[%c0_5, %c0_6], %6 {strides = array<i32>} : memref<64x512xf32, #tpu.memory_space<vmem>>, vector<64x512xf32>,
    return
  }
  func.func @transform_0(%arg0: i32) -> (i32, i32) {
    %c0_i32 = arith.constant 0 : i32
    %c0_i32_0 = arith.constant 0 : i32
    return %arg0, %c0_i32 : i32, i32
  }
  func.func @transform_1(%arg0: i32) -> (i32, i32) {
    %c0_i32 = arith.constant 0 : i32
    %c0_i32_0 = arith.constant 0 : i32
    %c0_i32_1 = arith.constant 0 : i32
    return %c0_i32, %c0_i32_0 : i32, i32
  }
  func.func @transform_2(%arg0: i32) -> (i32, i32) {
    %c0_i32 = arith.constant 0 : i32
    %c0_i32_0 = arith.constant 0 : i32
    %c0_i32_1 = arith.constant 0 : i32
    return %c0_i32, %c0_i32_0 : i32, i32
  }
  func.func @transform_3(%arg0: i32) -> (i32, i32) {
    %c0_i32 = arith.constant 0 : i32
    %c0_i32_0 = arith.constant 0 : i32
    return %arg0, %c0_i32 : i32, i32
  }
}

</mosaic_0001>

<llo_original>
// kernel: tpu_custom_call.1
$region0: #{tpu_custom_call.1}
  #allocation0 [shape = 'u32[]', space=smem, size = 0x4, offset = 0x4, fixed_abs, tag = 'smem constant byte address 0x4 - core index']
  #allocation1 [shape = 'u32[144,128]{1,0:T(1,128)}', space=vmem, size = 0x12000, scoped, tag = 'internal scratch']
  %s0 = inlined_call_operand.vmem [shape: f32[64,8], index: 0, kind: input, shape index: {}]
  %s1 = inlined_call_operand.vmem [shape: f32[8,512], index: 1, kind: input, shape index: {}]
  %s2 = inlined_call_operand.vmem [shape: f32[1,512], index: 2, kind: input, shape index: {}]
  %s3 = inlined_call_operand.hbm [shape: f32[64,512], index: 3, kind: output, shape index: {}]
  %s4 = sld [smem:[#allocation0]]
  $region22: #{tpu_custom_call.1} parent=0
    _
  %s6 = ssub.s32 1, %s4
  %s7 = scalar_select 0, %s6, %s4
  $region1: #{tpu_custom_call.1} parent=0
    #allocation2 [shape = 'u8[131072]{0}', space=vmem, size = 0x20000, scoped, tag = 'output window, operand 0, single buffered']
    #allocation3 [shape = 's32[1]{0}', space=sflag, size = 0x4, scoped, tag = 'scoped memory for tpu_custom_call.1']
    %8 = vsyncpa [#allocation3], 0
    // Predicated region
    $region2: #{tpu_custom_call.1} parent=1 // pred_check
      _
    $region3: #{tpu_custom_call.1} parent=1 // pred_check_branch
      %10 = sbr.rel (0) target = $region5
    $region4: #{tpu_custom_call.1} parent=1 // pred_region
      _
    $region5: #{tpu_custom_call.1} parent=1 // pred_fallthru
      _
    // Predicated region
    $region6: #{tpu_custom_call.1} parent=1 // pred_check
      _
    $region7: #{tpu_custom_call.1} parent=1 // pred_check_branch
      %12 = sbr.rel (0) target = $region9
    $region8: #{tpu_custom_call.1} parent=1 // pred_region
      _
    $region9: #{tpu_custom_call.1} parent=1 // pred_fallthru
      _
    // Predicated region
    $region10: #{tpu_custom_call.1} parent=1 // pred_check
      _
    $region11: #{tpu_custom_call.1} parent=1 // pred_check_branch
      %14 = sbr.rel (0) target = $region13
    $region12: #{tpu_custom_call.1} parent=1 // pred_region
      _
    $region13: #{tpu_custom_call.1} parent=1 // pred_fallthru
      _
    %v15 = vld [vmem:[%s0] sm:$0xff]
    %v16 = vld [vmem:[%s0 + $0x8] sm:$0xff]
    %v17 = vld [vmem:[%s0 + $0x10] sm:$0xff]
    %v18 = vld [vmem:[%s0 + $0x18] sm:$0xff]
    %v19 = vld [vmem:[%s0 + $0x20] sm:$0xff]
    %v20 = vld [vmem:[%s0 + $0x28] sm:$0xff]
    %v21 = vld [vmem:[%s0 + $0x30] sm:$0xff]
    %v22 = vld [vmem:[%s0 + $0x38] sm:$0xff]
    %v23 = vld [vmem:[%s1] sm:$0xff]
    %v24 = vld [vmem:[%s1 + $0x8] sm:$0xff]
    %v25 = vld [vmem:[%s1 + $0x10] sm:$0xff]
    %v26 = vld [vmem:[%s1 + $0x18] sm:$0xff]
    %v27 = vld [vmem:[%s2] sm:$0xf]
    %v29 = vlaneseq
    %v30 = vshrl.u32 %v29, 7
    %v31 = vsub.s32 0, %v30
    %v32 = vrot.slane %v27, %v31
    %v33 = vlaneseq
    %v34 = vshrl.u32 %v33, 7
    %v35 = vsub.s32 1, %v34
    %v36 = vrot.slane %v27, %v35
    %v37 = vlaneseq
    %v38 = vshrl.u32 %v37, 7
    %v39 = vsub.s32 2, %v38
    %v40 = vrot.slane %v27, %v39
    %v41 = vlaneseq
    %v42 = vshrl.u32 %v41, 7
    %v43 = vsub.s32 3, %v42
    %v44 = vrot.slane %v27, %v43
    %vm49 = vcmask 64512
    %v51 = vsel %vm49, %v15, 0
    %v54 = vsel %vm49, %v16, 0
    %v57 = vsel %vm49, %v17, 0
    %v60 = vsel %vm49, %v18, 0
    %v63 = vsel %vm49, %v19, 0
    %v66 = vsel %vm49, %v20, 0
    %v69 = vsel %vm49, %v21, 0
    %v72 = vsel %vm49, %v22, 0
    %v74 = vand.u32 %v24, 4294901760
    %75 = vmatprep.subr.mxu0 %v74
    %v76 = vand.u32 %v23, 4294901760
    %77 = vmatpush1.msra.mxu0 %v76
    %78 = vmatprep.subr.mxu0 0.0
    %79 = vmatpush1.msra.mxu0 0.0
    %80 = vmatprep.subr.mxu0 0.0
    %81 = vmatpush1.msra.mxu0 0.0
    %82 = vmatprep.subr.mxu0 0.0
    %83 = vmatpush1.msra.mxu0 0.0
    %84 = vmatprep.subr.mxu0 0.0
    %85 = vmatpush1.msra.mxu0 0.0
    %86 = vmatprep.subr.mxu0 0.0
    %87 = vmatpush1.msra.mxu0 0.0
    %88 = vmatprep.subr.mxu0 0.0
    %89 = vmatpush1.msra.mxu0 0.0
    %90 = vmatprep.subr.mxu0 0.0
    %91 = vmatpush1.msra.mxu0 0.0
    %92 = vmatprep.subr.mxu0 0.0
    %93 = vmatpush1.msra.mxu0 0.0
    %94 = vmatprep.subr.mxu0 0.0
    %95 = vmatpush1.msra.mxu0 0.0
    %96 = vmatprep.subr.mxu0 0.0
    %97 = vmatpush1.msra.mxu0 0.0
    %98 = vmatprep.subr.mxu0 0.0
    %99 = vmatpush1.msra.mxu0 0.0
    %100 = vmatprep.subr.mxu0 0.0
    %101 = vmatpush1.msra.mxu0 0.0
    %102 = vmatprep.subr.mxu0 0.0
    %103 = vmatpush1.msra.mxu0 0.0
    %104 = vmatprep.subr.mxu0 0.0
    %105 = vmatpush1.msra.mxu0 0.0
    %106 = vmatprep.subr.mxu0 0.0
    %107 = vmatpush1.msra.mxu0 0.0
    %108 = vmatprep.subr.mxu0 0.0
    %109 = vmatpush1.msra.mxu0 0.0
    %110 = vmatprep.subr.mxu0 0.0
    %111 = vmatpush1.msra.mxu0 0.0
    %112 = vmatprep.subr.mxu0 0.0
    %113 = vmatpush1.msra.mxu0 0.0
    %114 = vmatprep.subr.mxu0 0.0
    %115 = vmatpush1.msra.mxu0 0.0
    %116 = vmatprep.subr.mxu0 0.0
    %117 = vmatpush1.msra.mxu0 0.0
    %118 = vmatprep.subr.mxu0 0.0
    %119 = vmatpush1.msra.mxu0 0.0
    %120 = vmatprep.subr.mxu0 0.0
    %121 = vmatpush1.msra.mxu0 0.0
    %122 = vmatprep.subr.mxu0 0.0
    %123 = vmatpush1.msra.mxu0 0.0
    %124 = vmatprep.subr.mxu0 0.0
    %125 = vmatpush1.msra.mxu0 0.0
    %126 = vmatprep.subr.mxu0 0.0
    %127 = vmatpush1.msra.mxu0 0.0
    %128 = vmatprep.subr.mxu0 0.0
    %129 = vmatpush1.msra.mxu0 0.0
    %130 = vmatprep.subr.mxu0 0.0
    %131 = vmatpush1.msra.mxu0 0.0
    %132 = vmatprep.subr.mxu0 0.0
    %133 = vmatpush1.msra.mxu0 0.0
    %134 = vmatprep.subr.mxu0 0.0
    %135 = vmatpush1.msra.mxu0 0.0
    %136 = vmatprep.subr.mxu0 0.0
    %137 = vmatpush1.msra.mxu0 0.0
    %138 = vmatprep.subr.mxu0 0.0
    %139 = vmatpush1.msra.mxu0 0.0
    %140 = vmatprep.mubr.f32.mxu0 0.0
    %v141 = vand.u32 %v51, 4294901760
    %v142 = vsub.f32 %v51, %v141
    %v143 = vand.u32 %v142, 4294901760
    %v144 = vsub.f32 %v142, %v143
    %v145 = vand.u32 %v144, 4294901760
    %146 = vmatmul.mubr.f32.gmra.mrb[0].mxu0 %v145
    %v147 = vpop.f32.mrb[0].mxu0
    %v148 = vadd.f32 %v32, %v147
    %v149 = vpop.f32.mrb[0].mxu0
    %v150 = vadd.f32 %v36, %v149
    %151 = vmatprep.mubr.f32.mxu0 0.0
    %v152 = vand.u32 %v54, 4294901760
    %v153 = vsub.f32 %v54, %v152
    %v154 = vand.u32 %v153, 4294901760
    %v155 = vsub.f32 %v153, %v154
    %v156 = vand.u32 %v155, 4294901760
    %157 = vmatmul.mubr.f32.gmra.mrb[0].mxu0 %v156
    %v158 = vpop.f32.mrb[0].mxu0
    %v159 = vadd.f32 %v32, %v158
    %v160 = vpop.f32.mrb[0].mxu0
    %v161 = vadd.f32 %v36, %v160
    %162 = vmatprep.mubr.f32.mxu0 0.0
    %v163 = vand.u32 %v57, 4294901760
    %v164 = vsub.f32 %v57, %v163
    %v165 = vand.u32 %v164, 4294901760
    %v166 = vsub.f32 %v164, %v165
    %v167 = vand.u32 %v166, 4294901760
    %168 = vmatmul.mubr.f32.gmra.mrb[0].mxu0 %v167
    %v169 = vpop.f32.mrb[0].mxu0
    %v170 = vadd.f32 %v32, %v169
    %v171 = vpop.f32.mrb[0].mxu0
    %v172 = vadd.f32 %v36, %v171
    %173 = vmatprep.mubr.f32.mxu0 0.0
    %v174 = vand.u32 %v60, 4294901760
    %v175 = vsub.f32 %v60, %v174
    %v176 = vand.u32 %v175, 4294901760
    %v177 = vsub.f32 %v175, %v176
    %v178 = vand.u32 %v177, 4294901760
    %179 = vmatmul.mubr.f32.gmra.mrb[0].mxu0 %v178
    %v180 = vpop.f32.mrb[0].mxu0
    %v181 = vadd.f32 %v32, %v180
    %v182 = vpop.f32.mrb[0].mxu0
    %v183 = vadd.f32 %v36, %v182
    %184 = vmatprep.mubr.f32.mxu0 0.0
    %v185 = vand.u32 %v63, 4294901760
    %v186 = vsub.f32 %v63, %v185
    %v187 = vand.u32 %v186, 4294901760
    %v188 = vsub.f32 %v186, %v187
    %v189 = vand.u32 %v188, 4294901760
    %190 = vmatmul.mubr.f32.gmra.mrb[0].mxu0 %v189
    %v191 = vpop.f32.mrb[0].mxu0
    %v192 = vadd.f32 %v32, %v191
    %v193 = vpop.f32.mrb[0].mxu0
    %v194 = vadd.f32 %v36, %v193
    %195 = vmatprep.mubr.f32.mxu0 0.0
    %v196 = vand.u32 %v66, 4294901760
    %v197 = vsub.f32 %v66, %v196
    %v198 = vand.u32 %v197, 4294901760
    %v199 = vsub.f32 %v197, %v198
    %v200 = vand.u32 %v199, 4294901760
    %201 = vmatmul.mubr.f32.gmra.mrb[0].mxu0 %v200
    %v202 = vpop.f32.mrb[0].mxu0
    %v203 = vadd.f32 %v32, %v202
    %v204 = vpop.f32.mrb[0].mxu0
    %v205 = vadd.f32 %v36, %v204
    %206 = vmatprep.mubr.f32.mxu0 0.0
    %v207 = vand.u32 %v69, 4294901760
    %v208 = vsub.f32 %v69, %v207
    %v209 = vand.u32 %v208, 4294901760
    %v210 = vsub.f32 %v208, %v209
    %v211 = vand.u32 %v210, 4294901760
    %212 = vmatmul.mubr.f32.gmra.mrb[0].mxu0 %v211
    %v213 = vpop.f32.mrb[0].mxu0
    %v214 = vadd.f32 %v32, %v213
    %v215 = vpop.f32.mrb[0].mxu0
    %v216 = vadd.f32 %v36, %v215
    %217 = vmatprep.mubr.f32.mxu0 0.0
    %v218 = vand.u32 %v72, 4294901760
    %v219 = vsub.f32 %v72, %v218
    %v220 = vand.u32 %v219, 4294901760
    %v221 = vsub.f32 %v219, %v220
    %v222 = vand.u32 %v221, 4294901760
    %223 = vmatmul.mubr.f32.gmra.mrb[0].mxu0 %v222
    %v224 = vpop.f32.mrb[0].mxu0
    %v225 = vadd.f32 %v32, %v224
    %v226 = vpop.f32.mrb[0].mxu0
    %v227 = vadd.f32 %v36, %v226
    %228 = vdwg.mxu0
    %v229 = vand.u32 %v24, 4294901760
    %v230 = vsub.f32 %v24, %v229
    %v231 = vand.u32 %v230, 4294901760
    %v232 = vsub.f32 %v230, %v231
    %v233 = vand.u32 %v232, 4294901760
    %234 = vmatprep.subr.mxu0 %v233
    %v235 = vand.u32 %v23, 4294901760
    %v236 = vsub.f32 %v23, %v235
    %v237 = vand.u32 %v236, 4294901760
    %v238 = vsub.f32 %v236, %v237
    %v239 = vand.u32 %v238, 4294901760
    %240 = vmatpush1.msra.mxu0 %v239
    %241 = vmatprep.subr.mxu0 0.0
    %242 = vmatpush1.msra.mxu0 0.0
    %243 = vmatprep.subr.mxu0 0.0
    %244 = vmatpush1.msra.mxu0 0.0
    %245 = vmatprep.subr.mxu0 0.0
    %246 = vmatpush1.msra.mxu0 0.0
    %247 = vmatprep.subr.mxu0 0.0
    %248 = vmatpush1.msra.mxu0 0.0
    %249 = vmatprep.subr.mxu0 0.0
    %250 = vmatpush1.msra.mxu0 0.0
    %251 = vmatprep.subr.mxu0 0.0
    %252 = vmatpush1.msra.mxu0 0.0
    %253 = vmatprep.subr.mxu0 0.0
    %254 = vmatpush1.msra.mxu0 0.0
    %255 = vmatprep.subr.mxu0 0.0
    %256 = vmatpush1.msra.mxu0 0.0
    %257 = vmatprep.subr.mxu0 0.0
    %258 = vmatpush1.msra.mxu0 0.0
    %259 = vmatprep.subr.mxu0 0.0
    %260 = vmatpush1.msra.mxu0 0.0
    %261 = vmatprep.subr.mxu0 0.0
    %262 = vmatpush1.msra.mxu0 0.0
    %263 = vmatprep.subr.mxu0 0.0
    %264 = vmatpush1.msra.mxu0 0.0
    %265 = vmatprep.subr.mxu0 0.0
    %266 = vmatpush1.msra.mxu0 0.0
    %267 = vmatprep.subr.mxu0 0.0
    %268 = vmatpush1.msra.mxu0 0.0
    %269 = vmatprep.subr.mxu0 0.0
    %270 = vmatpush1.msra.mxu0 0.0
    %271 = vmatprep.subr.mxu0 0.0
    %272 = vmatpush1.msra.mxu0 0.0
    %273 = vmatprep.subr.mxu0 0.0
    %274 = vmatpush1.msra.mxu0 0.0
    %275 = vmatprep.subr.mxu0 0.0
    %276 = vmatpush1.msra.mxu0 0.0
    %277 = vmatprep.subr.mxu0 0.0
    %278 = vmatpush1.msra.mxu0 0.0
    %279 = vmatprep.subr.mxu0 0.0
    %280 = vmatpush1.msra.mxu0 0.0
    %281 = vmatprep.subr.mxu0 0.0
    %282 = vmatpush1.msra.mxu0 0.0
    %283 = vmatprep.subr.mxu0 0.0
    %284 = vmatpush1.msra.mxu0 0.0
    %285 = vmatprep.subr.mxu0 0.0
    %286 = vmatpush1.msra.mxu0 0.0
    %287 = vmatprep.subr.mxu0 0.0
    %288 = vmatpush1.msra.mxu0 0.0
    %289 = vmatprep.subr.mxu0 0.0
    %290 = vmatpush1.msra.mxu0 0.0
    %291 = vmatprep.subr.mxu0 0.0
    %292 = vmatpush1.msra.mxu0 0.0
    %293 = vmatprep.subr.mxu0 0.0
    %294 = vmatpush1.msra.mxu0 0.0
    %295 = vmatprep.subr.mxu0 0.0
    %296 = vmatpush1.msra.mxu0 0.0
    %297 = vmatprep.subr.mxu0 0.0
    %298 = vmatpush1.msra.mxu0 0.0
    %299 = vmatprep.subr.mxu0 0.0
    %300 = vmatpush1.msra.mxu0 0.0
    %301 = vmatprep.subr.mxu0 0.0
    %302 = vmatpush1.msra.mxu0 0.0
    %303 = vmatprep.mubr.f32.mxu0 0.0
    %v304 = vand.u32 %v51, 4294901760
    %305 = vmatmul.mubr.f32.gmra.mrb[0].mxu0 %v304
    %v306 = vpop.f32.mrb[0].mxu0
    %v307 = vadd.f32 %v148, %v306
    %v308 = vpop.f32.mrb[0].mxu0
    %v309 = vadd.f32 %v150, %v308
    %310 = vmatprep.mubr.f32.mxu0 0.0
    %v311 = vand.u32 %v54, 4294901760
    %312 = vmatmul.mubr.f32.gmra.mrb[0].mxu0 %v311
    %v313 = vpop.f32.mrb[0].mxu0
    %v314 = vadd.f32 %v159, %v313
    %v315 = vpop.f32.mrb[0].mxu0
    %v316 = vadd.f32 %v161, %v315
    %317 = vmatprep.mubr.f32.mxu0 0.0
    %v318 = vand.u32 %v57, 4294901760
    %319 = vmatmul.mubr.f32.gmra.mrb[0].mxu0 %v318
    %v320 = vpop.f32.mrb[0].mxu0
    %v321 = vadd.f32 %v170, %v320
    %v322 = vpop.f32.mrb[0].mxu0
    %v323 = vadd.f32 %v172, %v322
    %324 = vmatprep.mubr.f32.mxu0 0.0
    %v325 = vand.u32 %v60, 4294901760
    %326 = vmatmul.mubr.f32.gmra.mrb[0].mxu0 %v325
    %v327 = vpop.f32.mrb[0].mxu0
    %v328 = vadd.f32 %v181, %v327
    %v329 = vpop.f32.mrb[0].mxu0
    %v330 = vadd.f32 %v183, %v329
    %331 = vmatprep.mubr.f32.mxu0 0.0
    %v332 = vand.u32 %v63, 4294901760
    %333 = vmatmul.mubr.f32.gmra.mrb[0].mxu0 %v332
    %v334 = vpop.f32.mrb[0].mxu0
    %v335 = vadd.f32 %v192, %v334
    %v336 = vpop.f32.mrb[0].mxu0
    %v337 = vadd.f32 %v194, %v336
    %338 = vmatprep.mubr.f32.mxu0 0.0
    %v339 = vand.u32 %v66, 4294901760
    %340 = vmatmul.mubr.f32.gmra.mrb[0].mxu0 %v339
    %v341 = vpop.f32.mrb[0].mxu0
    %v342 = vadd.f32 %v203, %v341
    %v343 = vpop.f32.mrb[0].mxu0
    %v344 = vadd.f32 %v205, %v343
    %345 = vmatprep.mubr.f32.mxu0 0.0
    %v346 = vand.u32 %v69, 4294901760
    %347 = vmatmul.mubr.f32.gmra.mrb[0].mxu0 %v346
    %v348 = vpop.f32.mrb[0].mxu0
    %v349 = vadd.f32 %v214, %v348
    %v350 = vpop.f32.mrb[0].mxu0
    %v351 = vadd.f32 %v216, %v350
    %352 = vmatprep.mubr.f32.mxu0 0.0
    %v353 = vand.u32 %v72, 4294901760
    %354 = vmatmul.mubr.f32.gmra.mrb[0].mxu0 %v353
    %v355 = vpop.f32.mrb[0].mxu0
    %v356 = vadd.f32 %v225, %v355
    %v357 = vpop.f32.mrb[0].mxu0
    %v358 = vadd.f32 %v227, %v357
    %359 = vdwg.mxu0
    %v360 = vand.u32 %v24, 4294901760
    %v361 = vsub.f32 %v24, %v360
    %362 = vmatprep.subr.mxu0 %v361
    %v363 = vand.u32 %v23, 4294901760
    %v364 = vsub.f32 %v23, %v363
    %365 = vmatpush1.msra.mxu0 %v364
    %366 = vmatprep.subr.mxu0 0.0
    %367 = vmatpush1.msra.mxu0 0.0
    %368 = vmatprep.subr.mxu0 0.0
    %369 = vmatpush1.msra.mxu0 0.0
    %370 = vmatprep.subr.mxu0 0.0
    %371 = vmatpush1.msra.mxu0 0.0
    %372 = vmatprep.subr.mxu0 0.0
    %373 = vmatpush1.msra.mxu0 0.0
    %374 = vmatprep.subr.mxu0 0.0
    %375 = vmatpush1.msra.mxu0 0.0
    %376 = vmatprep.subr.mxu0 0.0
    %377 = vmatpush1.msra.mxu0 0.0
    %378 = vmatprep.subr.mxu0 0.0
    %379 = vmatpush1.msra.mxu0 0.0
    %380 = vmatprep.subr.mxu0 0.0
    %381 = vmatpush1.msra.mxu0 0.0
    %382 = vmatprep.subr.mxu0 0.0
    %383 = vmatpush1.msra.mxu0 0.0
    %384 = vmatprep.subr.mxu0 0.0
    %385 = vmatpush1.msra.mxu0 0.0
    %386 = vmatprep.subr.mxu0 0.0
    %387 = vmatpush1.msra.mxu0 0.0
    %388 = vmatprep.subr.mxu0 0.0
    %389 = vmatpush1.msra.mxu0 0.0
    %390 = vmatprep.subr.mxu0 0.0
    %391 = vmatpush1.msra.mxu0 0.0
    %392 = vmatprep.subr.mxu0 0.0
    %393 = vmatpush1.msra.mxu0 0.0
    %394 = vmatprep.subr.mxu0 0.0
    %395 = vmatpush1.msra.mxu0 0.0
    %396 = vmatprep.subr.mxu0 0.0
    %397 = vmatpush1.msra.mxu0 0.0
    %398 = vmatprep.subr.mxu0 0.0
    %399 = vmatpush1.msra.mxu0 0.0
    %400 = vmatprep.subr.mxu0 0.0
    %401 = vmatpush1.msra.mxu0 0.0
    %402 = vmatprep.subr.mxu0 0.0
    %403 = vmatpush1.msra.mxu0 0.0
    %404 = vmatprep.subr.mxu0 0.0
    %405 = vmatpush1.msra.mxu0 0.0
    %406 = vmatprep.subr.mxu0 0.0
    %407 = vmatpush1.msra.mxu0 0.0
    %408 = vmatprep.subr.mxu0 0.0
    %409 = vmatpush1.msra.mxu0 0.0
    %410 = vmatprep.subr.mxu0 0.0
    %411 = vmatpush1.msra.mxu0 0.0
    %412 = vmatprep.subr.mxu0 0.0
    %413 = vmatpush1.msra.mxu0 0.0
    %414 = vmatprep.subr.mxu0 0.0
    %415 = vmatpush1.msra.mxu0 0.0
    %416 = vmatprep.subr.mxu0 0.0
    %417 = vmatpush1.msra.mxu0 0.0
    %418 = vmatprep.subr.mxu0 0.0
    %419 = vmatpush1.msra.mxu0 0.0
    %420 = vmatprep.subr.mxu0 0.0
    %421 = vmatpush1.msra.mxu0 0.0
    %422 = vmatprep.subr.mxu0 0.0
    %423 = vmatpush1.msra.mxu0 0.0
    %424 = vmatprep.subr.mxu0 0.0
    %425 = vmatpush1.msra.mxu0 0.0
    %426 = vmatprep.subr.mxu0 0.0
    %427 = vmatpush1.msra.mxu0 0.0
    %428 = vmatprep.mubr.f32.mxu0 0.0
    %v429 = vand.u32 %v51, 4294901760
    %v430 = vsub.f32 %v51, %v429
    %431 = vmatmul.mubr.f32.gmra.mrb[0].mxu0 %v430
    %v432 = vpop.f32.mrb[0].mxu0
    %v433 = vadd.f32 %v307, %v432
    %v434 = vpop.f32.mrb[0].mxu0
    %v435 = vadd.f32 %v309, %v434
    %436 = vmatprep.mubr.f32.mxu0 0.0
    %v437 = vand.u32 %v54, 4294901760
    %v438 = vsub.f32 %v54, %v437
    %439 = vmatmul.mubr.f32.gmra.mrb[0].mxu0 %v438
    %v440 = vpop.f32.mrb[0].mxu0
    %v441 = vadd.f32 %v314, %v440
    %v442 = vpop.f32.mrb[0].mxu0
    %v443 = vadd.f32 %v316, %v442
    %444 = vmatprep.mubr.f32.mxu0 0.0
    %v445 = vand.u32 %v57, 4294901760
    %v446 = vsub.f32 %v57, %v445
    %447 = vmatmul.mubr.f32.gmra.mrb[0].mxu0 %v446
    %v448 = vpop.f32.mrb[0].mxu0
    %v449 = vadd.f32 %v321, %v448
    %v450 = vpop.f32.mrb[0].mxu0
    %v451 = vadd.f32 %v323, %v450
    %452 = vmatprep.mubr.f32.mxu0 0.0
    %v453 = vand.u32 %v60, 4294901760
    %v454 = vsub.f32 %v60, %v453
    %455 = vmatmul.mubr.f32.gmra.mrb[0].mxu0 %v454
    %v456 = vpop.f32.mrb[0].mxu0
    %v457 = vadd.f32 %v328, %v456
    %v458 = vpop.f32.mrb[0].mxu0
    %v459 = vadd.f32 %v330, %v458
    %460 = vmatprep.mubr.f32.mxu0 0.0
    %v461 = vand.u32 %v63, 4294901760
    %v462 = vsub.f32 %v63, %v461
    %463 = vmatmul.mubr.f32.gmra.mrb[0].mxu0 %v462
    %v464 = vpop.f32.mrb[0].mxu0
    %v465 = vadd.f32 %v335, %v464
    %v466 = vpop.f32.mrb[0].mxu0
    %v467 = vadd.f32 %v337, %v466
    %468 = vmatprep.mubr.f32.mxu0 0.0
    %v469 = vand.u32 %v66, 4294901760
    %v470 = vsub.f32 %v66, %v469
    %471 = vmatmul.mubr.f32.gmra.mrb[0].mxu0 %v470
    %v472 = vpop.f32.mrb[0].mxu0
    %v473 = vadd.f32 %v342, %v472
    %v474 = vpop.f32.mrb[0].mxu0
    %v475 = vadd.f32 %v344, %v474
    %476 = vmatprep.mubr.f32.mxu0 0.0
    %v477 = vand.u32 %v69, 4294901760
    %v478 = vsub.f32 %v69, %v477
    %479 = vmatmul.mubr.f32.gmra.mrb[0].mxu0 %v478
    %v480 = vpop.f32.mrb[0].mxu0
    %v481 = vadd.f32 %v349, %v480
    %v482 = vpop.f32.mrb[0].mxu0
    %v483 = vadd.f32 %v351, %v482
    %484 = vmatprep.mubr.f32.mxu0 0.0
    %v485 = vand.u32 %v72, 4294901760
    %v486 = vsub.f32 %v72, %v485
    %487 = vmatmul.mubr.f32.gmra.mrb[0].mxu0 %v486
    %v488 = vpop.f32.mrb[0].mxu0
    %v489 = vadd.f32 %v356, %v488
    %v490 = vpop.f32.mrb[0].mxu0
    %v491 = vadd.f32 %v358, %v490
    %492 = vdwg.mxu0
    %v493 = vand.u32 %v24, 4294901760
    %494 = vmatprep.subr.mxu0 %v493
    %v495 = vand.u32 %v23, 4294901760
    %496 = vmatpush1.msra.mxu0 %v495
    %497 = vmatprep.subr.mxu0 0.0
    %498 = vmatpush1.msra.mxu0 0.0
    %499 = vmatprep.subr.mxu0 0.0
    %500 = vmatpush1.msra.mxu0 0.0
    %501 = vmatprep.subr.mxu0 0.0
    %502 = vmatpush1.msra.mxu0 0.0
    %503 = vmatprep.subr.mxu0 0.0
    %504 = vmatpush1.msra.mxu0 0.0
    %505 = vmatprep.subr.mxu0 0.0
    %506 = vmatpush1.msra.mxu0 0.0
    %507 = vmatprep.subr.mxu0 0.0
    %508 = vmatpush1.msra.mxu0 0.0
    %509 = vmatprep.subr.mxu0 0.0
    %510 = vmatpush1.msra.mxu0 0.0
    %511 = vmatprep.subr.mxu0 0.0
    %512 = vmatpush1.msra.mxu0 0.0
    %513 = vmatprep.subr.mxu0 0.0
    %514 = vmatpush1.msra.mxu0 0.0
    %515 = vmatprep.subr.mxu0 0.0
    %516 = vmatpush1.msra.mxu0 0.0
    %517 = vmatprep.subr.mxu0 0.0
    %518 = vmatpush1.msra.mxu0 0.0
    %519 = vmatprep.subr.mxu0 0.0
    %520 = vmatpush1.msra.mxu0 0.0
    %521 = vmatprep.subr.mxu0 0.0
    %522 = vmatpush1.msra.mxu0 0.0
    %523 = vmatprep.subr.mxu0 0.0
    %524 = vmatpush1.msra.mxu0 0.0
    %525 = vmatprep.subr.mxu0 0.0
    %526 = vmatpush1.msra.mxu0 0.0
    %527 = vmatprep.subr.mxu0 0.0
    %528 = vmatpush1.msra.mxu0 0.0
    %529 = vmatprep.subr.mxu0 0.0
    %530 = vmatpush1.msra.mxu0 0.0
    %531 = vmatprep.subr.mxu0 0.0
    %532 = vmatpush1.msra.mxu0 0.0
    %533 = vmatprep.subr.mxu0 0.0
    %534 = vmatpush1.msra.mxu0 0.0
    %535 = vmatprep.subr.mxu0 0.0
    %536 = vmatpush1.msra.mxu0 0.0
    %537 = vmatprep.subr.mxu0 0.0
    %538 = vmatpush1.msra.mxu0 0.0
    %539 = vmatprep.subr.mxu0 0.0
    %540 = vmatpush1.msra.mxu0 0.0
    %541 = vmatprep.subr.mxu0 0.0
    %542 = vmatpush1.msra.mxu0 0.0
    %543 = vmatprep.subr.mxu0 0.0
    %544 = vmatpush1.msra.mxu0 0.0
    %545 = vmatprep.subr.mxu0 0.0
    %546 = vmatpush1.msra.mxu0 0.0
    %547 = vmatprep.subr.mxu0 0.0
    %548 = vmatpush1.msra.mxu0 0.0
    %549 = vmatprep.subr.mxu0 0.0
    %550 = vmatpush1.msra.mxu0 0.0
    %551 = vmatprep.subr.mxu0 0.0
    %552 = vmatpush1.msra.mxu0 0.0
    %553 = vmatprep.subr.mxu0 0.0
    %554 = vmatpush1.msra.mxu0 0.0
    %555 = vmatprep.subr.mxu0 0.0
    %556 = vmatpush1.msra.mxu0 0.0
    %557 = vmatprep.subr.mxu0 0.0
    %558 = vmatpush1.msra.mxu0 0.0
    %559 = vmatprep.mubr.f32.mxu0 0.0
    %v560 = vand.u32 %v51, 4294901760
    %v561 = vsub.f32 %v51, %v560
    %v562 = vand.u32 %v561, 4294901760
    %563 = vmatmul.mubr.f32.gmra.mrb[0].mxu0 %v562
    %v564 = vpop.f32.mrb[0].mxu0
    %v565 = vadd.f32 %v433, %v564
    %v566 = vpop.f32.mrb[0].mxu0
    %v567 = vadd.f32 %v435, %v566
    %568 = vmatprep.mubr.f32.mxu0 0.0
    %v569 = vand.u32 %v54, 4294901760
    %v570 = vsub.f32 %v54, %v569
    %v571 = vand.u32 %v570, 4294901760
    %572 = vmatmul.mubr.f32.gmra.mrb[0].mxu0 %v571
    %v573 = vpop.f32.mrb[0].mxu0
    %v574 = vadd.f32 %v441, %v573
    %v575 = vpop.f32.mrb[0].mxu0
    %v576 = vadd.f32 %v443, %v575
    %577 = vmatprep.mubr.f32.mxu0 0.0
    %v578 = vand.u32 %v57, 4294901760
    %v579 = vsub.f32 %v57, %v578
    %v580 = vand.u32 %v579, 4294901760
    %581 = vmatmul.mubr.f32.gmra.mrb[0].mxu0 %v580
    %v582 = vpop.f32.mrb[0].mxu0
    %v583 = vadd.f32 %v449, %v582
    %v584 = vpop.f32.mrb[0].mxu0
    %v585 = vadd.f32 %v451, %v584
    %586 = vmatprep.mubr.f32.mxu0 0.0
    %v587 = vand.u32 %v60, 4294901760
    %v588 = vsub.f32 %v60, %v587
    %v589 = vand.u32 %v588, 4294901760
    %590 = vmatmul.mubr.f32.gmra.mrb[0].mxu0 %v589
    %v591 = vpop.f32.mrb[0].mxu0
    %v592 = vadd.f32 %v457, %v591
    %v593 = vpop.f32.mrb[0].mxu0
    %v594 = vadd.f32 %v459, %v593
    %595 = vmatprep.mubr.f32.mxu0 0.0
    %v596 = vand.u32 %v63, 4294901760
    %v597 = vsub.f32 %v63, %v596
    %v598 = vand.u32 %v597, 4294901760
    %599 = vmatmul.mubr.f32.gmra.mrb[0].mxu0 %v598
    %v600 = vpop.f32.mrb[0].mxu0
    %v601 = vadd.f32 %v465, %v600
    %v602 = vpop.f32.mrb[0].mxu0
    %v603 = vadd.f32 %v467, %v602
    %604 = vmatprep.mubr.f32.mxu0 0.0
    %v605 = vand.u32 %v66, 4294901760
    %v606 = vsub.f32 %v66, %v605
    %v607 = vand.u32 %v606, 4294901760
    %608 = vmatmul.mubr.f32.gmra.mrb[0].mxu0 %v607
    %v609 = vpop.f32.mrb[0].mxu0
    %v610 = vadd.f32 %v473, %v609
    %v611 = vpop.f32.mrb[0].mxu0
    %v612 = vadd.f32 %v475, %v611
    %613 = vmatprep.mubr.f32.mxu0 0.0
    %v614 = vand.u32 %v69, 4294901760
    %v615 = vsub.f32 %v69, %v614
    %v616 = vand.u32 %v615, 4294901760
    %617 = vmatmul.mubr.f32.gmra.mrb[0].mxu0 %v616
    %v618 = vpop.f32.mrb[0].mxu0
    %v619 = vadd.f32 %v481, %v618
    %v620 = vpop.f32.mrb[0].mxu0
    %v621 = vadd.f32 %v483, %v620
    %622 = vmatprep.mubr.f32.mxu0 0.0
    %v623 = vand.u32 %v72, 4294901760
    %v624 = vsub.f32 %v72, %v623
    %v625 = vand.u32 %v624, 4294901760
    %626 = vmatmul.mubr.f32.gmra.mrb[0].mxu0 %v625
    %v627 = vpop.f32.mrb[0].mxu0
    %v628 = vadd.f32 %v489, %v627
    %v629 = vpop.f32.mrb[0].mxu0
    %v630 = vadd.f32 %v491, %v629
    %631 = vdwg.mxu0
    %v632 = vand.u32 %v24, 4294901760
    %v633 = vsub.f32 %v24, %v632
    %v634 = vand.u32 %v633, 4294901760
    %635 = vmatprep.subr.mxu0 %v634
    %v636 = vand.u32 %v23, 4294901760
    %v637 = vsub.f32 %v23, %v636
    %v638 = vand.u32 %v637, 4294901760
    %639 = vmatpush1.msra.mxu0 %v638
    %640 = vmatprep.subr.mxu0 0.0
    %641 = vmatpush1.msra.mxu0 0.0
    %642 = vmatprep.subr.mxu0 0.0
    %643 = vmatpush1.msra.mxu0 0.0
    %644 = vmatprep.subr.mxu0 0.0
    %645 = vmatpush1.msra.mxu0 0.0
    %646 = vmatprep.subr.mxu0 0.0
    %647 = vmatpush1.msra.mxu0 0.0
    %648 = vmatprep.subr.mxu0 0.0
    %649 = vmatpush1.msra.mxu0 0.0
    %650 = vmatprep.subr.mxu0 0.0
    %651 = vmatpush1.msra.mxu0 0.0
    %652 = vmatprep.subr.mxu0 0.0
    %653 = vmatpush1.msra.mxu0 0.0
    %654 = vmatprep.subr.mxu0 0.0
    %655 = vmatpush1.msra.mxu0 0.0
    %656 = vmatprep.subr.mxu0 0.0
    %657 = vmatpush1.msra.mxu0 0.0
    %658 = vmatprep.subr.mxu0 0.0
    %659 = vmatpush1.msra.mxu0 0.0
    %660 = vmatprep.subr.mxu0 0.0
    %661 = vmatpush1.msra.mxu0 0.0
    %662 = vmatprep.subr.mxu0 0.0
    %663 = vmatpush1.msra.mxu0 0.0
    %664 = vmatprep.subr.mxu0 0.0
    %665 = vmatpush1.msra.mxu0 0.0
    %666 = vmatprep.subr.mxu0 0.0
    %667 = vmatpush1.msra.mxu0 0.0
    %668 = vmatprep.subr.mxu0 0.0
    %669 = vmatpush1.msra.mxu0 0.0
    %670 = vmatprep.subr.mxu0 0.0
    %671 = vmatpush1.msra.mxu0 0.0
    %672 = vmatprep.subr.mxu0 0.0
    %673 = vmatpush1.msra.mxu0 0.0
    %674 = vmatprep.subr.mxu0 0.0
    %675 = vmatpush1.msra.mxu0 0.0
    %676 = vmatprep.subr.mxu0 0.0
    %677 = vmatpush1.msra.mxu0 0.0
    %678 = vmatprep.subr.mxu0 0.0
    %679 = vmatpush1.msra.mxu0 0.0
    %680 = vmatprep.subr.mxu0 0.0
    %681 = vmatpush1.msra.mxu0 0.0
    %682 = vmatprep.subr.mxu0 0.0
    %683 = vmatpush1.msra.mxu0 0.0
    %684 = vmatprep.subr.mxu0 0.0
    %685 = vmatpush1.msra.mxu0 0.0
    %686 = vmatprep.subr.mxu0 0.0
    %687 = vmatpush1.msra.mxu0 0.0
    %688 = vmatprep.subr.mxu0 0.0
    %689 = vmatpush1.msra.mxu0 0.0
    %690 = vmatprep.subr.mxu0 0.0
    %691 = vmatpush1.msra.mxu0 0.0
    %692 = vmatprep.subr.mxu0 0.0
    %693 = vmatpush1.msra.mxu0 0.0
    %694 = vmatprep.subr.mxu0 0.0
    %695 = vmatpush1.msra.mxu0 0.0
    %696 = vmatprep.subr.mxu0 0.0
    %697 = vmatpush1.msra.mxu0 0.0
    %698 = vmatprep.subr.mxu0 0.0
    %699 = vmatpush1.msra.mxu0 0.0
    %700 = vmatprep.subr.mxu0 0.0
    %701 = vmatpush1.msra.mxu0 0.0
    %702 = vmatprep.mubr.f32.mxu0 0.0
    %v703 = vand.u32 %v51, 4294901760
    %704 = vmatmul.mubr.f32.gmra.mrb[0].mxu0 %v703
    %v705 = vpop.f32.mrb[0].mxu0
    %v706 = vadd.f32 %v565, %v705
    %v707 = vpop.f32.mrb[0].mxu0
    %v708 = vadd.f32 %v567, %v707
    %709 = vmatprep.mubr.f32.mxu0 0.0
    %v710 = vand.u32 %v54, 4294901760
    %711 = vmatmul.mubr.f32.gmra.mrb[0].mxu0 %v710
    %v712 = vpop.f32.mrb[0].mxu0
    %v713 = vadd.f32 %v574, %v712
    %v714 = vpop.f32.mrb[0].mxu0
    %v715 = vadd.f32 %v576, %v714
    %716 = vmatprep.mubr.f32.mxu0 0.0
    %v717 = vand.u32 %v57, 4294901760
    %718 = vmatmul.mubr.f32.gmra.mrb[0].mxu0 %v717
    %v719 = vpop.f32.mrb[0].mxu0
    %v720 = vadd.f32 %v583, %v719
    %v721 = vpop.f32.mrb[0].mxu0
    %v722 = vadd.f32 %v585, %v721
    %723 = vmatprep.mubr.f32.mxu0 0.0
    %v724 = vand.u32 %v60, 4294901760
    %725 = vmatmul.mubr.f32.gmra.mrb[0].mxu0 %v724
    %v726 = vpop.f32.mrb[0].mxu0
    %v727 = vadd.f32 %v592, %v726
    %v728 = vpop.f32.mrb[0].mxu0
    %v729 = vadd.f32 %v594, %v728
    %730 = vmatprep.mubr.f32.mxu0 0.0
    %v731 = vand.u32 %v63, 4294901760
    %732 = vmatmul.mubr.f32.gmra.mrb[0].mxu0 %v731
    %v733 = vpop.f32.mrb[0].mxu0
    %v734 = vadd.f32 %v601, %v733
    %v735 = vpop.f32.mrb[0].mxu0
    %v736 = vadd.f32 %v603, %v735
    %737 = vmatprep.mubr.f32.mxu0 0.0
    %v738 = vand.u32 %v66, 4294901760
    %739 = vmatmul.mubr.f32.gmra.mrb[0].mxu0 %v738
    %v740 = vpop.f32.mrb[0].mxu0
    %v741 = vadd.f32 %v610, %v740
    %v742 = vpop.f32.mrb[0].mxu0
    %v743 = vadd.f32 %v612, %v742
    %744 = vmatprep.mubr.f32.mxu0 0.0
    %v745 = vand.u32 %v69, 4294901760
    %746 = vmatmul.mubr.f32.gmra.mrb[0].mxu0 %v745
    %v747 = vpop.f32.mrb[0].mxu0
    %v748 = vadd.f32 %v619, %v747
    %v749 = vpop.f32.mrb[0].mxu0
    %v750 = vadd.f32 %v621, %v749
    %751 = vmatprep.mubr.f32.mxu0 0.0
    %v752 = vand.u32 %v72, 4294901760
    %753 = vmatmul.mubr.f32.gmra.mrb[0].mxu0 %v752
    %v754 = vpop.f32.mrb[0].mxu0
    %v755 = vadd.f32 %v628, %v754
    %v756 = vpop.f32.mrb[0].mxu0
    %v757 = vadd.f32 %v630, %v756
    %758 = vdwg.mxu0
    %v759 = vand.u32 %v24, 4294901760
    %760 = vmatprep.subr.mxu0 %v759
    %v761 = vand.u32 %v23, 4294901760
    %762 = vmatpush1.msra.mxu0 %v761
    %763 = vmatprep.subr.mxu0 0.0
    %764 = vmatpush1.msra.mxu0 0.0
    %765 = vmatprep.subr.mxu0 0.0
    %766 = vmatpush1.msra.mxu0 0.0
    %767 = vmatprep.subr.mxu0 0.0
    %768 = vmatpush1.msra.mxu0 0.0
    %769 = vmatprep.subr.mxu0 0.0
    %770 = vmatpush1.msra.mxu0 0.0
    %771 = vmatprep.subr.mxu0 0.0
    %772 = vmatpush1.msra.mxu0 0.0
    %773 = vmatprep.subr.mxu0 0.0
    %774 = vmatpush1.msra.mxu0 0.0
    %775 = vmatprep.subr.mxu0 0.0
    %776 = vmatpush1.msra.mxu0 0.0
    %777 = vmatprep.subr.mxu0 0.0
    %778 = vmatpush1.msra.mxu0 0.0
    %779 = vmatprep.subr.mxu0 0.0
    %780 = vmatpush1.msra.mxu0 0.0
    %781 = vmatprep.subr.mxu0 0.0
    %782 = vmatpush1.msra.mxu0 0.0
    %783 = vmatprep.subr.mxu0 0.0
    %784 = vmatpush1.msra.mxu0 0.0
    %785 = vmatprep.subr.mxu0 0.0
    %786 = vmatpush1.msra.mxu0 0.0
    %787 = vmatprep.subr.mxu0 0.0
    %788 = vmatpush1.msra.mxu0 0.0
    %789 = vmatprep.subr.mxu0 0.0
    %790 = vmatpush1.msra.mxu0 0.0
    %791 = vmatprep.subr.mxu0 0.0
    %792 = vmatpush1.msra.mxu0 0.0
    %793 = vmatprep.subr.mxu0 0.0
    %794 = vmatpush1.msra.mxu0 0.0
    %795 = vmatprep.subr.mxu0 0.0
    %796 = vmatpush1.msra.mxu0 0.0
    %797 = vmatprep.subr.mxu0 0.0
    %798 = vmatpush1.msra.mxu0 0.0
    %799 = vmatprep.subr.mxu0 0.0
    %800 = vmatpush1.msra.mxu0 0.0
    %801 = vmatprep.subr.mxu0 0.0
    %802 = vmatpush1.msra.mxu0 0.0
    %803 = vmatprep.subr.mxu0 0.0
    %804 = vmatpush1.msra.mxu0 0.0
    %805 = vmatprep.subr.mxu0 0.0
    %806 = vmatpush1.msra.mxu0 0.0
    %807 = vmatprep.subr.mxu0 0.0
    %808 = vmatpush1.msra.mxu0 0.0
    %809 = vmatprep.subr.mxu0 0.0
    %810 = vmatpush1.msra.mxu0 0.0
    %811 = vmatprep.subr.mxu0 0.0
    %812 = vmatpush1.msra.mxu0 0.0
    %813 = vmatprep.subr.mxu0 0.0
    %814 = vmatpush1.msra.mxu0 0.0
    %815 = vmatprep.subr.mxu0 0.0
    %816 = vmatpush1.msra.mxu0 0.0
    %817 = vmatprep.subr.mxu0 0.0
    %818 = vmatpush1.msra.mxu0 0.0
    %819 = vmatprep.subr.mxu0 0.0
    %820 = vmatpush1.msra.mxu0 0.0
    %821 = vmatprep.subr.mxu0 0.0
    %822 = vmatpush1.msra.mxu0 0.0
    %823 = vmatprep.subr.mxu0 0.0
    %824 = vmatpush1.msra.mxu0 0.0
    %825 = vmatprep.mubr.f32.mxu0 0.0
    %v826 = vand.u32 %v51, 4294901760
    %827 = vmatmul.mubr.f32.gmra.mrb[0].mxu0 %v826
    %v828 = vpop.f32.mrb[0].mxu0
    %v829 = vadd.f32 %v706, %v828
    %v830 = vpop.f32.mrb[0].mxu0
    %v831 = vadd.f32 %v708, %v830
    %832 = vmatprep.mubr.f32.mxu0 0.0
    %v833 = vand.u32 %v54, 4294901760
    %834 = vmatmul.mubr.f32.gmra.mrb[0].mxu0 %v833
    %v835 = vpop.f32.mrb[0].mxu0
    %v836 = vadd.f32 %v713, %v835
    %v837 = vpop.f32.mrb[0].mxu0
    %v838 = vadd.f32 %v715, %v837
    %839 = vmatprep.mubr.f32.mxu0 0.0
    %v840 = vand.u32 %v57, 4294901760
    %841 = vmatmul.mubr.f32.gmra.mrb[0].mxu0 %v840
    %v842 = vpop.f32.mrb[0].mxu0
    %v843 = vadd.f32 %v720, %v842
    %v844 = vpop.f32.mrb[0].mxu0
    %v845 = vadd.f32 %v722, %v844
    %846 = vmatprep.mubr.f32.mxu0 0.0
    %v847 = vand.u32 %v60, 4294901760
    %848 = vmatmul.mubr.f32.gmra.mrb[0].mxu0 %v847
    %v849 = vpop.f32.mrb[0].mxu0
    %v850 = vadd.f32 %v727, %v849
    %v851 = vpop.f32.mrb[0].mxu0
    %v852 = vadd.f32 %v729, %v851
    %853 = vmatprep.mubr.f32.mxu0 0.0
    %v854 = vand.u32 %v63, 4294901760
    %855 = vmatmul.mubr.f32.gmra.mrb[0].mxu0 %v854
    %v856 = vpop.f32.mrb[0].mxu0
    %v857 = vadd.f32 %v734, %v856
    %v858 = vpop.f32.mrb[0].mxu0
    %v859 = vadd.f32 %v736, %v858
    %860 = vmatprep.mubr.f32.mxu0 0.0
    %v861 = vand.u32 %v66, 4294901760
    %862 = vmatmul.mubr.f32.gmra.mrb[0].mxu0 %v861
    %v863 = vpop.f32.mrb[0].mxu0
    %v864 = vadd.f32 %v741, %v863
    %v865 = vpop.f32.mrb[0].mxu0
    %v866 = vadd.f32 %v743, %v865
    %867 = vmatprep.mubr.f32.mxu0 0.0
    %v868 = vand.u32 %v69, 4294901760
    %869 = vmatmul.mubr.f32.gmra.mrb[0].mxu0 %v868
    %v870 = vpop.f32.mrb[0].mxu0
    %v871 = vadd.f32 %v748, %v870
    %v872 = vpop.f32.mrb[0].mxu0
    %v873 = vadd.f32 %v750, %v872
    %874 = vmatprep.mubr.f32.mxu0 0.0
    %v875 = vand.u32 %v72, 4294901760
    %876 = vmatmul.mubr.f32.gmra.mrb[0].mxu0 %v875
    %v877 = vpop.f32.mrb[0].mxu0
    %v878 = vadd.f32 %v755, %v877
    %v879 = vpop.f32.mrb[0].mxu0
    %v880 = vadd.f32 %v757, %v879
    %881 = vdwg.mxu0
    %v882 = vand.u32 %v26, 4294901760
    %883 = vmatprep.subr.mxu0 %v882
    %v884 = vand.u32 %v25, 4294901760
    %885 = vmatpush1.msra.mxu0 %v884
    %886 = vmatprep.subr.mxu0 0.0
    %887 = vmatpush1.msra.mxu0 0.0
    %888 = vmatprep.subr.mxu0 0.0
    %889 = vmatpush1.msra.mxu0 0.0
    %890 = vmatprep.subr.mxu0 0.0
    %891 = vmatpush1.msra.mxu0 0.0
    %892 = vmatprep.subr.mxu0 0.0
    %893 = vmatpush1.msra.mxu0 0.0
    %894 = vmatprep.subr.mxu0 0.0
    %895 = vmatpush1.msra.mxu0 0.0
    %896 = vmatprep.subr.mxu0 0.0
    %897 = vmatpush1.msra.mxu0 0.0
    %898 = vmatprep.subr.mxu0 0.0
    %899 = vmatpush1.msra.mxu0 0.0
    %900 = vmatprep.subr.mxu0 0.0
    %901 = vmatpush1.msra.mxu0 0.0
    %902 = vmatprep.subr.mxu0 0.0
    %903 = vmatpush1.msra.mxu0 0.0
    %904 = vmatprep.subr.mxu0 0.0
    %905 = vmatpush1.msra.mxu0 0.0
    %906 = vmatprep.subr.mxu0 0.0
    %907 = vmatpush1.msra.mxu0 0.0
    %908 = vmatprep.subr.mxu0 0.0
    %909 = vmatpush1.msra.mxu0 0.0
    %910 = vmatprep.subr.mxu0 0.0
    %911 = vmatpush1.msra.mxu0 0.0
    %912 = vmatprep.subr.mxu0 0.0
    %913 = vmatpush1.msra.mxu0 0.0
    %914 = vmatprep.subr.mxu0 0.0
    %915 = vmatpush1.msra.mxu0 0.0
    %916 = vmatprep.subr.mxu0 0.0
    %917 = vmatpush1.msra.mxu0 0.0
    %918 = vmatprep.subr.mxu0 0.0
    %919 = vmatpush1.msra.mxu0 0.0
    %920 = vmatprep.subr.mxu0 0.0
    %921 = vmatpush1.msra.mxu0 0.0
    %922 = vmatprep.subr.mxu0 0.0
    %923 = vmatpush1.msra.mxu0 0.0
    %924 = vmatprep.subr.mxu0 0.0
    %925 = vmatpush1.msra.mxu0 0.0
    %926 = vmatprep.subr.mxu0 0.0
    %927 = vmatpush1.msra.mxu0 0.0
    %928 = vmatprep.subr.mxu0 0.0
    %929 = vmatpush1.msra.mxu0 0.0
    %930 = vmatprep.subr.mxu0 0.0
    %931 = vmatpush1.msra.mxu0 0.0
    %932 = vmatprep.subr.mxu0 0.0
    %933 = vmatpush1.msra.mxu0 0.0
    %934 = vmatprep.subr.mxu0 0.0
    %935 = vmatpush1.msra.mxu0 0.0
    %936 = vmatprep.subr.mxu0 0.0
    %937 = vmatpush1.msra.mxu0 0.0
    %938 = vmatprep.subr.mxu0 0.0
    %939 = vmatpush1.msra.mxu0 0.0
    %940 = vmatprep.subr.mxu0 0.0
    %941 = vmatpush1.msra.mxu0 0.0
    %942 = vmatprep.subr.mxu0 0.0
    %943 = vmatpush1.msra.mxu0 0.0
    %944 = vmatprep.subr.mxu0 0.0
    %945 = vmatpush1.msra.mxu0 0.0
    %946 = vmatprep.subr.mxu0 0.0
    %947 = vmatpush1.msra.mxu0 0.0
    %948 = vmatprep.mubr.f32.mxu0 0.0
    %v949 = vand.u32 %v51, 4294901760
    %v950 = vsub.f32 %v51, %v949
    %v951 = vand.u32 %v950, 4294901760
    %v952 = vsub.f32 %v950, %v951
    %v953 = vand.u32 %v952, 4294901760
    %954 = vmatmul.mubr.f32.gmra.mrb[0].mxu0 %v953
    %v955 = vpop.f32.mrb[0].mxu0
    %v956 = vadd.f32 %v40, %v955
    %v957 = vpop.f32.mrb[0].mxu0
    %v958 = vadd.f32 %v44, %v957
    %959 = vmatprep.mubr.f32.mxu0 0.0
    %v960 = vand.u32 %v54, 4294901760
    %v961 = vsub.f32 %v54, %v960
    %v962 = vand.u32 %v961, 4294901760
    %v963 = vsub.f32 %v961, %v962
    %v964 = vand.u32 %v963, 4294901760
    %965 = vmatmul.mubr.f32.gmra.mrb[0].mxu0 %v964
    %v966 = vpop.f32.mrb[0].mxu0
    %v967 = vadd.f32 %v40, %v966
    %v968 = vpop.f32.mrb[0].mxu0
    %v969 = vadd.f32 %v44, %v968
    %970 = vmatprep.mubr.f32.mxu0 0.0
    %v971 = vand.u32 %v57, 4294901760
    %v972 = vsub.f32 %v57, %v971
    %v973 = vand.u32 %v972, 4294901760
    %v974 = vsub.f32 %v972, %v973
    %v975 = vand.u32 %v974, 4294901760
    %976 = vmatmul.mubr.f32.gmra.mrb[0].mxu0 %v975
    %v977 = vpop.f32.mrb[0].mxu0
    %v978 = vadd.f32 %v40, %v977
    %v979 = vpop.f32.mrb[0].mxu0
    %v980 = vadd.f32 %v44, %v979
    %981 = vmatprep.mubr.f32.mxu0 0.0
    %v982 = vand.u32 %v60, 4294901760
    %v983 = vsub.f32 %v60, %v982
    %v984 = vand.u32 %v983, 4294901760
    %v985 = vsub.f32 %v983, %v984
    %v986 = vand.u32 %v985, 4294901760
    %987 = vmatmul.mubr.f32.gmra.mrb[0].mxu0 %v986
    %v988 = vpop.f32.mrb[0].mxu0
    %v989 = vadd.f32 %v40, %v988
    %v990 = vpop.f32.mrb[0].mxu0
    %v991 = vadd.f32 %v44, %v990
    %992 = vmatprep.mubr.f32.mxu0 0.0
    %v993 = vand.u32 %v63, 4294901760
    %v994 = vsub.f32 %v63, %v993
    %v995 = vand.u32 %v994, 4294901760
    %v996 = vsub.f32 %v994, %v995
    %v997 = vand.u32 %v996, 4294901760
    %998 = vmatmul.mubr.f32.gmra.mrb[0].mxu0 %v997
    %v999 = vpop.f32.mrb[0].mxu0
    %v1000 = vadd.f32 %v40, %v999
    %v1001 = vpop.f32.mrb[0].mxu0
    %v1002 = vadd.f32 %v44, %v1001
    %1003 = vmatprep.mubr.f32.mxu0 0.0
    %v1004 = vand.u32 %v66, 4294901760
    %v1005 = vsub.f32 %v66, %v1004
    %v1006 = vand.u32 %v1005, 4294901760
    %v1007 = vsub.f32 %v1005, %v1006
    %v1008 = vand.u32 %v1007, 4294901760
    %1009 = vmatmul.mubr.f32.gmra.mrb[0].mxu0 %v1008
    %v1010 = vpop.f32.mrb[0].mxu0
    %v1011 = vadd.f32 %v40, %v1010
    %v1012 = vpop.f32.mrb[0].mxu0
    %v1013 = vadd.f32 %v44, %v1012
    %1014 = vmatprep.mubr.f32.mxu0 0.0
    %v1015 = vand.u32 %v69, 4294901760
    %v1016 = vsub.f32 %v69, %v1015
    %v1017 = vand.u32 %v1016, 4294901760
    %v1018 = vsub.f32 %v1016, %v1017
    %v1019 = vand.u32 %v1018, 4294901760
    %1020 = vmatmul.mubr.f32.gmra.mrb[0].mxu0 %v1019
    %v1021 = vpop.f32.mrb[0].mxu0
    %v1022 = vadd.f32 %v40, %v1021
    %v1023 = vpop.f32.mrb[0].mxu0
    %v1024 = vadd.f32 %v44, %v1023
    %1025 = vmatprep.mubr.f32.mxu0 0.0
    %v1026 = vand.u32 %v72, 4294901760
    %v1027 = vsub.f32 %v72, %v1026
    %v1028 = vand.u32 %v1027, 4294901760
    %v1029 = vsub.f32 %v1027, %v1028
    %v1030 = vand.u32 %v1029, 4294901760
    %1031 = vmatmul.mubr.f32.gmra.mrb[0].mxu0 %v1030
    %v1032 = vpop.f32.mrb[0].mxu0
    %v1033 = vadd.f32 %v40, %v1032
    %v1034 = vpop.f32.mrb[0].mxu0
    %v1035 = vadd.f32 %v44, %v1034
    %1036 = vdwg.mxu0
    %v1037 = vand.u32 %v26, 4294901760
    %v1038 = vsub.f32 %v26, %v1037
    %v1039 = vand.u32 %v1038, 4294901760
    %v1040 = vsub.f32 %v1038, %v1039
    %v1041 = vand.u32 %v1040, 4294901760
    %1042 = vmatprep.subr.mxu0 %v1041
    %v1043 = vand.u32 %v25, 4294901760
    %v1044 = vsub.f32 %v25, %v1043
    %v1045 = vand.u32 %v1044, 4294901760
    %v1046 = vsub.f32 %v1044, %v1045
    %v1047 = vand.u32 %v1046, 4294901760
    %1048 = vmatpush1.msra.mxu0 %v1047
    %1049 = vmatprep.subr.mxu0 0.0
    %1050 = vmatpush1.msra.mxu0 0.0
    %1051 = vmatprep.subr.mxu0 0.0
    %1052 = vmatpush1.msra.mxu0 0.0
    %1053 = vmatprep.subr.mxu0 0.0
    %1054 = vmatpush1.msra.mxu0 0.0
    %1055 = vmatprep.subr.mxu0 0.0
    %1056 = vmatpush1.msra.mxu0 0.0
    %1057 = vmatprep.subr.mxu0 0.0
    %1058 = vmatpush1.msra.mxu0 0.0
    %1059 = vmatprep.subr.mxu0 0.0
    %1060 = vmatpush1.msra.mxu0 0.0
    %1061 = vmatprep.subr.mxu0 0.0
    %1062 = vmatpush1.msra.mxu0 0.0
    %1063 = vmatprep.subr.mxu0 0.0
    %1064 = vmatpush1.msra.mxu0 0.0
    %1065 = vmatprep.subr.mxu0 0.0
    %1066 = vmatpush1.msra.mxu0 0.0
    %1067 = vmatprep.subr.mxu0 0.0
    %1068 = vmatpush1.msra.mxu0 0.0
    %1069 = vmatprep.subr.mxu0 0.0
    %1070 = vmatpush1.msra.mxu0 0.0
    %1071 = vmatprep.subr.mxu0 0.0
    %1072 = vmatpush1.msra.mxu0 0.0
    %1073 = vmatprep.subr.mxu0 0.0
    %1074 = vmatpush1.msra.mxu0 0.0
    %1075 = vmatprep.subr.mxu0 0.0
    %1076 = vmatpush1.msra.mxu0 0.0
    %1077 = vmatprep.subr.mxu0 0.0
    %1078 = vmatpush1.msra.mxu0 0.0
    %1079 = vmatprep.subr.mxu0 0.0
    %1080 = vmatpush1.msra.mxu0 0.0
    %1081 = vmatprep.subr.mxu0 0.0
    %1082 = vmatpush1.msra.mxu0 0.0
    %1083 = vmatprep.subr.mxu0 0.0
    %1084 = vmatpush1.msra.mxu0 0.0
    %1085 = vmatprep.subr.mxu0 0.0
    %1086 = vmatpush1.msra.mxu0 0.0
    %1087 = vmatprep.subr.mxu0 0.0
    %1088 = vmatpush1.msra.mxu0 0.0
    %1089 = vmatprep.subr.mxu0 0.0
    %1090 = vmatpush1.msra.mxu0 0.0
    %1091 = vmatprep.subr.mxu0 0.0
    %1092 = vmatpush1.msra.mxu0 0.0
    %1093 = vmatprep.subr.mxu0 0.0
    %1094 = vmatpush1.msra.mxu0 0.0
    %1095 = vmatprep.subr.mxu0 0.0
    %1096 = vmatpush1.msra.mxu0 0.0
    %1097 = vmatprep.subr.mxu0 0.0
    %1098 = vmatpush1.msra.mxu0 0.0
    %1099 = vmatprep.subr.mxu0 0.0
    %1100 = vmatpush1.msra.mxu0 0.0
    %1101 = vmatprep.subr.mxu0 0.0
    %1102 = vmatpush1.msra.mxu0 0.0
    %1103 = vmatprep.subr.mxu0 0.0
    %1104 = vmatpush1.msra.mxu0 0.0
    %1105 = vmatprep.subr.mxu0 0.0
    %1106 = vmatpush1.msra.mxu0 0.0
    %1107 = vmatprep.subr.mxu0 0.0
    %1108 = vmatpush1.msra.mxu0 0.0
    %1109 = vmatprep.subr.mxu0 0.0
    %1110 = vmatpush1.msra.mxu0 0.0
    %1111 = vmatprep.mubr.f32.mxu0 0.0
    %v1112 = vand.u32 %v51, 4294901760
    %1113 = vmatmul.mubr.f32.gmra.mrb[0].mxu0 %v1112
    %v1114 = vpop.f32.mrb[0].mxu0
    %v1115 = vadd.f32 %v956, %v1114
    %v1116 = vpop.f32.mrb[0].mxu0
    %v1117 = vadd.f32 %v958, %v1116
    %1118 = vmatprep.mubr.f32.mxu0 0.0
    %v1119 = vand.u32 %v54, 4294901760
    %1120 = vmatmul.mubr.f32.gmra.mrb[0].mxu0 %v1119
    %v1121 = vpop.f32.mrb[0].mxu0
    %v1122 = vadd.f32 %v967, %v1121
    %v1123 = vpop.f32.mrb[0].mxu0
    %v1124 = vadd.f32 %v969, %v1123
    %1125 = vmatprep.mubr.f32.mxu0 0.0
    %v1126 = vand.u32 %v57, 4294901760
    %1127 = vmatmul.mubr.f32.gmra.mrb[0].mxu0 %v1126
    %v1128 = vpop.f32.mrb[0].mxu0
    %v1129 = vadd.f32 %v978, %v1128
    %v1130 = vpop.f32.mrb[0].mxu0
    %v1131 = vadd.f32 %v980, %v1130
    %1132 = vmatprep.mubr.f32.mxu0 0.0
    %v1133 = vand.u32 %v60, 4294901760
    %1134 = vmatmul.mubr.f32.gmra.mrb[0].mxu0 %v1133
    %v1135 = vpop.f32.mrb[0].mxu0
    %v1136 = vadd.f32 %v989, %v1135
    %v1137 = vpop.f32.mrb[0].mxu0
    %v1138 = vadd.f32 %v991, %v1137
    %1139 = vmatprep.mubr.f32.mxu0 0.0
    %v1140 = vand.u32 %v63, 4294901760
    %1141 = vmatmul.mubr.f32.gmra.mrb[0].mxu0 %v1140
    %v1142 = vpop.f32.mrb[0].mxu0
    %v1143 = vadd.f32 %v1000, %v1142
    %v1144 = vpop.f32.mrb[0].mxu0
    %v1145 = vadd.f32 %v1002, %v1144
    %1146 = vmatprep.mubr.f32.mxu0 0.0
    %v1147 = vand.u32 %v66, 4294901760
    %1148 = vmatmul.mubr.f32.gmra.mrb[0].mxu0 %v1147
    %v1149 = vpop.f32.mrb[0].mxu0
    %v1150 = vadd.f32 %v1011, %v1149
    %v1151 = vpop.f32.mrb[0].mxu0
    %v1152 = vadd.f32 %v1013, %v1151
    %1153 = vmatprep.mubr.f32.mxu0 0.0
    %v1154 = vand.u32 %v69, 4294901760
    %1155 = vmatmul.mubr.f32.gmra.mrb[0].mxu0 %v1154
    %v1156 = vpop.f32.mrb[0].mxu0
    %v1157 = vadd.f32 %v1022, %v1156
    %v1158 = vpop.f32.mrb[0].mxu0
    %v1159 = vadd.f32 %v1024, %v1158
    %1160 = vmatprep.mubr.f32.mxu0 0.0
    %v1161 = vand.u32 %v72, 4294901760
    %1162 = vmatmul.mubr.f32.gmra.mrb[0].mxu0 %v1161
    %v1163 = vpop.f32.mrb[0].mxu0
    %v1164 = vadd.f32 %v1033, %v1163
    %v1165 = vpop.f32.mrb[0].mxu0
    %v1166 = vadd.f32 %v1035, %v1165
    %1167 = vdwg.mxu0
    %v1168 = vand.u32 %v26, 4294901760
    %v1169 = vsub.f32 %v26, %v1168
    %1170 = vmatprep.subr.mxu0 %v1169
    %v1171 = vand.u32 %v25, 4294901760
    %v1172 = vsub.f32 %v25, %v1171
    %1173 = vmatpush1.msra.mxu0 %v1172
    %1174 = vmatprep.subr.mxu0 0.0
    %1175 = vmatpush1.msra.mxu0 0.0
    %1176 = vmatprep.subr.mxu0 0.0
    %1177 = vmatpush1.msra.mxu0 0.0
    %1178 = vmatprep.subr.mxu0 0.0
    %1179 = vmatpush1.msra.mxu0 0.0
    %1180 = vmatprep.subr.mxu0 0.0
    %1181 = vmatpush1.msra.mxu0 0.0
    %1182 = vmatprep.subr.mxu0 0.0
    %1183 = vmatpush1.msra.mxu0 0.0
    %1184 = vmatprep.subr.mxu0 0.0
    %1185 = vmatpush1.msra.mxu0 0.0
    %1186 = vmatprep.subr.mxu0 0.0
    %1187 = vmatpush1.msra.mxu0 0.0
    %1188 = vmatprep.subr.mxu0 0.0
    %1189 = vmatpush1.msra.mxu0 0.0
    %1190 = vmatprep.subr.mxu0 0.0
    %1191 = vmatpush1.msra.mxu0 0.0
    %1192 = vmatprep.subr.mxu0 0.0
    %1193 = vmatpush1.msra.mxu0 0.0
    %1194 = vmatprep.subr.mxu0 0.0
    %1195 = vmatpush1.msra.mxu0 0.0
    %1196 = vmatprep.subr.mxu0 0.0
    %1197 = vmatpush1.msra.mxu0 0.0
    %1198 = vmatprep.subr.mxu0 0.0
    %1199 = vmatpush1.msra.mxu0 0.0
    %1200 = vmatprep.subr.mxu0 0.0
    %1201 = vmatpush1.msra.mxu0 0.0
    %1202 = vmatprep.subr.mxu0 0.0
    %1203 = vmatpush1.msra.mxu0 0.0
    %1204 = vmatprep.subr.mxu0 0.0
    %1205 = vmatpush1.msra.mxu0 0.0
    %1206 = vmatprep.subr.mxu0 0.0
    %1207 = vmatpush1.msra.mxu0 0.0
    %1208 = vmatprep.subr.mxu0 0.0
    %1209 = vmatpush1.msra.mxu0 0.0
    %1210 = vmatprep.subr.mxu0 0.0
    %1211 = vmatpush1.msra.mxu0 0.0
    %1212 = vmatprep.subr.mxu0 0.0
    %1213 = vmatpush1.msra.mxu0 0.0
    %1214 = vmatprep.subr.mxu0 0.0
    %1215 = vmatpush1.msra.mxu0 0.0
    %1216 = vmatprep.subr.mxu0 0.0
    %1217 = vmatpush1.msra.mxu0 0.0
    %1218 = vmatprep.subr.mxu0 0.0
    %1219 = vmatpush1.msra.mxu0 0.0
    %1220 = vmatprep.subr.mxu0 0.0
    %1221 = vmatpush1.msra.mxu0 0.0
    %1222 = vmatprep.subr.mxu0 0.0
    %1223 = vmatpush1.msra.mxu0 0.0
    %1224 = vmatprep.subr.mxu0 0.0
    %1225 = vmatpush1.msra.mxu0 0.0
    %1226 = vmatprep.subr.mxu0 0.0
    %1227 = vmatpush1.msra.mxu0 0.0
    %1228 = vmatprep.subr.mxu0 0.0
    %1229 = vmatpush1.msra.mxu0 0.0
    %1230 = vmatprep.subr.mxu0 0.0
    %1231 = vmatpush1.msra.mxu0 0.0
    %1232 = vmatprep.subr.mxu0 0.0
    %1233 = vmatpush1.msra.mxu0 0.0
    %1234 = vmatprep.subr.mxu0 0.0
    %1235 = vmatpush1.msra.mxu0 0.0
    %1236 = vmatprep.mubr.f32.mxu0 0.0
    %v1237 = vand.u32 %v51, 4294901760
    %v1238 = vsub.f32 %v51, %v1237
    %1239 = vmatmul.mubr.f32.gmra.mrb[0].mxu0 %v1238
    %v1240 = vpop.f32.mrb[0].mxu0
    %v1241 = vadd.f32 %v1115, %v1240
    %v1242 = vpop.f32.mrb[0].mxu0
    %v1243 = vadd.f32 %v1117, %v1242
    %1244 = vmatprep.mubr.f32.mxu0 0.0
    %v1245 = vand.u32 %v54, 4294901760
    %v1246 = vsub.f32 %v54, %v1245
    %1247 = vmatmul.mubr.f32.gmra.mrb[0].mxu0 %v1246
    %v1248 = vpop.f32.mrb[0].mxu0
    %v1249 = vadd.f32 %v1122, %v1248
    %v1250 = vpop.f32.mrb[0].mxu0
    %v1251 = vadd.f32 %v1124, %v1250
    %1252 = vmatprep.mubr.f32.mxu0 0.0
    %v1253 = vand.u32 %v57, 4294901760
    %v1254 = vsub.f32 %v57, %v1253
    %1255 = vmatmul.mubr.f32.gmra.mrb[0].mxu0 %v1254
    %v1256 = vpop.f32.mrb[0].mxu0
    %v1257 = vadd.f32 %v1129, %v1256
    %v1258 = vpop.f32.mrb[0].mxu0
    %v1259 = vadd.f32 %v1131, %v1258
    %1260 = vmatprep.mubr.f32.mxu0 0.0
    %v1261 = vand.u32 %v60, 4294901760
    %v1262 = vsub.f32 %v60, %v1261
    %1263 = vmatmul.mubr.f32.gmra.mrb[0].mxu0 %v1262
    %v1264 = vpop.f32.mrb[0].mxu0
    %v1265 = vadd.f32 %v1136, %v1264
    %v1266 = vpop.f32.mrb[0].mxu0
    %v1267 = vadd.f32 %v1138, %v1266
    %1268 = vmatprep.mubr.f32.mxu0 0.0
    %v1269 = vand.u32 %v63, 4294901760
    %v1270 = vsub.f32 %v63, %v1269
    %1271 = vmatmul.mubr.f32.gmra.mrb[0].mxu0 %v1270
    %v1272 = vpop.f32.mrb[0].mxu0
    %v1273 = vadd.f32 %v1143, %v1272
    %v1274 = vpop.f32.mrb[0].mxu0
    %v1275 = vadd.f32 %v1145, %v1274
    %1276 = vmatprep.mubr.f32.mxu0 0.0
    %v1277 = vand.u32 %v66, 4294901760
    %v1278 = vsub.f32 %v66, %v1277
    %1279 = vmatmul.mubr.f32.gmra.mrb[0].mxu0 %v1278
    %v1280 = vpop.f32.mrb[0].mxu0
    %v1281 = vadd.f32 %v1150, %v1280
    %v1282 = vpop.f32.mrb[0].mxu0
    %v1283 = vadd.f32 %v1152, %v1282
    %1284 = vmatprep.mubr.f32.mxu0 0.0
    %v1285 = vand.u32 %v69, 4294901760
    %v1286 = vsub.f32 %v69, %v1285
    %1287 = vmatmul.mubr.f32.gmra.mrb[0].mxu0 %v1286
    %v1288 = vpop.f32.mrb[0].mxu0
    %v1289 = vadd.f32 %v1157, %v1288
    %v1290 = vpop.f32.mrb[0].mxu0
    %v1291 = vadd.f32 %v1159, %v1290
    %1292 = vmatprep.mubr.f32.mxu0 0.0
    %v1293 = vand.u32 %v72, 4294901760
    %v1294 = vsub.f32 %v72, %v1293
    %1295 = vmatmul.mubr.f32.gmra.mrb[0].mxu0 %v1294
    %v1296 = vpop.f32.mrb[0].mxu0
    %v1297 = vadd.f32 %v1164, %v1296
    %v1298 = vpop.f32.mrb[0].mxu0
    %v1299 = vadd.f32 %v1166, %v1298
    %1300 = vdwg.mxu0
    %v1301 = vand.u32 %v26, 4294901760
    %1302 = vmatprep.subr.mxu0 %v1301
    %v1303 = vand.u32 %v25, 4294901760
    %1304 = vmatpush1.msra.mxu0 %v1303
    %1305 = vmatprep.subr.mxu0 0.0
    %1306 = vmatpush1.msra.mxu0 0.0
    %1307 = vmatprep.subr.mxu0 0.0
    %1308 = vmatpush1.msra.mxu0 0.0
    %1309 = vmatprep.subr.mxu0 0.0
    %1310 = vmatpush1.msra.mxu0 0.0
    %1311 = vmatprep.subr.mxu0 0.0
    %1312 = vmatpush1.msra.mxu0 0.0
    %1313 = vmatprep.subr.mxu0 0.0
    %1314 = vmatpush1.msra.mxu0 0.0
    %1315 = vmatprep.subr.mxu0 0.0
    %1316 = vmatpush1.msra.mxu0 0.0
    %1317 = vmatprep.subr.mxu0 0.0
    %1318 = vmatpush1.msra.mxu0 0.0
    %1319 = vmatprep.subr.mxu0 0.0
    %1320 = vmatpush1.msra.mxu0 0.0
    %1321 = vmatprep.subr.mxu0 0.0
    %1322 = vmatpush1.msra.mxu0 0.0
    %1323 = vmatprep.subr.mxu0 0.0
    %1324 = vmatpush1.msra.mxu0 0.0
    %1325 = vmatprep.subr.mxu0 0.0
    %1326 = vmatpush1.msra.mxu0 0.0
    %1327 = vmatprep.subr.mxu0 0.0
    %1328 = vmatpush1.msra.mxu0 0.0
    %1329 = vmatprep.subr.mxu0 0.0
    %1330 = vmatpush1.msra.mxu0 0.0
    %1331 = vmatprep.subr.mxu0 0.0
    %1332 = vmatpush1.msra.mxu0 0.0
    %1333 = vmatprep.subr.mxu0 0.0
    %1334 = vmatpush1.msra.mxu0 0.0
    %1335 = vmatprep.subr.mxu0 0.0
    %1336 = vmatpush1.msra.mxu0 0.0
    %1337 = vmatprep.subr.mxu0 0.0
    %1338 = vmatpush1.msra.mxu0 0.0
    %1339 = vmatprep.subr.mxu0 0.0
    %1340 = vmatpush1.msra.mxu0 0.0
    %1341 = vmatprep.subr.mxu0 0.0
    %1342 = vmatpush1.msra.mxu0 0.0
    %1343 = vmatprep.subr.mxu0 0.0
    %1344 = vmatpush1.msra.mxu0 0.0
    %1345 = vmatprep.subr.mxu0 0.0
    %1346 = vmatpush1.msra.mxu0 0.0
    %1347 = vmatprep.subr.mxu0 0.0
    %1348 = vmatpush1.msra.mxu0 0.0
    %1349 = vmatprep.subr.mxu0 0.0
    %1350 = vmatpush1.msra.mxu0 0.0
    %1351 = vmatprep.subr.mxu0 0.0
    %1352 = vmatpush1.msra.mxu0 0.0
    %1353 = vmatprep.subr.mxu0 0.0
    %1354 = vmatpush1.msra.mxu0 0.0
    %1355 = vmatprep.subr.mxu0 0.0
    %1356 = vmatpush1.msra.mxu0 0.0
    %1357 = vmatprep.subr.mxu0 0.0
    %1358 = vmatpush1.msra.mxu0 0.0
    %1359 = vmatprep.subr.mxu0 0.0
    %1360 = vmatpush1.msra.mxu0 0.0
    %1361 = vmatprep.subr.mxu0 0.0
    %1362 = vmatpush1.msra.mxu0 0.0
    %1363 = vmatprep.subr.mxu0 0.0
    %1364 = vmatpush1.msra.mxu0 0.0
    %1365 = vmatprep.subr.mxu0 0.0
    %1366 = vmatpush1.msra.mxu0 0.0
    %1367 = vmatprep.mubr.f32.mxu0 0.0
    %v1368 = vand.u32 %v51, 4294901760
    %v1369 = vsub.f32 %v51, %v1368
    %v1370 = vand.u32 %v1369, 4294901760
    %1371 = vmatmul.mubr.f32.gmra.mrb[0].mxu0 %v1370
    %v1372 = vpop.f32.mrb[0].mxu0
    %v1373 = vadd.f32 %v1241, %v1372
    %v1374 = vpop.f32.mrb[0].mxu0
    %v1375 = vadd.f32 %v1243, %v1374
    %1376 = vmatprep.mubr.f32.mxu0 0.0
    %v1377 = vand.u32 %v54, 4294901760
    %v1378 = vsub.f32 %v54, %v1377
    %v1379 = vand.u32 %v1378, 4294901760
    %1380 = vmatmul.mubr.f32.gmra.mrb[0].mxu0 %v1379
    %v1381 = vpop.f32.mrb[0].mxu0
    %v1382 = vadd.f32 %v1249, %v1381
    %v1383 = vpop.f32.mrb[0].mxu0
    %v1384 = vadd.f32 %v1251, %v1383
    %1385 = vmatprep.mubr.f32.mxu0 0.0
    %v1386 = vand.u32 %v57, 4294901760
    %v1387 = vsub.f32 %v57, %v1386
    %v1388 = vand.u32 %v1387, 4294901760
    %1389 = vmatmul.mubr.f32.gmra.mrb[0].mxu0 %v1388
    %v1390 = vpop.f32.mrb[0].mxu0
    %v1391 = vadd.f32 %v1257, %v1390
    %v1392 = vpop.f32.mrb[0].mxu0
    %v1393 = vadd.f32 %v1259, %v1392
    %1394 = vmatprep.mubr.f32.mxu0 0.0
    %v1395 = vand.u32 %v60, 4294901760
    %v1396 = vsub.f32 %v60, %v1395
    %v1397 = vand.u32 %v1396, 4294901760
    %1398 = vmatmul.mubr.f32.gmra.mrb[0].mxu0 %v1397
    %v1399 = vpop.f32.mrb[0].mxu0
    %v1400 = vadd.f32 %v1265, %v1399
    %v1401 = vpop.f32.mrb[0].mxu0
    %v1402 = vadd.f32 %v1267, %v1401
    %1403 = vmatprep.mubr.f32.mxu0 0.0
    %v1404 = vand.u32 %v63, 4294901760
    %v1405 = vsub.f32 %v63, %v1404
    %v1406 = vand.u32 %v1405, 4294901760
    %1407 = vmatmul.mubr.f32.gmra.mrb[0].mxu0 %v1406
    %v1408 = vpop.f32.mrb[0].mxu0
    %v1409 = vadd.f32 %v1273, %v1408
    %v1410 = vpop.f32.mrb[0].mxu0
    %v1411 = vadd.f32 %v1275, %v1410
    %1412 = vmatprep.mubr.f32.mxu0 0.0
    %v1413 = vand.u32 %v66, 4294901760
    %v1414 = vsub.f32 %v66, %v1413
    %v1415 = vand.u32 %v1414, 4294901760
    %1416 = vmatmul.mubr.f32.gmra.mrb[0].mxu0 %v1415
    %v1417 = vpop.f32.mrb[0].mxu0
    %v1418 = vadd.f32 %v1281, %v1417
    %v1419 = vpop.f32.mrb[0].mxu0
    %v1420 = vadd.f32 %v1283, %v1419
    %1421 = vmatprep.mubr.f32.mxu0 0.0
    %v1422 = vand.u32 %v69, 4294901760
    %v1423 = vsub.f32 %v69, %v1422
    %v1424 = vand.u32 %v1423, 4294901760
    %1425 = vmatmul.mubr.f32.gmra.mrb[0].mxu0 %v1424
    %v1426 = vpop.f32.mrb[0].mxu0
    %v1427 = vadd.f32 %v1289, %v1426
    %v1428 = vpop.f32.mrb[0].mxu0
    %v1429 = vadd.f32 %v1291, %v1428
    %1430 = vmatprep.mubr.f32.mxu0 0.0
    %v1431 = vand.u32 %v72, 4294901760
    %v1432 = vsub.f32 %v72, %v1431
    %v1433 = vand.u32 %v1432, 4294901760
    %1434 = vmatmul.mubr.f32.gmra.mrb[0].mxu0 %v1433
    %v1435 = vpop.f32.mrb[0].mxu0
    %v1436 = vadd.f32 %v1297, %v1435
    %v1437 = vpop.f32.mrb[0].mxu0
    %v1438 = vadd.f32 %v1299, %v1437
    %1439 = vdwg.mxu0
    %v1440 = vand.u32 %v26, 4294901760
    %v1441 = vsub.f32 %v26, %v1440
    %v1442 = vand.u32 %v1441, 4294901760
    %1443 = vmatprep.subr.mxu0 %v1442
    %v1444 = vand.u32 %v25, 4294901760
    %v1445 = vsub.f32 %v25, %v1444
    %v1446 = vand.u32 %v1445, 4294901760
    %1447 = vmatpush1.msra.mxu0 %v1446
    %1448 = vmatprep.subr.mxu0 0.0
    %1449 = vmatpush1.msra.mxu0 0.0
    %1450 = vmatprep.subr.mxu0 0.0
    %1451 = vmatpush1.msra.mxu0 0.0
    %1452 = vmatprep.subr.mxu0 0.0
    %1453 = vmatpush1.msra.mxu0 0.0
    %1454 = vmatprep.subr.mxu0 0.0
    %1455 = vmatpush1.msra.mxu0 0.0
    %1456 = vmatprep.subr.mxu0 0.0
    %1457 = vmatpush1.msra.mxu0 0.0
    %1458 = vmatprep.subr.mxu0 0.0
    %1459 = vmatpush1.msra.mxu0 0.0
    %1460 = vmatprep.subr.mxu0 0.0
    %1461 = vmatpush1.msra.mxu0 0.0
    %1462 = vmatprep.subr.mxu0 0.0
    %1463 = vmatpush1.msra.mxu0 0.0
    %1464 = vmatprep.subr.mxu0 0.0
    %1465 = vmatpush1.msra.mxu0 0.0
    %1466 = vmatprep.subr.mxu0 0.0
    %1467 = vmatpush1.msra.mxu0 0.0
    %1468 = vmatprep.subr.mxu0 0.0
    %1469 = vmatpush1.msra.mxu0 0.0
    %1470 = vmatprep.subr.mxu0 0.0
    %1471 = vmatpush1.msra.mxu0 0.0
    %1472 = vmatprep.subr.mxu0 0.0
    %1473 = vmatpush1.msra.mxu0 0.0
    %1474 = vmatprep.subr.mxu0 0.0
    %1475 = vmatpush1.msra.mxu0 0.0
    %1476 = vmatprep.subr.mxu0 0.0
    %1477 = vmatpush1.msra.mxu0 0.0
    %1478 = vmatprep.subr.mxu0 0.0
    %1479 = vmatpush1.msra.mxu0 0.0
    %1480 = vmatprep.subr.mxu0 0.0
    %1481 = vmatpush1.msra.mxu0 0.0
    %1482 = vmatprep.subr.mxu0 0.0
    %1483 = vmatpush1.msra.mxu0 0.0
    %1484 = vmatprep.subr.mxu0 0.0
    %1485 = vmatpush1.msra.mxu0 0.0
    %1486 = vmatprep.subr.mxu0 0.0
    %1487 = vmatpush1.msra.mxu0 0.0
    %1488 = vmatprep.subr.mxu0 0.0
    %1489 = vmatpush1.msra.mxu0 0.0
    %1490 = vmatprep.subr.mxu0 0.0
    %1491 = vmatpush1.msra.mxu0 0.0
    %1492 = vmatprep.subr.mxu0 0.0
    %1493 = vmatpush1.msra.mxu0 0.0
    %1494 = vmatprep.subr.mxu0 0.0
    %1495 = vmatpush1.msra.mxu0 0.0
    %1496 = vmatprep.subr.mxu0 0.0
    %1497 = vmatpush1.msra.mxu0 0.0
    %1498 = vmatprep.subr.mxu0 0.0
    %1499 = vmatpush1.msra.mxu0 0.0
    %1500 = vmatprep.subr.mxu0 0.0
    %1501 = vmatpush1.msra.mxu0 0.0
    %1502 = vmatprep.subr.mxu0 0.0
    %1503 = vmatpush1.msra.mxu0 0.0
    %1504 = vmatprep.subr.mxu0 0.0
    %1505 = vmatpush1.msra.mxu0 0.0
    %1506 = vmatprep.subr.mxu0 0.0
    %1507 = vmatpush1.msra.mxu0 0.0
    %1508 = vmatprep.subr.mxu0 0.0
    %1509 = vmatpush1.msra.mxu0 0.0
    %1510 = vmatprep.mubr.f32.mxu0 0.0
    %v1511 = vand.u32 %v51, 4294901760
    %1512 = vmatmul.mubr.f32.gmra.mrb[0].mxu0 %v1511
    %v1513 = vpop.f32.mrb[0].mxu0
    %v1514 = vadd.f32 %v1373, %v1513
    %v1515 = vpop.f32.mrb[0].mxu0
    %v1516 = vadd.f32 %v1375, %v1515
    %1517 = vmatprep.mubr.f32.mxu0 0.0
    %v1518 = vand.u32 %v54, 4294901760
    %1519 = vmatmul.mubr.f32.gmra.mrb[0].mxu0 %v1518
    %v1520 = vpop.f32.mrb[0].mxu0
    %v1521 = vadd.f32 %v1382, %v1520
    %v1522 = vpop.f32.mrb[0].mxu0
    %v1523 = vadd.f32 %v1384, %v1522
    %1524 = vmatprep.mubr.f32.mxu0 0.0
    %v1525 = vand.u32 %v57, 4294901760
    %1526 = vmatmul.mubr.f32.gmra.mrb[0].mxu0 %v1525
    %v1527 = vpop.f32.mrb[0].mxu0
    %v1528 = vadd.f32 %v1391, %v1527
    %v1529 = vpop.f32.mrb[0].mxu0
    %v1530 = vadd.f32 %v1393, %v1529
    %1531 = vmatprep.mubr.f32.mxu0 0.0
    %v1532 = vand.u32 %v60, 4294901760
    %1533 = vmatmul.mubr.f32.gmra.mrb[0].mxu0 %v1532
    %v1534 = vpop.f32.mrb[0].mxu0
    %v1535 = vadd.f32 %v1400, %v1534
    %v1536 = vpop.f32.mrb[0].mxu0
    %v1537 = vadd.f32 %v1402, %v1536
    %1538 = vmatprep.mubr.f32.mxu0 0.0
    %v1539 = vand.u32 %v63, 4294901760
    %1540 = vmatmul.mubr.f32.gmra.mrb[0].mxu0 %v1539
    %v1541 = vpop.f32.mrb[0].mxu0
    %v1542 = vadd.f32 %v1409, %v1541
    %v1543 = vpop.f32.mrb[0].mxu0
    %v1544 = vadd.f32 %v1411, %v1543
    %1545 = vmatprep.mubr.f32.mxu0 0.0
    %v1546 = vand.u32 %v66, 4294901760
    %1547 = vmatmul.mubr.f32.gmra.mrb[0].mxu0 %v1546
    %v1548 = vpop.f32.mrb[0].mxu0
    %v1549 = vadd.f32 %v1418, %v1548
    %v1550 = vpop.f32.mrb[0].mxu0
    %v1551 = vadd.f32 %v1420, %v1550
    %1552 = vmatprep.mubr.f32.mxu0 0.0
    %v1553 = vand.u32 %v69, 4294901760
    %1554 = vmatmul.mubr.f32.gmra.mrb[0].mxu0 %v1553
    %v1555 = vpop.f32.mrb[0].mxu0
    %v1556 = vadd.f32 %v1427, %v1555
    %v1557 = vpop.f32.mrb[0].mxu0
    %v1558 = vadd.f32 %v1429, %v1557
    %1559 = vmatprep.mubr.f32.mxu0 0.0
    %v1560 = vand.u32 %v72, 4294901760
    %1561 = vmatmul.mubr.f32.gmra.mrb[0].mxu0 %v1560
    %v1562 = vpop.f32.mrb[0].mxu0
    %v1563 = vadd.f32 %v1436, %v1562
    %v1564 = vpop.f32.mrb[0].mxu0
    %v1565 = vadd.f32 %v1438, %v1564
    %1566 = vdwg.mxu0
    %v1567 = vand.u32 %v26, 4294901760
    %1568 = vmatprep.subr.mxu0 %v1567
    %v1569 = vand.u32 %v25, 4294901760
    %1570 = vmatpush1.msra.mxu0 %v1569
    %1571 = vmatprep.subr.mxu0 0.0
    %1572 = vmatpush1.msra.mxu0 0.0
    %1573 = vmatprep.subr.mxu0 0.0
    %1574 = vmatpush1.msra.mxu0 0.0
    %1575 = vmatprep.subr.mxu0 0.0
    %1576 = vmatpush1.msra.mxu0 0.0
    %1577 = vmatprep.subr.mxu0 0.0
    %1578 = vmatpush1.msra.mxu0 0.0
    %1579 = vmatprep.subr.mxu0 0.0
    %1580 = vmatpush1.msra.mxu0 0.0
    %1581 = vmatprep.subr.mxu0 0.0
    %1582 = vmatpush1.msra.mxu0 0.0
    %1583 = vmatprep.subr.mxu0 0.0
    %1584 = vmatpush1.msra.mxu0 0.0
    %1585 = vmatprep.subr.mxu0 0.0
    %1586 = vmatpush1.msra.mxu0 0.0
    %1587 = vmatprep.subr.mxu0 0.0
    %1588 = vmatpush1.msra.mxu0 0.0
    %1589 = vmatprep.subr.mxu0 0.0
    %1590 = vmatpush1.msra.mxu0 0.0
    %1591 = vmatprep.subr.mxu0 0.0
    %1592 = vmatpush1.msra.mxu0 0.0
    %1593 = vmatprep.subr.mxu0 0.0
    %1594 = vmatpush1.msra.mxu0 0.0
    %1595 = vmatprep.subr.mxu0 0.0
    %1596 = vmatpush1.msra.mxu0 0.0
    %1597 = vmatprep.subr.mxu0 0.0
    %1598 = vmatpush1.msra.mxu0 0.0
    %1599 = vmatprep.subr.mxu0 0.0
    %1600 = vmatpush1.msra.mxu0 0.0
    %1601 = vmatprep.subr.mxu0 0.0
    %1602 = vmatpush1.msra.mxu0 0.0
    %1603 = vmatprep.subr.mxu0 0.0
    %1604 = vmatpush1.msra.mxu0 0.0
    %1605 = vmatprep.subr.mxu0 0.0
    %1606 = vmatpush1.msra.mxu0 0.0
    %1607 = vmatprep.subr.mxu0 0.0
    %1608 = vmatpush1.msra.mxu0 0.0
    %1609 = vmatprep.subr.mxu0 0.0
    %1610 = vmatpush1.msra.mxu0 0.0
    %1611 = vmatprep.subr.mxu0 0.0
    %1612 = vmatpush1.msra.mxu0 0.0
    %1613 = vmatprep.subr.mxu0 0.0
    %1614 = vmatpush1.msra.mxu0 0.0
    %1615 = vmatprep.subr.mxu0 0.0
    %1616 = vmatpush1.msra.mxu0 0.0
    %1617 = vmatprep.subr.mxu0 0.0
    %1618 = vmatpush1.msra.mxu0 0.0
    %1619 = vmatprep.subr.mxu0 0.0
    %1620 = vmatpush1.msra.mxu0 0.0
    %1621 = vmatprep.subr.mxu0 0.0
    %1622 = vmatpush1.msra.mxu0 0.0
    %1623 = vmatprep.subr.mxu0 0.0
    %1624 = vmatpush1.msra.mxu0 0.0
    %1625 = vmatprep.subr.mxu0 0.0
    %1626 = vmatpush1.msra.mxu0 0.0
    %1627 = vmatprep.subr.mxu0 0.0
    %1628 = vmatpush1.msra.mxu0 0.0
    %1629 = vmatprep.subr.mxu0 0.0
    %1630 = vmatpush1.msra.mxu0 0.0
    %1631 = vmatprep.subr.mxu0 0.0
    %1632 = vmatpush1.msra.mxu0 0.0
    %1633 = vmatprep.mubr.f32.mxu0 0.0
    %v1634 = vand.u32 %v51, 4294901760
    %1635 = vmatmul.mubr.f32.gmra.mrb[0].mxu0 %v1634
    %v1636 = vpop.f32.mrb[0].mxu0
    %v1637 = vadd.f32 %v1514, %v1636
    %v1638 = vpop.f32.mrb[0].mxu0
    %v1639 = vadd.f32 %v1516, %v1638
    %1640 = vmatprep.mubr.f32.mxu0 0.0
    %v1641 = vand.u32 %v54, 4294901760
    %1642 = vmatmul.mubr.f32.gmra.mrb[0].mxu0 %v1641
    %v1643 = vpop.f32.mrb[0].mxu0
    %v1644 = vadd.f32 %v1521, %v1643
    %v1645 = vpop.f32.mrb[0].mxu0
    %v1646 = vadd.f32 %v1523, %v1645
    %1647 = vmatprep.mubr.f32.mxu0 0.0
    %v1648 = vand.u32 %v57, 4294901760
    %1649 = vmatmul.mubr.f32.gmra.mrb[0].mxu0 %v1648
    %v1650 = vpop.f32.mrb[0].mxu0
    %v1651 = vadd.f32 %v1528, %v1650
    %v1652 = vpop.f32.mrb[0].mxu0
    %v1653 = vadd.f32 %v1530, %v1652
    %1654 = vmatprep.mubr.f32.mxu0 0.0
    %v1655 = vand.u32 %v60, 4294901760
    %1656 = vmatmul.mubr.f32.gmra.mrb[0].mxu0 %v1655
    %v1657 = vpop.f32.mrb[0].mxu0
    %v1658 = vadd.f32 %v1535, %v1657
    %v1659 = vpop.f32.mrb[0].mxu0
    %v1660 = vadd.f32 %v1537, %v1659
    %1661 = vmatprep.mubr.f32.mxu0 0.0
    %v1662 = vand.u32 %v63, 4294901760
    %1663 = vmatmul.mubr.f32.gmra.mrb[0].mxu0 %v1662
    %v1664 = vpop.f32.mrb[0].mxu0
    %v1665 = vadd.f32 %v1542, %v1664
    %v1666 = vpop.f32.mrb[0].mxu0
    %v1667 = vadd.f32 %v1544, %v1666
    %1668 = vmatprep.mubr.f32.mxu0 0.0
    %v1669 = vand.u32 %v66, 4294901760
    %1670 = vmatmul.mubr.f32.gmra.mrb[0].mxu0 %v1669
    %v1671 = vpop.f32.mrb[0].mxu0
    %v1672 = vadd.f32 %v1549, %v1671
    %v1673 = vpop.f32.mrb[0].mxu0
    %v1674 = vadd.f32 %v1551, %v1673
    %1675 = vmatprep.mubr.f32.mxu0 0.0
    %v1676 = vand.u32 %v69, 4294901760
    %1677 = vmatmul.mubr.f32.gmra.mrb[0].mxu0 %v1676
    %v1678 = vpop.f32.mrb[0].mxu0
    %v1679 = vadd.f32 %v1556, %v1678
    %v1680 = vpop.f32.mrb[0].mxu0
    %v1681 = vadd.f32 %v1558, %v1680
    %1682 = vmatprep.mubr.f32.mxu0 0.0
    %v1683 = vand.u32 %v72, 4294901760
    %1684 = vmatmul.mubr.f32.gmra.mrb[0].mxu0 %v1683
    %v1685 = vpop.f32.mrb[0].mxu0
    %v1686 = vadd.f32 %v1563, %v1685
    %v1687 = vpop.f32.mrb[0].mxu0
    %v1688 = vadd.f32 %v1565, %v1687
    %1689 = vdwg.mxu0
    %v1690 = vand.u32 2147483647, %v829
    %vm1691 = vcmp.le.f32.partialorder %v1690, 0.7853982
    %vm1692 = vcmp.lt.s32.totalorder %v829, 0
    %v1693 = vand.u32 %v829, 2139095040
    %v1694 = vshrl.u32 %v1693, 23
    %v1695 = vsub.s32 %v1694, 127
    %v1696 = vand.u32 2147483647, %v829
    %v1697 = vand.u32 %v1696, 8388607
    %v1698 = vor.u32 %v1697, 8388608
    %v1699 = vsub.s32 0, %v1698
    %v1700 = vadd.s32 %v1695, 1
    %vm1701 = vcmp.gt.s32.totalorder %v1700, 0
    %v1702 = vsel %vm1701, %v1700, 0
    %v1703 = vshrl.u32 %v1702, 5
    %v1704 = vand.u32 %v1702, 31
    %v1705 = vsub.s32 32, %v1704
    %v1706 = vshrl.u32 683565275, %v1705
    %v1707 = vshll.u32 683565275, %v1704
    %v1708 = vshrl.u32 2475754826, %v1705
    %v1709 = vor.u32 %v1707, %v1708
    %v1710 = vshll.u32 2475754826, %v1704
    %v1711 = vshrl.u32 2131351028, %v1705
    %v1712 = vor.u32 %v1710, %v1711
    %v1713 = vshll.u32 2131351028, %v1704
    %v1714 = vshrl.u32 2102212464, %v1705
    %v1715 = vor.u32 %v1713, %v1714
    %v1716 = vshll.u32 2102212464, %v1704
    %v1717 = vshrl.u32 920167782, %v1705
    %v1718 = vor.u32 %v1716, %v1717
    %v1719 = vshll.u32 920167782, %v1704
    %v1720 = vshrl.u32 1326507024, %v1705
    %v1721 = vor.u32 %v1719, %v1720
    %vm1722 = vcmp.lt.s32.totalorder %v1703, 1
    %vm1723 = vcmp.lt.s32.totalorder %v1703, 2
    %vm1724 = vcmp.lt.s32.totalorder %v1703, 3
    %vm1725 = vcmp.lt.s32.totalorder %v1703, 4
    %v1726 = vsel %vm1722, %v1706, %v1709
    %v1727 = vsel %vm1725, %v1715, 2102212464
    %v1728 = vsel %vm1724, %v1712, %v1727
    %v1729 = vsel %vm1723, %v1726, %v1728
    %v1730 = vsel %vm1722, %v1709, %v1712
    %v1731 = vsel %vm1725, %v1718, 920167782
    %v1732 = vsel %vm1724, %v1715, %v1731
    %v1733 = vsel %vm1723, %v1730, %v1732
    %v1734 = vsel %vm1722, %v1712, %v1715
    %v1735 = vsel %vm1725, %v1721, 1326507024
    %v1736 = vsel %vm1724, %v1718, %v1735
    %v1737 = vsel %vm1723, %v1734, %v1736
    %v1738 = vshll.u32 %v1698, 8
    %v1739 = vmul.u32.u64.compose %v1738, %v1737
    %v1740 = vextract.low.u32 %v1739
    %v1741 = vextract.high.u32 %v1739
    %v1742 = vmul.u32.u64.compose %v1738, %v1733
    %v1743 = vextract.low.u32 %v1742
    %v1744 = vextract.high.u32 %v1742
    %v1745 = vmul.u32 %v1738, %v1729
    %v1746 = vadd.s32 %v1741, %v1743
    %vm1747 = vc.u32 %v1741, %v1743
    %v1748 = vadd.s32 %v1744, 1
    %v1749 = vsel %vm1747, %v1748, %v1744
    %v1750 = vadd.s32 %v1745, %v1749
    %v1751 = vadd.s32 %v1750, 536870912
    %v1752 = vshrl.u32 %v1751, 30
    %v1753 = vshll.u32 %v1752, 30
    %v1754 = vsub.s32 %v1750, %v1753
    %vm1755 = vcmp.lt.s32.totalorder %v1754, 0
    %v1756 = vsub.s32 0, %v1754
    %v1757 = vsel %vm1755, %v1756, %v1754
    %v1758 = vclz %v1757
    %v1759 = vsub.s32 %v1758, 2
    %vm1760 = vcmp.gt.s32.totalorder 0, %v1759
    %v1761 = vsel %vm1760, 0, %v1759
    %v1762 = vsub.s32 32, %v1761
    %v1763 = vshll.u32 %v1754, %v1761
    %v1764 = vshrl.u32 %v1746, %v1762
    %v1765 = vor.u32 %v1763, %v1764
    %v1766 = vsub.s32 4294967266, %v1761
    %v1767 = vadd.s32 %v1766, 127
    %v1768 = vshll.u32 %v1767, 23
    %v1769 = vor.u32 4788187, %v1768
    %v1770 = vand.u32 2147483647, %v1769
    %v1772 = vcvt.s32.f32 %v1765
    %v1773 = vmul.f32 %v1772, %v1770
    %v1774 = vxor.u32 %v1773, 2147483648
    %v1775 = vsel %vm1692, %v1774, %v1773
    %v1776 = vsub.s32 4, %v1752
    %v1777 = vsel %vm1692, %v1776, %v1752
    %v1778 = vsel %vm1691, %v829, %v1775
    %v1779 = vsel %vm1691, 0, %v1777
    %v1780 = vcosq.f32.pop %v1778
    %v1781 = vsinq.f32.pop %v1778
    %vm1782 = vweird.f32 %v829
    %v1783 = vadd.s32 %v1779, 3
    %v1784 = vand.u32 %v1783, 3
    %vm1785 = vcmp.lt.s32.totalorder %v1784, 2
    %vm1786 = vcmp.eq.s32.totalorder %v1784, 0
    %v1787 = vxor.u32 %v1781, 2147483648
    %v1788 = vsel %vm1786, %v1780, %v1787
    %vm1789 = vcmp.eq.s32.totalorder %v1784, 2
    %v1790 = vxor.u32 %v1780, 2147483648
    %v1791 = vsel %vm1789, %v1790, %v1781
    %v1792 = vsel %vm1785, %v1788, %v1791
    %v1793 = vsel %vm1782, nan, %v1792
    %v1794 = vand.u32 2147483647, %v831
    %vm1795 = vcmp.le.f32.partialorder %v1794, 0.7853982
    %vm1796 = vcmp.lt.s32.totalorder %v831, 0
    %v1797 = vand.u32 %v831, 2139095040
    %v1798 = vshrl.u32 %v1797, 23
    %v1799 = vsub.s32 %v1798, 127
    %v1800 = vand.u32 2147483647, %v831
    %v1801 = vand.u32 %v1800, 8388607
    %v1802 = vor.u32 %v1801, 8388608
    %v1803 = vsub.s32 0, %v1802
    %v1804 = vadd.s32 %v1799, 1
    %vm1805 = vcmp.gt.s32.totalorder %v1804, 0
    %v1806 = vsel %vm1805, %v1804, 0
    %v1807 = vshrl.u32 %v1806, 5
    %v1808 = vand.u32 %v1806, 31
    %v1809 = vsub.s32 32, %v1808
    %v1810 = vshrl.u32 683565275, %v1809
    %v1811 = vshll.u32 683565275, %v1808
    %v1812 = vshrl.u32 2475754826, %v1809
    %v1813 = vor.u32 %v1811, %v1812
    %v1814 = vshll.u32 2475754826, %v1808
    %v1815 = vshrl.u32 2131351028, %v1809
    %v1816 = vor.u32 %v1814, %v1815
    %v1817 = vshll.u32 2131351028, %v1808
    %v1818 = vshrl.u32 2102212464, %v1809
    %v1819 = vor.u32 %v1817, %v1818
    %v1820 = vshll.u32 2102212464, %v1808
    %v1821 = vshrl.u32 920167782, %v1809
    %v1822 = vor.u32 %v1820, %v1821
    %v1823 = vshll.u32 920167782, %v1808
    %v1824 = vshrl.u32 1326507024, %v1809
    %v1825 = vor.u32 %v1823, %v1824
    %vm1826 = vcmp.lt.s32.totalorder %v1807, 1
    %vm1827 = vcmp.lt.s32.totalorder %v1807, 2
    %vm1828 = vcmp.lt.s32.totalorder %v1807, 3
    %vm1829 = vcmp.lt.s32.totalorder %v1807, 4
    %v1830 = vsel %vm1826, %v1810, %v1813
    %v1831 = vsel %vm1829, %v1819, 2102212464
    %v1832 = vsel %vm1828, %v1816, %v1831
    %v1833 = vsel %vm1827, %v1830, %v1832
    %v1834 = vsel %vm1826, %v1813, %v1816
    %v1835 = vsel %vm1829, %v1822, 920167782
    %v1836 = vsel %vm1828, %v1819, %v1835
    %v1837 = vsel %vm1827, %v1834, %v1836
    %v1838 = vsel %vm1826, %v1816, %v1819
    %v1839 = vsel %vm1829, %v1825, 1326507024
    %v1840 = vsel %vm1828, %v1822, %v1839
    %v1841 = vsel %vm1827, %v1838, %v1840
    %v1842 = vshll.u32 %v1802, 8
    %v1843 = vmul.u32.u64.compose %v1842, %v1841
    %v1844 = vextract.low.u32 %v1843
    %v1845 = vextract.high.u32 %v1843
    %v1846 = vmul.u32.u64.compose %v1842, %v1837
    %v1847 = vextract.low.u32 %v1846
    %v1848 = vextract.high.u32 %v1846
    %v1849 = vmul.u32 %v1842, %v1833
    %v1850 = vadd.s32 %v1845, %v1847
    %vm1851 = vc.u32 %v1845, %v1847
    %v1852 = vadd.s32 %v1848, 1
    %v1853 = vsel %vm1851, %v1852, %v1848
    %v1854 = vadd.s32 %v1849, %v1853
    %v1855 = vadd.s32 %v1854, 536870912
    %v1856 = vshrl.u32 %v1855, 30
    %v1857 = vshll.u32 %v1856, 30
    %v1858 = vsub.s32 %v1854, %v1857
    %vm1859 = vcmp.lt.s32.totalorder %v1858, 0
    %v1860 = vsub.s32 0, %v1858
    %v1861 = vsel %vm1859, %v1860, %v1858
    %v1862 = vclz %v1861
    %v1863 = vsub.s32 %v1862, 2
    %vm1864 = vcmp.gt.s32.totalorder 0, %v1863
    %v1865 = vsel %vm1864, 0, %v1863
    %v1866 = vsub.s32 32, %v1865
    %v1867 = vshll.u32 %v1858, %v1865
    %v1868 = vshrl.u32 %v1850, %v1866
    %v1869 = vor.u32 %v1867, %v1868
    %v1870 = vsub.s32 4294967266, %v1865
    %v1871 = vadd.s32 %v1870, 127
    %v1872 = vshll.u32 %v1871, 23
    %v1873 = vor.u32 4788187, %v1872
    %v1874 = vand.u32 2147483647, %v1873
    %v1876 = vcvt.s32.f32 %v1869
    %v1877 = vmul.f32 %v1876, %v1874
    %v1878 = vxor.u32 %v1877, 2147483648
    %v1879 = vsel %vm1796, %v1878, %v1877
    %v1880 = vsub.s32 4, %v1856
    %v1881 = vsel %vm1796, %v1880, %v1856
    %v1882 = vsel %vm1795, %v831, %v1879
    %v1883 = vsel %vm1795, 0, %v1881
    %v1884 = vcosq.f32.pop %v1882
    %v1885 = vsinq.f32.pop %v1882
    %vm1886 = vweird.f32 %v831
    %v1887 = vadd.s32 %v1883, 3
    %v1888 = vand.u32 %v1887, 3
    %vm1889 = vcmp.lt.s32.totalorder %v1888, 2
    %vm1890 = vcmp.eq.s32.totalorder %v1888, 0
    %v1891 = vxor.u32 %v1885, 2147483648
    %v1892 = vsel %vm1890, %v1884, %v1891
    %vm1893 = vcmp.eq.s32.totalorder %v1888, 2
    %v1894 = vxor.u32 %v1884, 2147483648
    %v1895 = vsel %vm1893, %v1894, %v1885
    %v1896 = vsel %vm1889, %v1892, %v1895
    %v1897 = vsel %vm1886, nan, %v1896
    %v1898 = vand.u32 2147483647, %v1637
    %vm1899 = vcmp.le.f32.partialorder %v1898, 0.7853982
    %vm1900 = vcmp.lt.s32.totalorder %v1637, 0
    %v1901 = vand.u32 %v1637, 2139095040
    %v1902 = vshrl.u32 %v1901, 23
    %v1903 = vsub.s32 %v1902, 127
    %v1904 = vand.u32 2147483647, %v1637
    %v1905 = vand.u32 %v1904, 8388607
    %v1906 = vor.u32 %v1905, 8388608
    %v1907 = vsub.s32 0, %v1906
    %v1908 = vadd.s32 %v1903, 1
    %vm1909 = vcmp.gt.s32.totalorder %v1908, 0
    %v1910 = vsel %vm1909, %v1908, 0
    %v1911 = vshrl.u32 %v1910, 5
    %v1912 = vand.u32 %v1910, 31
    %v1913 = vsub.s32 32, %v1912
    %v1914 = vshrl.u32 683565275, %v1913
    %v1915 = vshll.u32 683565275, %v1912
    %v1916 = vshrl.u32 2475754826, %v1913
    %v1917 = vor.u32 %v1915, %v1916
    %v1918 = vshll.u32 2475754826, %v1912
    %v1919 = vshrl.u32 2131351028, %v1913
    %v1920 = vor.u32 %v1918, %v1919
    %v1921 = vshll.u32 2131351028, %v1912
    %v1922 = vshrl.u32 2102212464, %v1913
    %v1923 = vor.u32 %v1921, %v1922
    %v1924 = vshll.u32 2102212464, %v1912
    %v1925 = vshrl.u32 920167782, %v1913
    %v1926 = vor.u32 %v1924, %v1925
    %v1927 = vshll.u32 920167782, %v1912
    %v1928 = vshrl.u32 1326507024, %v1913
    %v1929 = vor.u32 %v1927, %v1928
    %vm1930 = vcmp.lt.s32.totalorder %v1911, 1
    %vm1931 = vcmp.lt.s32.totalorder %v1911, 2
    %vm1932 = vcmp.lt.s32.totalorder %v1911, 3
    %vm1933 = vcmp.lt.s32.totalorder %v1911, 4
    %v1934 = vsel %vm1930, %v1914, %v1917
    %v1935 = vsel %vm1933, %v1923, 2102212464
    %v1936 = vsel %vm1932, %v1920, %v1935
    %v1937 = vsel %vm1931, %v1934, %v1936
    %v1938 = vsel %vm1930, %v1917, %v1920
    %v1939 = vsel %vm1933, %v1926, 920167782
    %v1940 = vsel %vm1932, %v1923, %v1939
    %v1941 = vsel %vm1931, %v1938, %v1940
    %v1942 = vsel %vm1930, %v1920, %v1923
    %v1943 = vsel %vm1933, %v1929, 1326507024
    %v1944 = vsel %vm1932, %v1926, %v1943
    %v1945 = vsel %vm1931, %v1942, %v1944
    %v1946 = vshll.u32 %v1906, 8
    %v1947 = vmul.u32.u64.compose %v1946, %v1945
    %v1948 = vextract.low.u32 %v1947
    %v1949 = vextract.high.u32 %v1947
    %v1950 = vmul.u32.u64.compose %v1946, %v1941
    %v1951 = vextract.low.u32 %v1950
    %v1952 = vextract.high.u32 %v1950
    %v1953 = vmul.u32 %v1946, %v1937
    %v1954 = vadd.s32 %v1949, %v1951
    %vm1955 = vc.u32 %v1949, %v1951
    %v1956 = vadd.s32 %v1952, 1
    %v1957 = vsel %vm1955, %v1956, %v1952
    %v1958 = vadd.s32 %v1953, %v1957
    %v1959 = vadd.s32 %v1958, 536870912
    %v1960 = vshrl.u32 %v1959, 30
    %v1961 = vshll.u32 %v1960, 30
    %v1962 = vsub.s32 %v1958, %v1961
    %vm1963 = vcmp.lt.s32.totalorder %v1962, 0
    %v1964 = vsub.s32 0, %v1962
    %v1965 = vsel %vm1963, %v1964, %v1962
    %v1966 = vclz %v1965
    %v1967 = vsub.s32 %v1966, 2
    %vm1968 = vcmp.gt.s32.totalorder 0, %v1967
    %v1969 = vsel %vm1968, 0, %v1967
    %v1970 = vsub.s32 32, %v1969
    %v1971 = vshll.u32 %v1962, %v1969
    %v1972 = vshrl.u32 %v1954, %v1970
    %v1973 = vor.u32 %v1971, %v1972
    %v1974 = vsub.s32 4294967266, %v1969
    %v1975 = vadd.s32 %v1974, 127
    %v1976 = vshll.u32 %v1975, 23
    %v1977 = vor.u32 4788187, %v1976
    %v1978 = vand.u32 2147483647, %v1977
    %v1980 = vcvt.s32.f32 %v1973
    %v1981 = vmul.f32 %v1980, %v1978
    %v1982 = vxor.u32 %v1981, 2147483648
    %v1983 = vsel %vm1900, %v1982, %v1981
    %v1984 = vsub.s32 4, %v1960
    %v1985 = vsel %vm1900, %v1984, %v1960
    %v1986 = vsel %vm1899, %v1637, %v1983
    %v1987 = vsel %vm1899, 0, %v1985
    %v1988 = vcosq.f32.pop %v1986
    %v1989 = vsinq.f32.pop %v1986
    %vm1990 = vweird.f32 %v1637
    %v1991 = vadd.s32 %v1987, 3
    %v1992 = vand.u32 %v1991, 3
    %vm1993 = vcmp.lt.s32.totalorder %v1992, 2
    %vm1994 = vcmp.eq.s32.totalorder %v1992, 0
    %v1995 = vxor.u32 %v1989, 2147483648
    %v1996 = vsel %vm1994, %v1988, %v1995
    %vm1997 = vcmp.eq.s32.totalorder %v1992, 2
    %v1998 = vxor.u32 %v1988, 2147483648
    %v1999 = vsel %vm1997, %v1998, %v1989
    %v2000 = vsel %vm1993, %v1996, %v1999
    %v2001 = vsel %vm1990, nan, %v2000
    %v2002 = vand.u32 2147483647, %v1639
    %vm2003 = vcmp.le.f32.partialorder %v2002, 0.7853982
    %vm2004 = vcmp.lt.s32.totalorder %v1639, 0
    %v2005 = vand.u32 %v1639, 2139095040
    %v2006 = vshrl.u32 %v2005, 23
    %v2007 = vsub.s32 %v2006, 127
    %v2008 = vand.u32 2147483647, %v1639
    %v2009 = vand.u32 %v2008, 8388607
    %v2010 = vor.u32 %v2009, 8388608
    %v2011 = vsub.s32 0, %v2010
    %v2012 = vadd.s32 %v2007, 1
    %vm2013 = vcmp.gt.s32.totalorder %v2012, 0
    %v2014 = vsel %vm2013, %v2012, 0
    %v2015 = vshrl.u32 %v2014, 5
    %v2016 = vand.u32 %v2014, 31
    %v2017 = vsub.s32 32, %v2016
    %v2018 = vshrl.u32 683565275, %v2017
    %v2019 = vshll.u32 683565275, %v2016
    %v2020 = vshrl.u32 2475754826, %v2017
    %v2021 = vor.u32 %v2019, %v2020
    %v2022 = vshll.u32 2475754826, %v2016
    %v2023 = vshrl.u32 2131351028, %v2017
    %v2024 = vor.u32 %v2022, %v2023
    %v2025 = vshll.u32 2131351028, %v2016
    %v2026 = vshrl.u32 2102212464, %v2017
    %v2027 = vor.u32 %v2025, %v2026
    %v2028 = vshll.u32 2102212464, %v2016
    %v2029 = vshrl.u32 920167782, %v2017
    %v2030 = vor.u32 %v2028, %v2029
    %v2031 = vshll.u32 920167782, %v2016
    %v2032 = vshrl.u32 1326507024, %v2017
    %v2033 = vor.u32 %v2031, %v2032
    %vm2034 = vcmp.lt.s32.totalorder %v2015, 1
    %vm2035 = vcmp.lt.s32.totalorder %v2015, 2
    %vm2036 = vcmp.lt.s32.totalorder %v2015, 3
    %vm2037 = vcmp.lt.s32.totalorder %v2015, 4
    %v2038 = vsel %vm2034, %v2018, %v2021
    %v2039 = vsel %vm2037, %v2027, 2102212464
    %v2040 = vsel %vm2036, %v2024, %v2039
    %v2041 = vsel %vm2035, %v2038, %v2040
    %v2042 = vsel %vm2034, %v2021, %v2024
    %v2043 = vsel %vm2037, %v2030, 920167782
    %v2044 = vsel %vm2036, %v2027, %v2043
    %v2045 = vsel %vm2035, %v2042, %v2044
    %v2046 = vsel %vm2034, %v2024, %v2027
    %v2047 = vsel %vm2037, %v2033, 1326507024
    %v2048 = vsel %vm2036, %v2030, %v2047
    %v2049 = vsel %vm2035, %v2046, %v2048
    %v2050 = vshll.u32 %v2010, 8
    %v2051 = vmul.u32.u64.compose %v2050, %v2049
    %v2052 = vextract.low.u32 %v2051
    %v2053 = vextract.high.u32 %v2051
    %v2054 = vmul.u32.u64.compose %v2050, %v2045
    %v2055 = vextract.low.u32 %v2054
    %v2056 = vextract.high.u32 %v2054
    %v2057 = vmul.u32 %v2050, %v2041
    %v2058 = vadd.s32 %v2053, %v2055
    %vm2059 = vc.u32 %v2053, %v2055
    %v2060 = vadd.s32 %v2056, 1
    %v2061 = vsel %vm2059, %v2060, %v2056
    %v2062 = vadd.s32 %v2057, %v2061
    %v2063 = vadd.s32 %v2062, 536870912
    %v2064 = vshrl.u32 %v2063, 30
    %v2065 = vshll.u32 %v2064, 30
    %v2066 = vsub.s32 %v2062, %v2065
    %vm2067 = vcmp.lt.s32.totalorder %v2066, 0
    %v2068 = vsub.s32 0, %v2066
    %v2069 = vsel %vm2067, %v2068, %v2066
    %v2070 = vclz %v2069
    %v2071 = vsub.s32 %v2070, 2
    %vm2072 = vcmp.gt.s32.totalorder 0, %v2071
    %v2073 = vsel %vm2072, 0, %v2071
    %v2074 = vsub.s32 32, %v2073
    %v2075 = vshll.u32 %v2066, %v2073
    %v2076 = vshrl.u32 %v2058, %v2074
    %v2077 = vor.u32 %v2075, %v2076
    %v2078 = vsub.s32 4294967266, %v2073
    %v2079 = vadd.s32 %v2078, 127
    %v2080 = vshll.u32 %v2079, 23
    %v2081 = vor.u32 4788187, %v2080
    %v2082 = vand.u32 2147483647, %v2081
    %v2084 = vcvt.s32.f32 %v2077
    %v2085 = vmul.f32 %v2084, %v2082
    %v2086 = vxor.u32 %v2085, 2147483648
    %v2087 = vsel %vm2004, %v2086, %v2085
    %v2088 = vsub.s32 4, %v2064
    %v2089 = vsel %vm2004, %v2088, %v2064
    %v2090 = vsel %vm2003, %v1639, %v2087
    %v2091 = vsel %vm2003, 0, %v2089
    %v2092 = vcosq.f32.pop %v2090
    %v2093 = vsinq.f32.pop %v2090
    %vm2094 = vweird.f32 %v1639
    %v2095 = vadd.s32 %v2091, 3
    %v2096 = vand.u32 %v2095, 3
    %vm2097 = vcmp.lt.s32.totalorder %v2096, 2
    %vm2098 = vcmp.eq.s32.totalorder %v2096, 0
    %v2099 = vxor.u32 %v2093, 2147483648
    %v2100 = vsel %vm2098, %v2092, %v2099
    %vm2101 = vcmp.eq.s32.totalorder %v2096, 2
    %v2102 = vxor.u32 %v2092, 2147483648
    %v2103 = vsel %vm2101, %v2102, %v2093
    %v2104 = vsel %vm2097, %v2100, %v2103
    %v2105 = vsel %vm2094, nan, %v2104
    %v2106 = vand.u32 2147483647, %v836
    %vm2107 = vcmp.le.f32.partialorder %v2106, 0.7853982
    %vm2108 = vcmp.lt.s32.totalorder %v836, 0
    %v2109 = vand.u32 %v836, 2139095040
    %v2110 = vshrl.u32 %v2109, 23
    %v2111 = vsub.s32 %v2110, 127
    %v2112 = vand.u32 2147483647, %v836
    %v2113 = vand.u32 %v2112, 8388607
    %v2114 = vor.u32 %v2113, 8388608
    %v2115 = vsub.s32 0, %v2114
    %v2116 = vadd.s32 %v2111, 1
    %vm2117 = vcmp.gt.s32.totalorder %v2116, 0
    %v2118 = vsel %vm2117, %v2116, 0
    %v2119 = vshrl.u32 %v2118, 5
    %v2120 = vand.u32 %v2118, 31
    %v2121 = vsub.s32 32, %v2120
    %v2122 = vshrl.u32 683565275, %v2121
    %v2123 = vshll.u32 683565275, %v2120
    %v2124 = vshrl.u32 2475754826, %v2121
    %v2125 = vor.u32 %v2123, %v2124
    %v2126 = vshll.u32 2475754826, %v2120
    %v2127 = vshrl.u32 2131351028, %v2121
    %v2128 = vor.u32 %v2126, %v2127
    %v2129 = vshll.u32 2131351028, %v2120
    %v2130 = vshrl.u32 2102212464, %v2121
    %v2131 = vor.u32 %v2129, %v2130
    %v2132 = vshll.u32 2102212464, %v2120
    %v2133 = vshrl.u32 920167782, %v2121
    %v2134 = vor.u32 %v2132, %v2133
    %v2135 = vshll.u32 920167782, %v2120
    %v2136 = vshrl.u32 1326507024, %v2121
    %v2137 = vor.u32 %v2135, %v2136
    %vm2138 = vcmp.lt.s32.totalorder %v2119, 1
    %vm2139 = vcmp.lt.s32.totalorder %v2119, 2
    %vm2140 = vcmp.lt.s32.totalorder %v2119, 3
    %vm2141 = vcmp.lt.s32.totalorder %v2119, 4
    %v2142 = vsel %vm2138, %v2122, %v2125
    %v2143 = vsel %vm2141, %v2131, 2102212464
    %v2144 = vsel %vm2140, %v2128, %v2143
    %v2145 = vsel %vm2139, %v2142, %v2144
    %v2146 = vsel %vm2138, %v2125, %v2128
    %v2147 = vsel %vm2141, %v2134, 920167782
    %v2148 = vsel %vm2140, %v2131, %v2147
    %v2149 = vsel %vm2139, %v2146, %v2148
    %v2150 = vsel %vm2138, %v2128, %v2131
    %v2151 = vsel %vm2141, %v2137, 1326507024
    %v2152 = vsel %vm2140, %v2134, %v2151
    %v2153 = vsel %vm2139, %v2150, %v2152
    %v2154 = vshll.u32 %v2114, 8
    %v2155 = vmul.u32.u64.compose %v2154, %v2153
    %v2156 = vextract.low.u32 %v2155
    %v2157 = vextract.high.u32 %v2155
    %v2158 = vmul.u32.u64.compose %v2154, %v2149
    %v2159 = vextract.low.u32 %v2158
    %v2160 = vextract.high.u32 %v2158
    %v2161 = vmul.u32 %v2154, %v2145
    %v2162 = vadd.s32 %v2157, %v2159
    %vm2163 = vc.u32 %v2157, %v2159
    %v2164 = vadd.s32 %v2160, 1
    %v2165 = vsel %vm2163, %v2164, %v2160
    %v2166 = vadd.s32 %v2161, %v2165
    %v2167 = vadd.s32 %v2166, 536870912
    %v2168 = vshrl.u32 %v2167, 30
    %v2169 = vshll.u32 %v2168, 30
    %v2170 = vsub.s32 %v2166, %v2169
    %vm2171 = vcmp.lt.s32.totalorder %v2170, 0
    %v2172 = vsub.s32 0, %v2170
    %v2173 = vsel %vm2171, %v2172, %v2170
    %v2174 = vclz %v2173
    %v2175 = vsub.s32 %v2174, 2
    %vm2176 = vcmp.gt.s32.totalorder 0, %v2175
    %v2177 = vsel %vm2176, 0, %v2175
    %v2178 = vsub.s32 32, %v2177
    %v2179 = vshll.u32 %v2170, %v2177
    %v2180 = vshrl.u32 %v2162, %v2178
    %v2181 = vor.u32 %v2179, %v2180
    %v2182 = vsub.s32 4294967266, %v2177
    %v2183 = vadd.s32 %v2182, 127
    %v2184 = vshll.u32 %v2183, 23
    %v2185 = vor.u32 4788187, %v2184
    %v2186 = vand.u32 2147483647, %v2185
    %v2188 = vcvt.s32.f32 %v2181
    %v2189 = vmul.f32 %v2188, %v2186
    %v2190 = vxor.u32 %v2189, 2147483648
    %v2191 = vsel %vm2108, %v2190, %v2189
    %v2192 = vsub.s32 4, %v2168
    %v2193 = vsel %vm2108, %v2192, %v2168
    %v2194 = vsel %vm2107, %v836, %v2191
    %v2195 = vsel %vm2107, 0, %v2193
    %v2196 = vcosq.f32.pop %v2194
    %v2197 = vsinq.f32.pop %v2194
    %vm2198 = vweird.f32 %v836
    %v2199 = vadd.s32 %v2195, 3
    %v2200 = vand.u32 %v2199, 3
    %vm2201 = vcmp.lt.s32.totalorder %v2200, 2
    %vm2202 = vcmp.eq.s32.totalorder %v2200, 0
    %v2203 = vxor.u32 %v2197, 2147483648
    %v2204 = vsel %vm2202, %v2196, %v2203
    %vm2205 = vcmp.eq.s32.totalorder %v2200, 2
    %v2206 = vxor.u32 %v2196, 2147483648
    %v2207 = vsel %vm2205, %v2206, %v2197
    %v2208 = vsel %vm2201, %v2204, %v2207
    %v2209 = vsel %vm2198, nan, %v2208
    %v2210 = vand.u32 2147483647, %v838
    %vm2211 = vcmp.le.f32.partialorder %v2210, 0.7853982
    %vm2212 = vcmp.lt.s32.totalorder %v838, 0
    %v2213 = vand.u32 %v838, 2139095040
    %v2214 = vshrl.u32 %v2213, 23
    %v2215 = vsub.s32 %v2214, 127
    %v2216 = vand.u32 2147483647, %v838
    %v2217 = vand.u32 %v2216, 8388607
    %v2218 = vor.u32 %v2217, 8388608
    %v2219 = vsub.s32 0, %v2218
    %v2220 = vadd.s32 %v2215, 1
    %vm2221 = vcmp.gt.s32.totalorder %v2220, 0
    %v2222 = vsel %vm2221, %v2220, 0
    %v2223 = vshrl.u32 %v2222, 5
    %v2224 = vand.u32 %v2222, 31
    %v2225 = vsub.s32 32, %v2224
    %v2226 = vshrl.u32 683565275, %v2225
    %v2227 = vshll.u32 683565275, %v2224
    %v2228 = vshrl.u32 2475754826, %v2225
    %v2229 = vor.u32 %v2227, %v2228
    %v2230 = vshll.u32 2475754826, %v2224
    %v2231 = vshrl.u32 2131351028, %v2225
    %v2232 = vor.u32 %v2230, %v2231
    %v2233 = vshll.u32 2131351028, %v2224
    %v2234 = vshrl.u32 2102212464, %v2225
    %v2235 = vor.u32 %v2233, %v2234
    %v2236 = vshll.u32 2102212464, %v2224
    %v2237 = vshrl.u32 920167782, %v2225
    %v2238 = vor.u32 %v2236, %v2237
    %v2239 = vshll.u32 920167782, %v2224
    %v2240 = vshrl.u32 1326507024, %v2225
    %v2241 = vor.u32 %v2239, %v2240
    %vm2242 = vcmp.lt.s32.totalorder %v2223, 1
    %vm2243 = vcmp.lt.s32.totalorder %v2223, 2
    %vm2244 = vcmp.lt.s32.totalorder %v2223, 3
    %vm2245 = vcmp.lt.s32.totalorder %v2223, 4
    %v2246 = vsel %vm2242, %v2226, %v2229
    %v2247 = vsel %vm2245, %v2235, 2102212464
    %v2248 = vsel %vm2244, %v2232, %v2247
    %v2249 = vsel %vm2243, %v2246, %v2248
    %v2250 = vsel %vm2242, %v2229, %v2232
    %v2251 = vsel %vm2245, %v2238, 920167782
    %v2252 = vsel %vm2244, %v2235, %v2251
    %v2253 = vsel %vm2243, %v2250, %v2252
    %v2254 = vsel %vm2242, %v2232, %v2235
    %v2255 = vsel %vm2245, %v2241, 1326507024
    %v2256 = vsel %vm2244, %v2238, %v2255
    %v2257 = vsel %vm2243, %v2254, %v2256
    %v2258 = vshll.u32 %v2218, 8
    %v2259 = vmul.u32.u64.compose %v2258, %v2257
    %v2260 = vextract.low.u32 %v2259
    %v2261 = vextract.high.u32 %v2259
    %v2262 = vmul.u32.u64.compose %v2258, %v2253
    %v2263 = vextract.low.u32 %v2262
    %v2264 = vextract.high.u32 %v2262
    %v2265 = vmul.u32 %v2258, %v2249
    %v2266 = vadd.s32 %v2261, %v2263
    %vm2267 = vc.u32 %v2261, %v2263
    %v2268 = vadd.s32 %v2264, 1
    %v2269 = vsel %vm2267, %v2268, %v2264
    %v2270 = vadd.s32 %v2265, %v2269
    %v2271 = vadd.s32 %v2270, 536870912
    %v2272 = vshrl.u32 %v2271, 30
    %v2273 = vshll.u32 %v2272, 30
    %v2274 = vsub.s32 %v2270, %v2273
    %vm2275 = vcmp.lt.s32.totalorder %v2274, 0
    %v2276 = vsub.s32 0, %v2274
    %v2277 = vsel %vm2275, %v2276, %v2274
    %v2278 = vclz %v2277
    %v2279 = vsub.s32 %v2278, 2
    %vm2280 = vcmp.gt.s32.totalorder 0, %v2279
    %v2281 = vsel %vm2280, 0, %v2279
    %v2282 = vsub.s32 32, %v2281
    %v2283 = vshll.u32 %v2274, %v2281
    %v2284 = vshrl.u32 %v2266, %v2282
    %v2285 = vor.u32 %v2283, %v2284
    %v2286 = vsub.s32 4294967266, %v2281
    %v2287 = vadd.s32 %v2286, 127
    %v2288 = vshll.u32 %v2287, 23
    %v2289 = vor.u32 4788187, %v2288
    %v2290 = vand.u32 2147483647, %v2289
    %v2292 = vcvt.s32.f32 %v2285
    %v2293 = vmul.f32 %v2292, %v2290
    %v2294 = vxor.u32 %v2293, 2147483648
    %v2295 = vsel %vm2212, %v2294, %v2293
    %v2296 = vsub.s32 4, %v2272
    %v2297 = vsel %vm2212, %v2296, %v2272
    %v2298 = vsel %vm2211, %v838, %v2295
    %v2299 = vsel %vm2211, 0, %v2297
    %v2300 = vcosq.f32.pop %v2298
    %v2301 = vsinq.f32.pop %v2298
    %vm2302 = vweird.f32 %v838
    %v2303 = vadd.s32 %v2299, 3
    %v2304 = vand.u32 %v2303, 3
    %vm2305 = vcmp.lt.s32.totalorder %v2304, 2
    %vm2306 = vcmp.eq.s32.totalorder %v2304, 0
    %v2307 = vxor.u32 %v2301, 2147483648
    %v2308 = vsel %vm2306, %v2300, %v2307
    %vm2309 = vcmp.eq.s32.totalorder %v2304, 2
    %v2310 = vxor.u32 %v2300, 2147483648
    %v2311 = vsel %vm2309, %v2310, %v2301
    %v2312 = vsel %vm2305, %v2308, %v2311
    %v2313 = vsel %vm2302, nan, %v2312
    %v2314 = vand.u32 2147483647, %v1644
    %vm2315 = vcmp.le.f32.partialorder %v2314, 0.7853982
    %vm2316 = vcmp.lt.s32.totalorder %v1644, 0
    %v2317 = vand.u32 %v1644, 2139095040
    %v2318 = vshrl.u32 %v2317, 23
    %v2319 = vsub.s32 %v2318, 127
    %v2320 = vand.u32 2147483647, %v1644
    %v2321 = vand.u32 %v2320, 8388607
    %v2322 = vor.u32 %v2321, 8388608
    %v2323 = vsub.s32 0, %v2322
    %v2324 = vadd.s32 %v2319, 1
    %vm2325 = vcmp.gt.s32.totalorder %v2324, 0
    %v2326 = vsel %vm2325, %v2324, 0
    %v2327 = vshrl.u32 %v2326, 5
    %v2328 = vand.u32 %v2326, 31
    %v2329 = vsub.s32 32, %v2328
    %v2330 = vshrl.u32 683565275, %v2329
    %v2331 = vshll.u32 683565275, %v2328
    %v2332 = vshrl.u32 2475754826, %v2329
    %v2333 = vor.u32 %v2331, %v2332
    %v2334 = vshll.u32 2475754826, %v2328
    %v2335 = vshrl.u32 2131351028, %v2329
    %v2336 = vor.u32 %v2334, %v2335
    %v2337 = vshll.u32 2131351028, %v2328
    %v2338 = vshrl.u32 2102212464, %v2329
    %v2339 = vor.u32 %v2337, %v2338
    %v2340 = vshll.u32 2102212464, %v2328
    %v2341 = vshrl.u32 920167782, %v2329
    %v2342 = vor.u32 %v2340, %v2341
    %v2343 = vshll.u32 920167782, %v2328
    %v2344 = vshrl.u32 1326507024, %v2329
    %v2345 = vor.u32 %v2343, %v2344
    %vm2346 = vcmp.lt.s32.totalorder %v2327, 1
    %vm2347 = vcmp.lt.s32.totalorder %v2327, 2
    %vm2348 = vcmp.lt.s32.totalorder %v2327, 3
    %vm2349 = vcmp.lt.s32.totalorder %v2327, 4
    %v2350 = vsel %vm2346, %v2330, %v2333
    %v2351 = vsel %vm2349, %v2339, 2102212464
    %v2352 = vsel %vm2348, %v2336, %v2351
    %v2353 = vsel %vm2347, %v2350, %v2352
    %v2354 = vsel %vm2346, %v2333, %v2336
    %v2355 = vsel %vm2349, %v2342, 920167782
    %v2356 = vsel %vm2348, %v2339, %v2355
    %v2357 = vsel %vm2347, %v2354, %v2356
    %v2358 = vsel %vm2346, %v2336, %v2339
    %v2359 = vsel %vm2349, %v2345, 1326507024
    %v2360 = vsel %vm2348, %v2342, %v2359
    %v2361 = vsel %vm2347, %v2358, %v2360
    %v2362 = vshll.u32 %v2322, 8
    %v2363 = vmul.u32.u64.compose %v2362, %v2361
    %v2364 = vextract.low.u32 %v2363
    %v2365 = vextract.high.u32 %v2363
    %v2366 = vmul.u32.u64.compose %v2362, %v2357
    %v2367 = vextract.low.u32 %v2366
    %v2368 = vextract.high.u32 %v2366
    %v2369 = vmul.u32 %v2362, %v2353
    %v2370 = vadd.s32 %v2365, %v2367
    %vm2371 = vc.u32 %v2365, %v2367
    %v2372 = vadd.s32 %v2368, 1
    %v2373 = vsel %vm2371, %v2372, %v2368
    %v2374 = vadd.s32 %v2369, %v2373
    %v2375 = vadd.s32 %v2374, 536870912
    %v2376 = vshrl.u32 %v2375, 30
    %v2377 = vshll.u32 %v2376, 30
    %v2378 = vsub.s32 %v2374, %v2377
    %vm2379 = vcmp.lt.s32.totalorder %v2378, 0
    %v2380 = vsub.s32 0, %v2378
    %v2381 = vsel %vm2379, %v2380, %v2378
    %v2382 = vclz %v2381
    %v2383 = vsub.s32 %v2382, 2
    %vm2384 = vcmp.gt.s32.totalorder 0, %v2383
    %v2385 = vsel %vm2384, 0, %v2383
    %v2386 = vsub.s32 32, %v2385
    %v2387 = vshll.u32 %v2378, %v2385
    %v2388 = vshrl.u32 %v2370, %v2386
    %v2389 = vor.u32 %v2387, %v2388
    %v2390 = vsub.s32 4294967266, %v2385
    %v2391 = vadd.s32 %v2390, 127
    %v2392 = vshll.u32 %v2391, 23
    %v2393 = vor.u32 4788187, %v2392
    %v2394 = vand.u32 2147483647, %v2393
    %v2396 = vcvt.s32.f32 %v2389
    %v2397 = vmul.f32 %v2396, %v2394
    %v2398 = vxor.u32 %v2397, 2147483648
    %v2399 = vsel %vm2316, %v2398, %v2397
    %v2400 = vsub.s32 4, %v2376
    %v2401 = vsel %vm2316, %v2400, %v2376
    %v2402 = vsel %vm2315, %v1644, %v2399
    %v2403 = vsel %vm2315, 0, %v2401
    %v2404 = vcosq.f32.pop %v2402
    %v2405 = vsinq.f32.pop %v2402
    %vm2406 = vweird.f32 %v1644
    %v2407 = vadd.s32 %v2403, 3
    %v2408 = vand.u32 %v2407, 3
    %vm2409 = vcmp.lt.s32.totalorder %v2408, 2
    %vm2410 = vcmp.eq.s32.totalorder %v2408, 0
    %v2411 = vxor.u32 %v2405, 2147483648
    %v2412 = vsel %vm2410, %v2404, %v2411
    %vm2413 = vcmp.eq.s32.totalorder %v2408, 2
    %v2414 = vxor.u32 %v2404, 2147483648
    %v2415 = vsel %vm2413, %v2414, %v2405
    %v2416 = vsel %vm2409, %v2412, %v2415
    %v2417 = vsel %vm2406, nan, %v2416
    %v2418 = vand.u32 2147483647, %v1646
    %vm2419 = vcmp.le.f32.partialorder %v2418, 0.7853982
    %vm2420 = vcmp.lt.s32.totalorder %v1646, 0
    %v2421 = vand.u32 %v1646, 2139095040
    %v2422 = vshrl.u32 %v2421, 23
    %v2423 = vsub.s32 %v2422, 127
    %v2424 = vand.u32 2147483647, %v1646
    %v2425 = vand.u32 %v2424, 8388607
    %v2426 = vor.u32 %v2425, 8388608
    %v2427 = vsub.s32 0, %v2426
    %v2428 = vadd.s32 %v2423, 1
    %vm2429 = vcmp.gt.s32.totalorder %v2428, 0
    %v2430 = vsel %vm2429, %v2428, 0
    %v2431 = vshrl.u32 %v2430, 5
    %v2432 = vand.u32 %v2430, 31
    %v2433 = vsub.s32 32, %v2432
    %v2434 = vshrl.u32 683565275, %v2433
    %v2435 = vshll.u32 683565275, %v2432
    %v2436 = vshrl.u32 2475754826, %v2433
    %v2437 = vor.u32 %v2435, %v2436
    %v2438 = vshll.u32 2475754826, %v2432
    %v2439 = vshrl.u32 2131351028, %v2433
    %v2440 = vor.u32 %v2438, %v2439
    %v2441 = vshll.u32 2131351028, %v2432
    %v2442 = vshrl.u32 2102212464, %v2433
    %v2443 = vor.u32 %v2441, %v2442
    %v2444 = vshll.u32 2102212464, %v2432
    %v2445 = vshrl.u32 920167782, %v2433
    %v2446 = vor.u32 %v2444, %v2445
    %v2447 = vshll.u32 920167782, %v2432
    %v2448 = vshrl.u32 1326507024, %v2433
    %v2449 = vor.u32 %v2447, %v2448
    %vm2450 = vcmp.lt.s32.totalorder %v2431, 1
    %vm2451 = vcmp.lt.s32.totalorder %v2431, 2
    %vm2452 = vcmp.lt.s32.totalorder %v2431, 3
    %vm2453 = vcmp.lt.s32.totalorder %v2431, 4
    %v2454 = vsel %vm2450, %v2434, %v2437
    %v2455 = vsel %vm2453, %v2443, 2102212464
    %v2456 = vsel %vm2452, %v2440, %v2455
    %v2457 = vsel %vm2451, %v2454, %v2456
    %v2458 = vsel %vm2450, %v2437, %v2440
    %v2459 = vsel %vm2453, %v2446, 920167782
    %v2460 = vsel %vm2452, %v2443, %v2459
    %v2461 = vsel %vm2451, %v2458, %v2460
    %v2462 = vsel %vm2450, %v2440, %v2443
    %v2463 = vsel %vm2453, %v2449, 1326507024
    %v2464 = vsel %vm2452, %v2446, %v2463
    %v2465 = vsel %vm2451, %v2462, %v2464
    %v2466 = vshll.u32 %v2426, 8
    %v2467 = vmul.u32.u64.compose %v2466, %v2465
    %v2468 = vextract.low.u32 %v2467
    %v2469 = vextract.high.u32 %v2467
    %v2470 = vmul.u32.u64.compose %v2466, %v2461
    %v2471 = vextract.low.u32 %v2470
    %v2472 = vextract.high.u32 %v2470
    %v2473 = vmul.u32 %v2466, %v2457
    %v2474 = vadd.s32 %v2469, %v2471
    %vm2475 = vc.u32 %v2469, %v2471
    %v2476 = vadd.s32 %v2472, 1
    %v2477 = vsel %vm2475, %v2476, %v2472
    %v2478 = vadd.s32 %v2473, %v2477
    %v2479 = vadd.s32 %v2478, 536870912
    %v2480 = vshrl.u32 %v2479, 30
    %v2481 = vshll.u32 %v2480, 30
    %v2482 = vsub.s32 %v2478, %v2481
    %vm2483 = vcmp.lt.s32.totalorder %v2482, 0
    %v2484 = vsub.s32 0, %v2482
    %v2485 = vsel %vm2483, %v2484, %v2482
    %v2486 = vclz %v2485
    %v2487 = vsub.s32 %v2486, 2
    %vm2488 = vcmp.gt.s32.totalorder 0, %v2487
    %v2489 = vsel %vm2488, 0, %v2487
    %v2490 = vsub.s32 32, %v2489
    %v2491 = vshll.u32 %v2482, %v2489
    %v2492 = vshrl.u32 %v2474, %v2490
    %v2493 = vor.u32 %v2491, %v2492
    %v2494 = vsub.s32 4294967266, %v2489
    %v2495 = vadd.s32 %v2494, 127
    %v2496 = vshll.u32 %v2495, 23
    %v2497 = vor.u32 4788187, %v2496
    %v2498 = vand.u32 2147483647, %v2497
    %v2500 = vcvt.s32.f32 %v2493
    %v2501 = vmul.f32 %v2500, %v2498
    %v2502 = vxor.u32 %v2501, 2147483648
    %v2503 = vsel %vm2420, %v2502, %v2501
    %v2504 = vsub.s32 4, %v2480
    %v2505 = vsel %vm2420, %v2504, %v2480
    %v2506 = vsel %vm2419, %v1646, %v2503
    %v2507 = vsel %vm2419, 0, %v2505
    %v2508 = vcosq.f32.pop %v2506
    %v2509 = vsinq.f32.pop %v2506
    %vm2510 = vweird.f32 %v1646
    %v2511 = vadd.s32 %v2507, 3
    %v2512 = vand.u32 %v2511, 3
    %vm2513 = vcmp.lt.s32.totalorder %v2512, 2
    %vm2514 = vcmp.eq.s32.totalorder %v2512, 0
    %v2515 = vxor.u32 %v2509, 2147483648
    %v2516 = vsel %vm2514, %v2508, %v2515
    %vm2517 = vcmp.eq.s32.totalorder %v2512, 2
    %v2518 = vxor.u32 %v2508, 2147483648
    %v2519 = vsel %vm2517, %v2518, %v2509
    %v2520 = vsel %vm2513, %v2516, %v2519
    %v2521 = vsel %vm2510, nan, %v2520
    %v2522 = vand.u32 2147483647, %v843
    %vm2523 = vcmp.le.f32.partialorder %v2522, 0.7853982
    %vm2524 = vcmp.lt.s32.totalorder %v843, 0
    %v2525 = vand.u32 %v843, 2139095040
    %v2526 = vshrl.u32 %v2525, 23
    %v2527 = vsub.s32 %v2526, 127
    %v2528 = vand.u32 2147483647, %v843
    %v2529 = vand.u32 %v2528, 8388607
    %v2530 = vor.u32 %v2529, 8388608
    %v2531 = vsub.s32 0, %v2530
    %v2532 = vadd.s32 %v2527, 1
    %vm2533 = vcmp.gt.s32.totalorder %v2532, 0
    %v2534 = vsel %vm2533, %v2532, 0
    %v2535 = vshrl.u32 %v2534, 5
    %v2536 = vand.u32 %v2534, 31
    %v2537 = vsub.s32 32, %v2536
    %v2538 = vshrl.u32 683565275, %v2537
    %v2539 = vshll.u32 683565275, %v2536
    %v2540 = vshrl.u32 2475754826, %v2537
    %v2541 = vor.u32 %v2539, %v2540
    %v2542 = vshll.u32 2475754826, %v2536
    %v2543 = vshrl.u32 2131351028, %v2537
    %v2544 = vor.u32 %v2542, %v2543
    %v2545 = vshll.u32 2131351028, %v2536
    %v2546 = vshrl.u32 2102212464, %v2537
    %v2547 = vor.u32 %v2545, %v2546
    %v2548 = vshll.u32 2102212464, %v2536
    %v2549 = vshrl.u32 920167782, %v2537
    %v2550 = vor.u32 %v2548, %v2549
    %v2551 = vshll.u32 920167782, %v2536
    %v2552 = vshrl.u32 1326507024, %v2537
    %v2553 = vor.u32 %v2551, %v2552
    %vm2554 = vcmp.lt.s32.totalorder %v2535, 1
    %vm2555 = vcmp.lt.s32.totalorder %v2535, 2
    %vm2556 = vcmp.lt.s32.totalorder %v2535, 3
    %vm2557 = vcmp.lt.s32.totalorder %v2535, 4
    %v2558 = vsel %vm2554, %v2538, %v2541
    %v2559 = vsel %vm2557, %v2547, 2102212464
    %v2560 = vsel %vm2556, %v2544, %v2559
    %v2561 = vsel %vm2555, %v2558, %v2560
    %v2562 = vsel %vm2554, %v2541, %v2544
    %v2563 = vsel %vm2557, %v2550, 920167782
    %v2564 = vsel %vm2556, %v2547, %v2563
    %v2565 = vsel %vm2555, %v2562, %v2564
    %v2566 = vsel %vm2554, %v2544, %v2547
    %v2567 = vsel %vm2557, %v2553, 1326507024
    %v2568 = vsel %vm2556, %v2550, %v2567
    %v2569 = vsel %vm2555, %v2566, %v2568
    %v2570 = vshll.u32 %v2530, 8
    %v2571 = vmul.u32.u64.compose %v2570, %v2569
    %v2572 = vextract.low.u32 %v2571
    %v2573 = vextract.high.u32 %v2571
    %v2574 = vmul.u32.u64.compose %v2570, %v2565
    %v2575 = vextract.low.u32 %v2574
    %v2576 = vextract.high.u32 %v2574
    %v2577 = vmul.u32 %v2570, %v2561
    %v2578 = vadd.s32 %v2573, %v2575
    %vm2579 = vc.u32 %v2573, %v2575
    %v2580 = vadd.s32 %v2576, 1
    %v2581 = vsel %vm2579, %v2580, %v2576
    %v2582 = vadd.s32 %v2577, %v2581
    %v2583 = vadd.s32 %v2582, 536870912
    %v2584 = vshrl.u32 %v2583, 30
    %v2585 = vshll.u32 %v2584, 30
    %v2586 = vsub.s32 %v2582, %v2585
    %vm2587 = vcmp.lt.s32.totalorder %v2586, 0
    %v2588 = vsub.s32 0, %v2586
    %v2589 = vsel %vm2587, %v2588, %v2586
    %v2590 = vclz %v2589
    %v2591 = vsub.s32 %v2590, 2
    %vm2592 = vcmp.gt.s32.totalorder 0, %v2591
    %v2593 = vsel %vm2592, 0, %v2591
    %v2594 = vsub.s32 32, %v2593
    %v2595 = vshll.u32 %v2586, %v2593
    %v2596 = vshrl.u32 %v2578, %v2594
    %v2597 = vor.u32 %v2595, %v2596
    %v2598 = vsub.s32 4294967266, %v2593
    %v2599 = vadd.s32 %v2598, 127
    %v2600 = vshll.u32 %v2599, 23
    %v2601 = vor.u32 4788187, %v2600
    %v2602 = vand.u32 2147483647, %v2601
    %v2604 = vcvt.s32.f32 %v2597
    %v2605 = vmul.f32 %v2604, %v2602
    %v2606 = vxor.u32 %v2605, 2147483648
    %v2607 = vsel %vm2524, %v2606, %v2605
    %v2608 = vsub.s32 4, %v2584
    %v2609 = vsel %vm2524, %v2608, %v2584
    %v2610 = vsel %vm2523, %v843, %v2607
    %v2611 = vsel %vm2523, 0, %v2609
    %v2612 = vcosq.f32.pop %v2610
    %v2613 = vsinq.f32.pop %v2610
    %vm2614 = vweird.f32 %v843
    %v2615 = vadd.s32 %v2611, 3
    %v2616 = vand.u32 %v2615, 3
    %vm2617 = vcmp.lt.s32.totalorder %v2616, 2
    %vm2618 = vcmp.eq.s32.totalorder %v2616, 0
    %v2619 = vxor.u32 %v2613, 2147483648
    %v2620 = vsel %vm2618, %v2612, %v2619
    %vm2621 = vcmp.eq.s32.totalorder %v2616, 2
    %v2622 = vxor.u32 %v2612, 2147483648
    %v2623 = vsel %vm2621, %v2622, %v2613
    %v2624 = vsel %vm2617, %v2620, %v2623
    %v2625 = vsel %vm2614, nan, %v2624
    %v2626 = vand.u32 2147483647, %v845
    %vm2627 = vcmp.le.f32.partialorder %v2626, 0.7853982
    %vm2628 = vcmp.lt.s32.totalorder %v845, 0
    %v2629 = vand.u32 %v845, 2139095040
    %v2630 = vshrl.u32 %v2629, 23
    %v2631 = vsub.s32 %v2630, 127
    %v2632 = vand.u32 2147483647, %v845
    %v2633 = vand.u32 %v2632, 8388607
    %v2634 = vor.u32 %v2633, 8388608
    %v2635 = vsub.s32 0, %v2634
    %v2636 = vadd.s32 %v2631, 1
    %vm2637 = vcmp.gt.s32.totalorder %v2636, 0
    %v2638 = vsel %vm2637, %v2636, 0
    %v2639 = vshrl.u32 %v2638, 5
    %v2640 = vand.u32 %v2638, 31
    %v2641 = vsub.s32 32, %v2640
    %v2642 = vshrl.u32 683565275, %v2641
    %v2643 = vshll.u32 683565275, %v2640
    %v2644 = vshrl.u32 2475754826, %v2641
    %v2645 = vor.u32 %v2643, %v2644
    %v2646 = vshll.u32 2475754826, %v2640
    %v2647 = vshrl.u32 2131351028, %v2641
    %v2648 = vor.u32 %v2646, %v2647
    %v2649 = vshll.u32 2131351028, %v2640
    %v2650 = vshrl.u32 2102212464, %v2641
    %v2651 = vor.u32 %v2649, %v2650
    %v2652 = vshll.u32 2102212464, %v2640
    %v2653 = vshrl.u32 920167782, %v2641
    %v2654 = vor.u32 %v2652, %v2653
    %v2655 = vshll.u32 920167782, %v2640
    %v2656 = vshrl.u32 1326507024, %v2641
    %v2657 = vor.u32 %v2655, %v2656
    %vm2658 = vcmp.lt.s32.totalorder %v2639, 1
    %vm2659 = vcmp.lt.s32.totalorder %v2639, 2
    %vm2660 = vcmp.lt.s32.totalorder %v2639, 3
    %vm2661 = vcmp.lt.s32.totalorder %v2639, 4
    %v2662 = vsel %vm2658, %v2642, %v2645
    %v2663 = vsel %vm2661, %v2651, 2102212464
    %v2664 = vsel %vm2660, %v2648, %v2663
    %v2665 = vsel %vm2659, %v2662, %v2664
    %v2666 = vsel %vm2658, %v2645, %v2648
    %v2667 = vsel %vm2661, %v2654, 920167782
    %v2668 = vsel %vm2660, %v2651, %v2667
    %v2669 = vsel %vm2659, %v2666, %v2668
    %v2670 = vsel %vm2658, %v2648, %v2651
    %v2671 = vsel %vm2661, %v2657, 1326507024
    %v2672 = vsel %vm2660, %v2654, %v2671
    %v2673 = vsel %vm2659, %v2670, %v2672
    %v2674 = vshll.u32 %v2634, 8
    %v2675 = vmul.u32.u64.compose %v2674, %v2673
    %v2676 = vextract.low.u32 %v2675
    %v2677 = vextract.high.u32 %v2675
    %v2678 = vmul.u32.u64.compose %v2674, %v2669
    %v2679 = vextract.low.u32 %v2678
    %v2680 = vextract.high.u32 %v2678
    %v2681 = vmul.u32 %v2674, %v2665
    %v2682 = vadd.s32 %v2677, %v2679
    %vm2683 = vc.u32 %v2677, %v2679
    %v2684 = vadd.s32 %v2680, 1
    %v2685 = vsel %vm2683, %v2684, %v2680
    %v2686 = vadd.s32 %v2681, %v2685
    %v2687 = vadd.s32 %v2686, 536870912
    %v2688 = vshrl.u32 %v2687, 30
    %v2689 = vshll.u32 %v2688, 30
    %v2690 = vsub.s32 %v2686, %v2689
    %vm2691 = vcmp.lt.s32.totalorder %v2690, 0
    %v2692 = vsub.s32 0, %v2690
    %v2693 = vsel %vm2691, %v2692, %v2690
    %v2694 = vclz %v2693
    %v2695 = vsub.s32 %v2694, 2
    %vm2696 = vcmp.gt.s32.totalorder 0, %v2695
    %v2697 = vsel %vm2696, 0, %v2695
    %v2698 = vsub.s32 32, %v2697
    %v2699 = vshll.u32 %v2690, %v2697
    %v2700 = vshrl.u32 %v2682, %v2698
    %v2701 = vor.u32 %v2699, %v2700
    %v2702 = vsub.s32 4294967266, %v2697
    %v2703 = vadd.s32 %v2702, 127
    %v2704 = vshll.u32 %v2703, 23
    %v2705 = vor.u32 4788187, %v2704
    %v2706 = vand.u32 2147483647, %v2705
    %v2708 = vcvt.s32.f32 %v2701
    %v2709 = vmul.f32 %v2708, %v2706
    %v2710 = vxor.u32 %v2709, 2147483648
    %v2711 = vsel %vm2628, %v2710, %v2709
    %v2712 = vsub.s32 4, %v2688
    %v2713 = vsel %vm2628, %v2712, %v2688
    %v2714 = vsel %vm2627, %v845, %v2711
    %v2715 = vsel %vm2627, 0, %v2713
    %v2716 = vcosq.f32.pop %v2714
    %v2717 = vsinq.f32.pop %v2714
    %vm2718 = vweird.f32 %v845
    %v2719 = vadd.s32 %v2715, 3
    %v2720 = vand.u32 %v2719, 3
    %vm2721 = vcmp.lt.s32.totalorder %v2720, 2
    %vm2722 = vcmp.eq.s32.totalorder %v2720, 0
    %v2723 = vxor.u32 %v2717, 2147483648
    %v2724 = vsel %vm2722, %v2716, %v2723
    %vm2725 = vcmp.eq.s32.totalorder %v2720, 2
    %v2726 = vxor.u32 %v2716, 2147483648
    %v2727 = vsel %vm2725, %v2726, %v2717
    %v2728 = vsel %vm2721, %v2724, %v2727
    %v2729 = vsel %vm2718, nan, %v2728
    %v2730 = vand.u32 2147483647, %v1651
    %vm2731 = vcmp.le.f32.partialorder %v2730, 0.7853982
    %vm2732 = vcmp.lt.s32.totalorder %v1651, 0
    %v2733 = vand.u32 %v1651, 2139095040
    %v2734 = vshrl.u32 %v2733, 23
    %v2735 = vsub.s32 %v2734, 127
    %v2736 = vand.u32 2147483647, %v1651
    %v2737 = vand.u32 %v2736, 8388607
    %v2738 = vor.u32 %v2737, 8388608
    %v2739 = vsub.s32 0, %v2738
    %v2740 = vadd.s32 %v2735, 1
    %vm2741 = vcmp.gt.s32.totalorder %v2740, 0
    %v2742 = vsel %vm2741, %v2740, 0
    %v2743 = vshrl.u32 %v2742, 5
    %v2744 = vand.u32 %v2742, 31
    %v2745 = vsub.s32 32, %v2744
    %v2746 = vshrl.u32 683565275, %v2745
    %v2747 = vshll.u32 683565275, %v2744
    %v2748 = vshrl.u32 2475754826, %v2745
    %v2749 = vor.u32 %v2747, %v2748
    %v2750 = vshll.u32 2475754826, %v2744
    %v2751 = vshrl.u32 2131351028, %v2745
    %v2752 = vor.u32 %v2750, %v2751
    %v2753 = vshll.u32 2131351028, %v2744
    %v2754 = vshrl.u32 2102212464, %v2745
    %v2755 = vor.u32 %v2753, %v2754
    %v2756 = vshll.u32 2102212464, %v2744
    %v2757 = vshrl.u32 920167782, %v2745
    %v2758 = vor.u32 %v2756, %v2757
    %v2759 = vshll.u32 920167782, %v2744
    %v2760 = vshrl.u32 1326507024, %v2745
    %v2761 = vor.u32 %v2759, %v2760
    %vm2762 = vcmp.lt.s32.totalorder %v2743, 1
    %vm2763 = vcmp.lt.s32.totalorder %v2743, 2
    %vm2764 = vcmp.lt.s32.totalorder %v2743, 3
    %vm2765 = vcmp.lt.s32.totalorder %v2743, 4
    %v2766 = vsel %vm2762, %v2746, %v2749
    %v2767 = vsel %vm2765, %v2755, 2102212464
    %v2768 = vsel %vm2764, %v2752, %v2767
    %v2769 = vsel %vm2763, %v2766, %v2768
    %v2770 = vsel %vm2762, %v2749, %v2752
    %v2771 = vsel %vm2765, %v2758, 920167782
    %v2772 = vsel %vm2764, %v2755, %v2771
    %v2773 = vsel %vm2763, %v2770, %v2772
    %v2774 = vsel %vm2762, %v2752, %v2755
    %v2775 = vsel %vm2765, %v2761, 1326507024
    %v2776 = vsel %vm2764, %v2758, %v2775
    %v2777 = vsel %vm2763, %v2774, %v2776
    %v2778 = vshll.u32 %v2738, 8
    %v2779 = vmul.u32.u64.compose %v2778, %v2777
    %v2780 = vextract.low.u32 %v2779
    %v2781 = vextract.high.u32 %v2779
    %v2782 = vmul.u32.u64.compose %v2778, %v2773
    %v2783 = vextract.low.u32 %v2782
    %v2784 = vextract.high.u32 %v2782
    %v2785 = vmul.u32 %v2778, %v2769
    %v2786 = vadd.s32 %v2781, %v2783
    %vm2787 = vc.u32 %v2781, %v2783
    %v2788 = vadd.s32 %v2784, 1
    %v2789 = vsel %vm2787, %v2788, %v2784
    %v2790 = vadd.s32 %v2785, %v2789
    %v2791 = vadd.s32 %v2790, 536870912
    %v2792 = vshrl.u32 %v2791, 30
    %v2793 = vshll.u32 %v2792, 30
    %v2794 = vsub.s32 %v2790, %v2793
    %vm2795 = vcmp.lt.s32.totalorder %v2794, 0
    %v2796 = vsub.s32 0, %v2794
    %v2797 = vsel %vm2795, %v2796, %v2794
    %v2798 = vclz %v2797
    %v2799 = vsub.s32 %v2798, 2
    %vm2800 = vcmp.gt.s32.totalorder 0, %v2799
    %v2801 = vsel %vm2800, 0, %v2799
    %v2802 = vsub.s32 32, %v2801
    %v2803 = vshll.u32 %v2794, %v2801
    %v2804 = vshrl.u32 %v2786, %v2802
    %v2805 = vor.u32 %v2803, %v2804
    %v2806 = vsub.s32 4294967266, %v2801
    %v2807 = vadd.s32 %v2806, 127
    %v2808 = vshll.u32 %v2807, 23
    %v2809 = vor.u32 4788187, %v2808
    %v2810 = vand.u32 2147483647, %v2809
    %v2812 = vcvt.s32.f32 %v2805
    %v2813 = vmul.f32 %v2812, %v2810
    %v2814 = vxor.u32 %v2813, 2147483648
    %v2815 = vsel %vm2732, %v2814, %v2813
    %v2816 = vsub.s32 4, %v2792
    %v2817 = vsel %vm2732, %v2816, %v2792
    %v2818 = vsel %vm2731, %v1651, %v2815
    %v2819 = vsel %vm2731, 0, %v2817
    %v2820 = vcosq.f32.pop %v2818
    %v2821 = vsinq.f32.pop %v2818
    %vm2822 = vweird.f32 %v1651
    %v2823 = vadd.s32 %v2819, 3
    %v2824 = vand.u32 %v2823, 3
    %vm2825 = vcmp.lt.s32.totalorder %v2824, 2
    %vm2826 = vcmp.eq.s32.totalorder %v2824, 0
    %v2827 = vxor.u32 %v2821, 2147483648
    %v2828 = vsel %vm2826, %v2820, %v2827
    %vm2829 = vcmp.eq.s32.totalorder %v2824, 2
    %v2830 = vxor.u32 %v2820, 2147483648
    %v2831 = vsel %vm2829, %v2830, %v2821
    %v2832 = vsel %vm2825, %v2828, %v2831
    %v2833 = vsel %vm2822, nan, %v2832
    %v2834 = vand.u32 2147483647, %v1653
    %vm2835 = vcmp.le.f32.partialorder %v2834, 0.7853982
    %vm2836 = vcmp.lt.s32.totalorder %v1653, 0
    %v2837 = vand.u32 %v1653, 2139095040
    %v2838 = vshrl.u32 %v2837, 23
    %v2839 = vsub.s32 %v2838, 127
    %v2840 = vand.u32 2147483647, %v1653
    %v2841 = vand.u32 %v2840, 8388607
    %v2842 = vor.u32 %v2841, 8388608
    %v2843 = vsub.s32 0, %v2842
    %v2844 = vadd.s32 %v2839, 1
    %vm2845 = vcmp.gt.s32.totalorder %v2844, 0
    %v2846 = vsel %vm2845, %v2844, 0
    %v2847 = vshrl.u32 %v2846, 5
    %v2848 = vand.u32 %v2846, 31
    %v2849 = vsub.s32 32, %v2848
    %v2850 = vshrl.u32 683565275, %v2849
    %v2851 = vshll.u32 683565275, %v2848
    %v2852 = vshrl.u32 2475754826, %v2849
    %v2853 = vor.u32 %v2851, %v2852
    %v2854 = vshll.u32 2475754826, %v2848
    %v2855 = vshrl.u32 2131351028, %v2849
    %v2856 = vor.u32 %v2854, %v2855
    %v2857 = vshll.u32 2131351028, %v2848
    %v2858 = vshrl.u32 2102212464, %v2849
    %v2859 = vor.u32 %v2857, %v2858
    %v2860 = vshll.u32 2102212464, %v2848
    %v2861 = vshrl.u32 920167782, %v2849
    %v2862 = vor.u32 %v2860, %v2861
    %v2863 = vshll.u32 920167782, %v2848
    %v2864 = vshrl.u32 1326507024, %v2849
    %v2865 = vor.u32 %v2863, %v2864
    %vm2866 = vcmp.lt.s32.totalorder %v2847, 1
    %vm2867 = vcmp.lt.s32.totalorder %v2847, 2
    %vm2868 = vcmp.lt.s32.totalorder %v2847, 3
    %vm2869 = vcmp.lt.s32.totalorder %v2847, 4
    %v2870 = vsel %vm2866, %v2850, %v2853
    %v2871 = vsel %vm2869, %v2859, 2102212464
    %v2872 = vsel %vm2868, %v2856, %v2871
    %v2873 = vsel %vm2867, %v2870, %v2872
    %v2874 = vsel %vm2866, %v2853, %v2856
    %v2875 = vsel %vm2869, %v2862, 920167782
    %v2876 = vsel %vm2868, %v2859, %v2875
    %v2877 = vsel %vm2867, %v2874, %v2876
    %v2878 = vsel %vm2866, %v2856, %v2859
    %v2879 = vsel %vm2869, %v2865, 1326507024
    %v2880 = vsel %vm2868, %v2862, %v2879
    %v2881 = vsel %vm2867, %v2878, %v2880
    %v2882 = vshll.u32 %v2842, 8
    %v2883 = vmul.u32.u64.compose %v2882, %v2881
    %v2884 = vextract.low.u32 %v2883
    %v2885 = vextract.high.u32 %v2883
    %v2886 = vmul.u32.u64.compose %v2882, %v2877
    %v2887 = vextract.low.u32 %v2886
    %v2888 = vextract.high.u32 %v2886
    %v2889 = vmul.u32 %v2882, %v2873
    %v2890 = vadd.s32 %v2885, %v2887
    %vm2891 = vc.u32 %v2885, %v2887
    %v2892 = vadd.s32 %v2888, 1
    %v2893 = vsel %vm2891, %v2892, %v2888
    %v2894 = vadd.s32 %v2889, %v2893
    %v2895 = vadd.s32 %v2894, 536870912
    %v2896 = vshrl.u32 %v2895, 30
    %v2897 = vshll.u32 %v2896, 30
    %v2898 = vsub.s32 %v2894, %v2897
    %vm2899 = vcmp.lt.s32.totalorder %v2898, 0
    %v2900 = vsub.s32 0, %v2898
    %v2901 = vsel %vm2899, %v2900, %v2898
    %v2902 = vclz %v2901
    %v2903 = vsub.s32 %v2902, 2
    %vm2904 = vcmp.gt.s32.totalorder 0, %v2903
    %v2905 = vsel %vm2904, 0, %v2903
    %v2906 = vsub.s32 32, %v2905
    %v2907 = vshll.u32 %v2898, %v2905
    %v2908 = vshrl.u32 %v2890, %v2906
    %v2909 = vor.u32 %v2907, %v2908
    %v2910 = vsub.s32 4294967266, %v2905
    %v2911 = vadd.s32 %v2910, 127
    %v2912 = vshll.u32 %v2911, 23
    %v2913 = vor.u32 4788187, %v2912
    %v2914 = vand.u32 2147483647, %v2913
    %v2916 = vcvt.s32.f32 %v2909
    %v2917 = vmul.f32 %v2916, %v2914
    %v2918 = vxor.u32 %v2917, 2147483648
    %v2919 = vsel %vm2836, %v2918, %v2917
    %v2920 = vsub.s32 4, %v2896
    %v2921 = vsel %vm2836, %v2920, %v2896
    %v2922 = vsel %vm2835, %v1653, %v2919
    %v2923 = vsel %vm2835, 0, %v2921
    %v2924 = vcosq.f32.pop %v2922
    %v2925 = vsinq.f32.pop %v2922
    %vm2926 = vweird.f32 %v1653
    %v2927 = vadd.s32 %v2923, 3
    %v2928 = vand.u32 %v2927, 3
    %vm2929 = vcmp.lt.s32.totalorder %v2928, 2
    %vm2930 = vcmp.eq.s32.totalorder %v2928, 0
    %v2931 = vxor.u32 %v2925, 2147483648
    %v2932 = vsel %vm2930, %v2924, %v2931
    %vm2933 = vcmp.eq.s32.totalorder %v2928, 2
    %v2934 = vxor.u32 %v2924, 2147483648
    %v2935 = vsel %vm2933, %v2934, %v2925
    %v2936 = vsel %vm2929, %v2932, %v2935
    %v2937 = vsel %vm2926, nan, %v2936
    %v2938 = vand.u32 2147483647, %v850
    %vm2939 = vcmp.le.f32.partialorder %v2938, 0.7853982
    %vm2940 = vcmp.lt.s32.totalorder %v850, 0
    %v2941 = vand.u32 %v850, 2139095040
    %v2942 = vshrl.u32 %v2941, 23
    %v2943 = vsub.s32 %v2942, 127
    %v2944 = vand.u32 2147483647, %v850
    %v2945 = vand.u32 %v2944, 8388607
    %v2946 = vor.u32 %v2945, 8388608
    %v2947 = vsub.s32 0, %v2946
    %v2948 = vadd.s32 %v2943, 1
    %vm2949 = vcmp.gt.s32.totalorder %v2948, 0
    %v2950 = vsel %vm2949, %v2948, 0
    %v2951 = vshrl.u32 %v2950, 5
    %v2952 = vand.u32 %v2950, 31
    %v2953 = vsub.s32 32, %v2952
    %v2954 = vshrl.u32 683565275, %v2953
    %v2955 = vshll.u32 683565275, %v2952
    %v2956 = vshrl.u32 2475754826, %v2953
    %v2957 = vor.u32 %v2955, %v2956
    %v2958 = vshll.u32 2475754826, %v2952
    %v2959 = vshrl.u32 2131351028, %v2953
    %v2960 = vor.u32 %v2958, %v2959
    %v2961 = vshll.u32 2131351028, %v2952
    %v2962 = vshrl.u32 2102212464, %v2953
    %v2963 = vor.u32 %v2961, %v2962
    %v2964 = vshll.u32 2102212464, %v2952
    %v2965 = vshrl.u32 920167782, %v2953
    %v2966 = vor.u32 %v2964, %v2965
    %v2967 = vshll.u32 920167782, %v2952
    %v2968 = vshrl.u32 1326507024, %v2953
    %v2969 = vor.u32 %v2967, %v2968
    %vm2970 = vcmp.lt.s32.totalorder %v2951, 1
    %vm2971 = vcmp.lt.s32.totalorder %v2951, 2
    %vm2972 = vcmp.lt.s32.totalorder %v2951, 3
    %vm2973 = vcmp.lt.s32.totalorder %v2951, 4
    %v2974 = vsel %vm2970, %v2954, %v2957
    %v2975 = vsel %vm2973, %v2963, 2102212464
    %v2976 = vsel %vm2972, %v2960, %v2975
    %v2977 = vsel %vm2971, %v2974, %v2976
    %v2978 = vsel %vm2970, %v2957, %v2960
    %v2979 = vsel %vm2973, %v2966, 920167782
    %v2980 = vsel %vm2972, %v2963, %v2979
    %v2981 = vsel %vm2971, %v2978, %v2980
    %v2982 = vsel %vm2970, %v2960, %v2963
    %v2983 = vsel %vm2973, %v2969, 1326507024
    %v2984 = vsel %vm2972, %v2966, %v2983
    %v2985 = vsel %vm2971, %v2982, %v2984
    %v2986 = vshll.u32 %v2946, 8
    %v2987 = vmul.u32.u64.compose %v2986, %v2985
    %v2988 = vextract.low.u32 %v2987
    %v2989 = vextract.high.u32 %v2987
    %v2990 = vmul.u32.u64.compose %v2986, %v2981
    %v2991 = vextract.low.u32 %v2990
    %v2992 = vextract.high.u32 %v2990
    %v2993 = vmul.u32 %v2986, %v2977
    %v2994 = vadd.s32 %v2989, %v2991
    %vm2995 = vc.u32 %v2989, %v2991
    %v2996 = vadd.s32 %v2992, 1
    %v2997 = vsel %vm2995, %v2996, %v2992
    %v2998 = vadd.s32 %v2993, %v2997
    %v2999 = vadd.s32 %v2998, 536870912
    %v3000 = vshrl.u32 %v2999, 30
    %v3001 = vshll.u32 %v3000, 30
    %v3002 = vsub.s32 %v2998, %v3001
    %vm3003 = vcmp.lt.s32.totalorder %v3002, 0
    %v3004 = vsub.s32 0, %v3002
    %v3005 = vsel %vm3003, %v3004, %v3002
    %v3006 = vclz %v3005
    %v3007 = vsub.s32 %v3006, 2
    %vm3008 = vcmp.gt.s32.totalorder 0, %v3007
    %v3009 = vsel %vm3008, 0, %v3007
    %v3010 = vsub.s32 32, %v3009
    %v3011 = vshll.u32 %v3002, %v3009
    %v3012 = vshrl.u32 %v2994, %v3010
    %v3013 = vor.u32 %v3011, %v3012
    %v3014 = vsub.s32 4294967266, %v3009
    %v3015 = vadd.s32 %v3014, 127
    %v3016 = vshll.u32 %v3015, 23
    %v3017 = vor.u32 4788187, %v3016
    %v3018 = vand.u32 2147483647, %v3017
    %v3020 = vcvt.s32.f32 %v3013
    %v3021 = vmul.f32 %v3020, %v3018
    %v3022 = vxor.u32 %v3021, 2147483648
    %v3023 = vsel %vm2940, %v3022, %v3021
    %v3024 = vsub.s32 4, %v3000
    %v3025 = vsel %vm2940, %v3024, %v3000
    %v3026 = vsel %vm2939, %v850, %v3023
    %v3027 = vsel %vm2939, 0, %v3025
    %v3028 = vcosq.f32.pop %v3026
    %v3029 = vsinq.f32.pop %v3026
    %vm3030 = vweird.f32 %v850
    %v3031 = vadd.s32 %v3027, 3
    %v3032 = vand.u32 %v3031, 3
    %vm3033 = vcmp.lt.s32.totalorder %v3032, 2
    %vm3034 = vcmp.eq.s32.totalorder %v3032, 0
    %v3035 = vxor.u32 %v3029, 2147483648
    %v3036 = vsel %vm3034, %v3028, %v3035
    %vm3037 = vcmp.eq.s32.totalorder %v3032, 2
    %v3038 = vxor.u32 %v3028, 2147483648
    %v3039 = vsel %vm3037, %v3038, %v3029
    %v3040 = vsel %vm3033, %v3036, %v3039
    %v3041 = vsel %vm3030, nan, %v3040
    %v3042 = vand.u32 2147483647, %v852
    %vm3043 = vcmp.le.f32.partialorder %v3042, 0.7853982
    %vm3044 = vcmp.lt.s32.totalorder %v852, 0
    %v3045 = vand.u32 %v852, 2139095040
    %v3046 = vshrl.u32 %v3045, 23
    %v3047 = vsub.s32 %v3046, 127
    %v3048 = vand.u32 2147483647, %v852
    %v3049 = vand.u32 %v3048, 8388607
    %v3050 = vor.u32 %v3049, 8388608
    %v3051 = vsub.s32 0, %v3050
    %v3052 = vadd.s32 %v3047, 1
    %vm3053 = vcmp.gt.s32.totalorder %v3052, 0
    %v3054 = vsel %vm3053, %v3052, 0
    %v3055 = vshrl.u32 %v3054, 5
    %v3056 = vand.u32 %v3054, 31
    %v3057 = vsub.s32 32, %v3056
    %v3058 = vshrl.u32 683565275, %v3057
    %v3059 = vshll.u32 683565275, %v3056
    %v3060 = vshrl.u32 2475754826, %v3057
    %v3061 = vor.u32 %v3059, %v3060
    %v3062 = vshll.u32 2475754826, %v3056
    %v3063 = vshrl.u32 2131351028, %v3057
    %v3064 = vor.u32 %v3062, %v3063
    %v3065 = vshll.u32 2131351028, %v3056
    %v3066 = vshrl.u32 2102212464, %v3057
    %v3067 = vor.u32 %v3065, %v3066
    %v3068 = vshll.u32 2102212464, %v3056
    %v3069 = vshrl.u32 920167782, %v3057
    %v3070 = vor.u32 %v3068, %v3069
    %v3071 = vshll.u32 920167782, %v3056
    %v3072 = vshrl.u32 1326507024, %v3057
    %v3073 = vor.u32 %v3071, %v3072
    %vm3074 = vcmp.lt.s32.totalorder %v3055, 1
    %vm3075 = vcmp.lt.s32.totalorder %v3055, 2
    %vm3076 = vcmp.lt.s32.totalorder %v3055, 3
    %vm3077 = vcmp.lt.s32.totalorder %v3055, 4
    %v3078 = vsel %vm3074, %v3058, %v3061
    %v3079 = vsel %vm3077, %v3067, 2102212464
    %v3080 = vsel %vm3076, %v3064, %v3079
    %v3081 = vsel %vm3075, %v3078, %v3080
    %v3082 = vsel %vm3074, %v3061, %v3064
    %v3083 = vsel %vm3077, %v3070, 920167782
    %v3084 = vsel %vm3076, %v3067, %v3083
    %v3085 = vsel %vm3075, %v3082, %v3084
    %v3086 = vsel %vm3074, %v3064, %v3067
    %v3087 = vsel %vm3077, %v3073, 1326507024
    %v3088 = vsel %vm3076, %v3070, %v3087
    %v3089 = vsel %vm3075, %v3086, %v3088
    %v3090 = vshll.u32 %v3050, 8
    %v3091 = vmul.u32.u64.compose %v3090, %v3089
    %v3092 = vextract.low.u32 %v3091
    %v3093 = vextract.high.u32 %v3091
    %v3094 = vmul.u32.u64.compose %v3090, %v3085
    %v3095 = vextract.low.u32 %v3094
    %v3096 = vextract.high.u32 %v3094
    %v3097 = vmul.u32 %v3090, %v3081
    %v3098 = vadd.s32 %v3093, %v3095
    %vm3099 = vc.u32 %v3093, %v3095
    %v3100 = vadd.s32 %v3096, 1
    %v3101 = vsel %vm3099, %v3100, %v3096
    %v3102 = vadd.s32 %v3097, %v3101
    %v3103 = vadd.s32 %v3102, 536870912
    %v3104 = vshrl.u32 %v3103, 30
    %v3105 = vshll.u32 %v3104, 30
    %v3106 = vsub.s32 %v3102, %v3105
    %vm3107 = vcmp.lt.s32.totalorder %v3106, 0
    %v3108 = vsub.s32 0, %v3106
    %v3109 = vsel %vm3107, %v3108, %v3106
    %v3110 = vclz %v3109
    %v3111 = vsub.s32 %v3110, 2
    %vm3112 = vcmp.gt.s32.totalorder 0, %v3111
    %v3113 = vsel %vm3112, 0, %v3111
    %v3114 = vsub.s32 32, %v3113
    %v3115 = vshll.u32 %v3106, %v3113
    %v3116 = vshrl.u32 %v3098, %v3114
    %v3117 = vor.u32 %v3115, %v3116
    %v3118 = vsub.s32 4294967266, %v3113
    %v3119 = vadd.s32 %v3118, 127
    %v3120 = vshll.u32 %v3119, 23
    %v3121 = vor.u32 4788187, %v3120
    %v3122 = vand.u32 2147483647, %v3121
    %v3124 = vcvt.s32.f32 %v3117
    %v3125 = vmul.f32 %v3124, %v3122
    %v3126 = vxor.u32 %v3125, 2147483648
    %v3127 = vsel %vm3044, %v3126, %v3125
    %v3128 = vsub.s32 4, %v3104
    %v3129 = vsel %vm3044, %v3128, %v3104
    %v3130 = vsel %vm3043, %v852, %v3127
    %v3131 = vsel %vm3043, 0, %v3129
    %v3132 = vcosq.f32.pop %v3130
    %v3133 = vsinq.f32.pop %v3130
    %vm3134 = vweird.f32 %v852
    %v3135 = vadd.s32 %v3131, 3
    %v3136 = vand.u32 %v3135, 3
    %vm3137 = vcmp.lt.s32.totalorder %v3136, 2
    %vm3138 = vcmp.eq.s32.totalorder %v3136, 0
    %v3139 = vxor.u32 %v3133, 2147483648
    %v3140 = vsel %vm3138, %v3132, %v3139
    %vm3141 = vcmp.eq.s32.totalorder %v3136, 2
    %v3142 = vxor.u32 %v3132, 2147483648
    %v3143 = vsel %vm3141, %v3142, %v3133
    %v3144 = vsel %vm3137, %v3140, %v3143
    %v3145 = vsel %vm3134, nan, %v3144
    %v3146 = vand.u32 2147483647, %v1658
    %vm3147 = vcmp.le.f32.partialorder %v3146, 0.7853982
    %vm3148 = vcmp.lt.s32.totalorder %v1658, 0
    %v3149 = vand.u32 %v1658, 2139095040
    %v3150 = vshrl.u32 %v3149, 23
    %v3151 = vsub.s32 %v3150, 127
    %v3152 = vand.u32 2147483647, %v1658
    %v3153 = vand.u32 %v3152, 8388607
    %v3154 = vor.u32 %v3153, 8388608
    %v3155 = vsub.s32 0, %v3154
    %v3156 = vadd.s32 %v3151, 1
    %vm3157 = vcmp.gt.s32.totalorder %v3156, 0
    %v3158 = vsel %vm3157, %v3156, 0
    %v3159 = vshrl.u32 %v3158, 5
    %v3160 = vand.u32 %v3158, 31
    %v3161 = vsub.s32 32, %v3160
    %v3162 = vshrl.u32 683565275, %v3161
    %v3163 = vshll.u32 683565275, %v3160
    %v3164 = vshrl.u32 2475754826, %v3161
    %v3165 = vor.u32 %v3163, %v3164
    %v3166 = vshll.u32 2475754826, %v3160
    %v3167 = vshrl.u32 2131351028, %v3161
    %v3168 = vor.u32 %v3166, %v3167
    %v3169 = vshll.u32 2131351028, %v3160
    %v3170 = vshrl.u32 2102212464, %v3161
    %v3171 = vor.u32 %v3169, %v3170
    %v3172 = vshll.u32 2102212464, %v3160
    %v3173 = vshrl.u32 920167782, %v3161
    %v3174 = vor.u32 %v3172, %v3173
    %v3175 = vshll.u32 920167782, %v3160
    %v3176 = vshrl.u32 1326507024, %v3161
    %v3177 = vor.u32 %v3175, %v3176
    %vm3178 = vcmp.lt.s32.totalorder %v3159, 1
    %vm3179 = vcmp.lt.s32.totalorder %v3159, 2
    %vm3180 = vcmp.lt.s32.totalorder %v3159, 3
    %vm3181 = vcmp.lt.s32.totalorder %v3159, 4
    %v3182 = vsel %vm3178, %v3162, %v3165
    %v3183 = vsel %vm3181, %v3171, 2102212464
    %v3184 = vsel %vm3180, %v3168, %v3183
    %v3185 = vsel %vm3179, %v3182, %v3184
    %v3186 = vsel %vm3178, %v3165, %v3168
    %v3187 = vsel %vm3181, %v3174, 920167782
    %v3188 = vsel %vm3180, %v3171, %v3187
    %v3189 = vsel %vm3179, %v3186, %v3188
    %v3190 = vsel %vm3178, %v3168, %v3171
    %v3191 = vsel %vm3181, %v3177, 1326507024
    %v3192 = vsel %vm3180, %v3174, %v3191
    %v3193 = vsel %vm3179, %v3190, %v3192
    %v3194 = vshll.u32 %v3154, 8
    %v3195 = vmul.u32.u64.compose %v3194, %v3193
    %v3196 = vextract.low.u32 %v3195
    %v3197 = vextract.high.u32 %v3195
    %v3198 = vmul.u32.u64.compose %v3194, %v3189
    %v3199 = vextract.low.u32 %v3198
    %v3200 = vextract.high.u32 %v3198
    %v3201 = vmul.u32 %v3194, %v3185
    %v3202 = vadd.s32 %v3197, %v3199
    %vm3203 = vc.u32 %v3197, %v3199
    %v3204 = vadd.s32 %v3200, 1
    %v3205 = vsel %vm3203, %v3204, %v3200
    %v3206 = vadd.s32 %v3201, %v3205
    %v3207 = vadd.s32 %v3206, 536870912
    %v3208 = vshrl.u32 %v3207, 30
    %v3209 = vshll.u32 %v3208, 30
    %v3210 = vsub.s32 %v3206, %v3209
    %vm3211 = vcmp.lt.s32.totalorder %v3210, 0
    %v3212 = vsub.s32 0, %v3210
    %v3213 = vsel %vm3211, %v3212, %v3210
    %v3214 = vclz %v3213
    %v3215 = vsub.s32 %v3214, 2
    %vm3216 = vcmp.gt.s32.totalorder 0, %v3215
    %v3217 = vsel %vm3216, 0, %v3215
    %v3218 = vsub.s32 32, %v3217
    %v3219 = vshll.u32 %v3210, %v3217
    %v3220 = vshrl.u32 %v3202, %v3218
    %v3221 = vor.u32 %v3219, %v3220
    %v3222 = vsub.s32 4294967266, %v3217
    %v3223 = vadd.s32 %v3222, 127
    %v3224 = vshll.u32 %v3223, 23
    %v3225 = vor.u32 4788187, %v3224
    %v3226 = vand.u32 2147483647, %v3225
    %v3228 = vcvt.s32.f32 %v3221
    %v3229 = vmul.f32 %v3228, %v3226
    %v3230 = vxor.u32 %v3229, 2147483648
    %v3231 = vsel %vm3148, %v3230, %v3229
    %v3232 = vsub.s32 4, %v3208
    %v3233 = vsel %vm3148, %v3232, %v3208
    %v3234 = vsel %vm3147, %v1658, %v3231
    %v3235 = vsel %vm3147, 0, %v3233
    %v3236 = vcosq.f32.pop %v3234
    %v3237 = vsinq.f32.pop %v3234
    %vm3238 = vweird.f32 %v1658
    %v3239 = vadd.s32 %v3235, 3
    %v3240 = vand.u32 %v3239, 3
    %vm3241 = vcmp.lt.s32.totalorder %v3240, 2
    %vm3242 = vcmp.eq.s32.totalorder %v3240, 0
    %v3243 = vxor.u32 %v3237, 2147483648
    %v3244 = vsel %vm3242, %v3236, %v3243
    %vm3245 = vcmp.eq.s32.totalorder %v3240, 2
    %v3246 = vxor.u32 %v3236, 2147483648
    %v3247 = vsel %vm3245, %v3246, %v3237
    %v3248 = vsel %vm3241, %v3244, %v3247
    %v3249 = vsel %vm3238, nan, %v3248
    %v3250 = vand.u32 2147483647, %v1660
    %vm3251 = vcmp.le.f32.partialorder %v3250, 0.7853982
    %vm3252 = vcmp.lt.s32.totalorder %v1660, 0
    %v3253 = vand.u32 %v1660, 2139095040
    %v3254 = vshrl.u32 %v3253, 23
    %v3255 = vsub.s32 %v3254, 127
    %v3256 = vand.u32 2147483647, %v1660
    %v3257 = vand.u32 %v3256, 8388607
    %v3258 = vor.u32 %v3257, 8388608
    %v3259 = vsub.s32 0, %v3258
    %v3260 = vadd.s32 %v3255, 1
    %vm3261 = vcmp.gt.s32.totalorder %v3260, 0
    %v3262 = vsel %vm3261, %v3260, 0
    %v3263 = vshrl.u32 %v3262, 5
    %v3264 = vand.u32 %v3262, 31
    %v3265 = vsub.s32 32, %v3264
    %v3266 = vshrl.u32 683565275, %v3265
    %v3267 = vshll.u32 683565275, %v3264
    %v3268 = vshrl.u32 2475754826, %v3265
    %v3269 = vor.u32 %v3267, %v3268
    %v3270 = vshll.u32 2475754826, %v3264
    %v3271 = vshrl.u32 2131351028, %v3265
    %v3272 = vor.u32 %v3270, %v3271
    %v3273 = vshll.u32 2131351028, %v3264
    %v3274 = vshrl.u32 2102212464, %v3265
    %v3275 = vor.u32 %v3273, %v3274
    %v3276 = vshll.u32 2102212464, %v3264
    %v3277 = vshrl.u32 920167782, %v3265
    %v3278 = vor.u32 %v3276, %v3277
    %v3279 = vshll.u32 920167782, %v3264
    %v3280 = vshrl.u32 1326507024, %v3265
    %v3281 = vor.u32 %v3279, %v3280
    %vm3282 = vcmp.lt.s32.totalorder %v3263, 1
    %vm3283 = vcmp.lt.s32.totalorder %v3263, 2
    %vm3284 = vcmp.lt.s32.totalorder %v3263, 3
    %vm3285 = vcmp.lt.s32.totalorder %v3263, 4
    %v3286 = vsel %vm3282, %v3266, %v3269
    %v3287 = vsel %vm3285, %v3275, 2102212464
    %v3288 = vsel %vm3284, %v3272, %v3287
    %v3289 = vsel %vm3283, %v3286, %v3288
    %v3290 = vsel %vm3282, %v3269, %v3272
    %v3291 = vsel %vm3285, %v3278, 920167782
    %v3292 = vsel %vm3284, %v3275, %v3291
    %v3293 = vsel %vm3283, %v3290, %v3292
    %v3294 = vsel %vm3282, %v3272, %v3275
    %v3295 = vsel %vm3285, %v3281, 1326507024
    %v3296 = vsel %vm3284, %v3278, %v3295
    %v3297 = vsel %vm3283, %v3294, %v3296
    %v3298 = vshll.u32 %v3258, 8
    %v3299 = vmul.u32.u64.compose %v3298, %v3297
    %v3300 = vextract.low.u32 %v3299
    %v3301 = vextract.high.u32 %v3299
    %v3302 = vmul.u32.u64.compose %v3298, %v3293
    %v3303 = vextract.low.u32 %v3302
    %v3304 = vextract.high.u32 %v3302
    %v3305 = vmul.u32 %v3298, %v3289
    %v3306 = vadd.s32 %v3301, %v3303
    %vm3307 = vc.u32 %v3301, %v3303
    %v3308 = vadd.s32 %v3304, 1
    %v3309 = vsel %vm3307, %v3308, %v3304
    %v3310 = vadd.s32 %v3305, %v3309
    %v3311 = vadd.s32 %v3310, 536870912
    %v3312 = vshrl.u32 %v3311, 30
    %v3313 = vshll.u32 %v3312, 30
    %v3314 = vsub.s32 %v3310, %v3313
    %vm3315 = vcmp.lt.s32.totalorder %v3314, 0
    %v3316 = vsub.s32 0, %v3314
    %v3317 = vsel %vm3315, %v3316, %v3314
    %v3318 = vclz %v3317
    %v3319 = vsub.s32 %v3318, 2
    %vm3320 = vcmp.gt.s32.totalorder 0, %v3319
    %v3321 = vsel %vm3320, 0, %v3319
    %v3322 = vsub.s32 32, %v3321
    %v3323 = vshll.u32 %v3314, %v3321
    %v3324 = vshrl.u32 %v3306, %v3322
    %v3325 = vor.u32 %v3323, %v3324
    %v3326 = vsub.s32 4294967266, %v3321
    %v3327 = vadd.s32 %v3326, 127
    %v3328 = vshll.u32 %v3327, 23
    %v3329 = vor.u32 4788187, %v3328
    %v3330 = vand.u32 2147483647, %v3329
    %v3332 = vcvt.s32.f32 %v3325
    %v3333 = vmul.f32 %v3332, %v3330
    %v3334 = vxor.u32 %v3333, 2147483648
    %v3335 = vsel %vm3252, %v3334, %v3333
    %v3336 = vsub.s32 4, %v3312
    %v3337 = vsel %vm3252, %v3336, %v3312
    %v3338 = vsel %vm3251, %v1660, %v3335
    %v3339 = vsel %vm3251, 0, %v3337
    %v3340 = vcosq.f32.pop %v3338
    %v3341 = vsinq.f32.pop %v3338
    %vm3342 = vweird.f32 %v1660
    %v3343 = vadd.s32 %v3339, 3
    %v3344 = vand.u32 %v3343, 3
    %vm3345 = vcmp.lt.s32.totalorder %v3344, 2
    %vm3346 = vcmp.eq.s32.totalorder %v3344, 0
    %v3347 = vxor.u32 %v3341, 2147483648
    %v3348 = vsel %vm3346, %v3340, %v3347
    %vm3349 = vcmp.eq.s32.totalorder %v3344, 2
    %v3350 = vxor.u32 %v3340, 2147483648
    %v3351 = vsel %vm3349, %v3350, %v3341
    %v3352 = vsel %vm3345, %v3348, %v3351
    %v3353 = vsel %vm3342, nan, %v3352
    %v3354 = vand.u32 2147483647, %v857
    %vm3355 = vcmp.le.f32.partialorder %v3354, 0.7853982
    %vm3356 = vcmp.lt.s32.totalorder %v857, 0
    %v3357 = vand.u32 %v857, 2139095040
    %v3358 = vshrl.u32 %v3357, 23
    %v3359 = vsub.s32 %v3358, 127
    %v3360 = vand.u32 2147483647, %v857
    %v3361 = vand.u32 %v3360, 8388607
    %v3362 = vor.u32 %v3361, 8388608
    %v3363 = vsub.s32 0, %v3362
    %v3364 = vadd.s32 %v3359, 1
    %vm3365 = vcmp.gt.s32.totalorder %v3364, 0
    %v3366 = vsel %vm3365, %v3364, 0
    %v3367 = vshrl.u32 %v3366, 5
    %v3368 = vand.u32 %v3366, 31
    %v3369 = vsub.s32 32, %v3368
    %v3370 = vshrl.u32 683565275, %v3369
    %v3371 = vshll.u32 683565275, %v3368
    %v3372 = vshrl.u32 2475754826, %v3369
    %v3373 = vor.u32 %v3371, %v3372
    %v3374 = vshll.u32 2475754826, %v3368
    %v3375 = vshrl.u32 2131351028, %v3369
    %v3376 = vor.u32 %v3374, %v3375
    %v3377 = vshll.u32 2131351028, %v3368
    %v3378 = vshrl.u32 2102212464, %v3369
    %v3379 = vor.u32 %v3377, %v3378
    %v3380 = vshll.u32 2102212464, %v3368
    %v3381 = vshrl.u32 920167782, %v3369
    %v3382 = vor.u32 %v3380, %v3381
    %v3383 = vshll.u32 920167782, %v3368
    %v3384 = vshrl.u32 1326507024, %v3369
    %v3385 = vor.u32 %v3383, %v3384
    %vm3386 = vcmp.lt.s32.totalorder %v3367, 1
    %vm3387 = vcmp.lt.s32.totalorder %v3367, 2
    %vm3388 = vcmp.lt.s32.totalorder %v3367, 3
    %vm3389 = vcmp.lt.s32.totalorder %v3367, 4
    %v3390 = vsel %vm3386, %v3370, %v3373
    %v3391 = vsel %vm3389, %v3379, 2102212464
    %v3392 = vsel %vm3388, %v3376, %v3391
    %v3393 = vsel %vm3387, %v3390, %v3392
    %v3394 = vsel %vm3386, %v3373, %v3376
    %v3395 = vsel %vm3389, %v3382, 920167782
    %v3396 = vsel %vm3388, %v3379, %v3395
    %v3397 = vsel %vm3387, %v3394, %v3396
    %v3398 = vsel %vm3386, %v3376, %v3379
    %v3399 = vsel %vm3389, %v3385, 1326507024
    %v3400 = vsel %vm3388, %v3382, %v3399
    %v3401 = vsel %vm3387, %v3398, %v3400
    %v3402 = vshll.u32 %v3362, 8
    %v3403 = vmul.u32.u64.compose %v3402, %v3401
    %v3404 = vextract.low.u32 %v3403
    %v3405 = vextract.high.u32 %v3403
    %v3406 = vmul.u32.u64.compose %v3402, %v3397
    %v3407 = vextract.low.u32 %v3406
    %v3408 = vextract.high.u32 %v3406
    %v3409 = vmul.u32 %v3402, %v3393
    %v3410 = vadd.s32 %v3405, %v3407
    %vm3411 = vc.u32 %v3405, %v3407
    %v3412 = vadd.s32 %v3408, 1
    %v3413 = vsel %vm3411, %v3412, %v3408
    %v3414 = vadd.s32 %v3409, %v3413
    %v3415 = vadd.s32 %v3414, 536870912
    %v3416 = vshrl.u32 %v3415, 30
    %v3417 = vshll.u32 %v3416, 30
    %v3418 = vsub.s32 %v3414, %v3417
    %vm3419 = vcmp.lt.s32.totalorder %v3418, 0
    %v3420 = vsub.s32 0, %v3418
    %v3421 = vsel %vm3419, %v3420, %v3418
    %v3422 = vclz %v3421
    %v3423 = vsub.s32 %v3422, 2
    %vm3424 = vcmp.gt.s32.totalorder 0, %v3423
    %v3425 = vsel %vm3424, 0, %v3423
    %v3426 = vsub.s32 32, %v3425
    %v3427 = vshll.u32 %v3418, %v3425
    %v3428 = vshrl.u32 %v3410, %v3426
    %v3429 = vor.u32 %v3427, %v3428
    %v3430 = vsub.s32 4294967266, %v3425
    %v3431 = vadd.s32 %v3430, 127
    %v3432 = vshll.u32 %v3431, 23
    %v3433 = vor.u32 4788187, %v3432
    %v3434 = vand.u32 2147483647, %v3433
    %v3436 = vcvt.s32.f32 %v3429
    %v3437 = vmul.f32 %v3436, %v3434
    %v3438 = vxor.u32 %v3437, 2147483648
    %v3439 = vsel %vm3356, %v3438, %v3437
    %v3440 = vsub.s32 4, %v3416
    %v3441 = vsel %vm3356, %v3440, %v3416
    %v3442 = vsel %vm3355, %v857, %v3439
    %v3443 = vsel %vm3355, 0, %v3441
    %v3444 = vcosq.f32.pop %v3442
    %v3445 = vsinq.f32.pop %v3442
    %vm3446 = vweird.f32 %v857
    %v3447 = vadd.s32 %v3443, 3
    %v3448 = vand.u32 %v3447, 3
    %vm3449 = vcmp.lt.s32.totalorder %v3448, 2
    %vm3450 = vcmp.eq.s32.totalorder %v3448, 0
    %v3451 = vxor.u32 %v3445, 2147483648
    %v3452 = vsel %vm3450, %v3444, %v3451
    %vm3453 = vcmp.eq.s32.totalorder %v3448, 2
    %v3454 = vxor.u32 %v3444, 2147483648
    %v3455 = vsel %vm3453, %v3454, %v3445
    %v3456 = vsel %vm3449, %v3452, %v3455
    %v3457 = vsel %vm3446, nan, %v3456
    %v3458 = vand.u32 2147483647, %v859
    %vm3459 = vcmp.le.f32.partialorder %v3458, 0.7853982
    %vm3460 = vcmp.lt.s32.totalorder %v859, 0
    %v3461 = vand.u32 %v859, 2139095040
    %v3462 = vshrl.u32 %v3461, 23
    %v3463 = vsub.s32 %v3462, 127
    %v3464 = vand.u32 2147483647, %v859
    %v3465 = vand.u32 %v3464, 8388607
    %v3466 = vor.u32 %v3465, 8388608
    %v3467 = vsub.s32 0, %v3466
    %v3468 = vadd.s32 %v3463, 1
    %vm3469 = vcmp.gt.s32.totalorder %v3468, 0
    %v3470 = vsel %vm3469, %v3468, 0
    %v3471 = vshrl.u32 %v3470, 5
    %v3472 = vand.u32 %v3470, 31
    %v3473 = vsub.s32 32, %v3472
    %v3474 = vshrl.u32 683565275, %v3473
    %v3475 = vshll.u32 683565275, %v3472
    %v3476 = vshrl.u32 2475754826, %v3473
    %v3477 = vor.u32 %v3475, %v3476
    %v3478 = vshll.u32 2475754826, %v3472
    %v3479 = vshrl.u32 2131351028, %v3473
    %v3480 = vor.u32 %v3478, %v3479
    %v3481 = vshll.u32 2131351028, %v3472
    %v3482 = vshrl.u32 2102212464, %v3473
    %v3483 = vor.u32 %v3481, %v3482
    %v3484 = vshll.u32 2102212464, %v3472
    %v3485 = vshrl.u32 920167782, %v3473
    %v3486 = vor.u32 %v3484, %v3485
    %v3487 = vshll.u32 920167782, %v3472
    %v3488 = vshrl.u32 1326507024, %v3473
    %v3489 = vor.u32 %v3487, %v3488
    %vm3490 = vcmp.lt.s32.totalorder %v3471, 1
    %vm3491 = vcmp.lt.s32.totalorder %v3471, 2
    %vm3492 = vcmp.lt.s32.totalorder %v3471, 3
    %vm3493 = vcmp.lt.s32.totalorder %v3471, 4
    %v3494 = vsel %vm3490, %v3474, %v3477
    %v3495 = vsel %vm3493, %v3483, 2102212464
    %v3496 = vsel %vm3492, %v3480, %v3495
    %v3497 = vsel %vm3491, %v3494, %v3496
    %v3498 = vsel %vm3490, %v3477, %v3480
    %v3499 = vsel %vm3493, %v3486, 920167782
    %v3500 = vsel %vm3492, %v3483, %v3499
    %v3501 = vsel %vm3491, %v3498, %v3500
    %v3502 = vsel %vm3490, %v3480, %v3483
    %v3503 = vsel %vm3493, %v3489, 1326507024
    %v3504 = vsel %vm3492, %v3486, %v3503
    %v3505 = vsel %vm3491, %v3502, %v3504
    %v3506 = vshll.u32 %v3466, 8
    %v3507 = vmul.u32.u64.compose %v3506, %v3505
    %v3508 = vextract.low.u32 %v3507
    %v3509 = vextract.high.u32 %v3507
    %v3510 = vmul.u32.u64.compose %v3506, %v3501
    %v3511 = vextract.low.u32 %v3510
    %v3512 = vextract.high.u32 %v3510
    %v3513 = vmul.u32 %v3506, %v3497
    %v3514 = vadd.s32 %v3509, %v3511
    %vm3515 = vc.u32 %v3509, %v3511
    %v3516 = vadd.s32 %v3512, 1
    %v3517 = vsel %vm3515, %v3516, %v3512
    %v3518 = vadd.s32 %v3513, %v3517
    %v3519 = vadd.s32 %v3518, 536870912
    %v3520 = vshrl.u32 %v3519, 30
    %v3521 = vshll.u32 %v3520, 30
    %v3522 = vsub.s32 %v3518, %v3521
    %vm3523 = vcmp.lt.s32.totalorder %v3522, 0
    %v3524 = vsub.s32 0, %v3522
    %v3525 = vsel %vm3523, %v3524, %v3522
    %v3526 = vclz %v3525
    %v3527 = vsub.s32 %v3526, 2
    %vm3528 = vcmp.gt.s32.totalorder 0, %v3527
    %v3529 = vsel %vm3528, 0, %v3527
    %v3530 = vsub.s32 32, %v3529
    %v3531 = vshll.u32 %v3522, %v3529
    %v3532 = vshrl.u32 %v3514, %v3530
    %v3533 = vor.u32 %v3531, %v3532
    %v3534 = vsub.s32 4294967266, %v3529
    %v3535 = vadd.s32 %v3534, 127
    %v3536 = vshll.u32 %v3535, 23
    %v3537 = vor.u32 4788187, %v3536
    %v3538 = vand.u32 2147483647, %v3537
    %v3540 = vcvt.s32.f32 %v3533
    %v3541 = vmul.f32 %v3540, %v3538
    %v3542 = vxor.u32 %v3541, 2147483648
    %v3543 = vsel %vm3460, %v3542, %v3541
    %v3544 = vsub.s32 4, %v3520
    %v3545 = vsel %vm3460, %v3544, %v3520
    %v3546 = vsel %vm3459, %v859, %v3543
    %v3547 = vsel %vm3459, 0, %v3545
    %v3548 = vcosq.f32.pop %v3546
    %v3549 = vsinq.f32.pop %v3546
    %vm3550 = vweird.f32 %v859
    %v3551 = vadd.s32 %v3547, 3
    %v3552 = vand.u32 %v3551, 3
    %vm3553 = vcmp.lt.s32.totalorder %v3552, 2
    %vm3554 = vcmp.eq.s32.totalorder %v3552, 0
    %v3555 = vxor.u32 %v3549, 2147483648
    %v3556 = vsel %vm3554, %v3548, %v3555
    %vm3557 = vcmp.eq.s32.totalorder %v3552, 2
    %v3558 = vxor.u32 %v3548, 2147483648
    %v3559 = vsel %vm3557, %v3558, %v3549
    %v3560 = vsel %vm3553, %v3556, %v3559
    %v3561 = vsel %vm3550, nan, %v3560
    %v3562 = vand.u32 2147483647, %v1665
    %vm3563 = vcmp.le.f32.partialorder %v3562, 0.7853982
    %vm3564 = vcmp.lt.s32.totalorder %v1665, 0
    %v3565 = vand.u32 %v1665, 2139095040
    %v3566 = vshrl.u32 %v3565, 23
    %v3567 = vsub.s32 %v3566, 127
    %v3568 = vand.u32 2147483647, %v1665
    %v3569 = vand.u32 %v3568, 8388607
    %v3570 = vor.u32 %v3569, 8388608
    %v3571 = vsub.s32 0, %v3570
    %v3572 = vadd.s32 %v3567, 1
    %vm3573 = vcmp.gt.s32.totalorder %v3572, 0
    %v3574 = vsel %vm3573, %v3572, 0
    %v3575 = vshrl.u32 %v3574, 5
    %v3576 = vand.u32 %v3574, 31
    %v3577 = vsub.s32 32, %v3576
    %v3578 = vshrl.u32 683565275, %v3577
    %v3579 = vshll.u32 683565275, %v3576
    %v3580 = vshrl.u32 2475754826, %v3577
    %v3581 = vor.u32 %v3579, %v3580
    %v3582 = vshll.u32 2475754826, %v3576
    %v3583 = vshrl.u32 2131351028, %v3577
    %v3584 = vor.u32 %v3582, %v3583
    %v3585 = vshll.u32 2131351028, %v3576
    %v3586 = vshrl.u32 2102212464, %v3577
    %v3587 = vor.u32 %v3585, %v3586
    %v3588 = vshll.u32 2102212464, %v3576
    %v3589 = vshrl.u32 920167782, %v3577
    %v3590 = vor.u32 %v3588, %v3589
    %v3591 = vshll.u32 920167782, %v3576
    %v3592 = vshrl.u32 1326507024, %v3577
    %v3593 = vor.u32 %v3591, %v3592
    %vm3594 = vcmp.lt.s32.totalorder %v3575, 1
    %vm3595 = vcmp.lt.s32.totalorder %v3575, 2
    %vm3596 = vcmp.lt.s32.totalorder %v3575, 3
    %vm3597 = vcmp.lt.s32.totalorder %v3575, 4
    %v3598 = vsel %vm3594, %v3578, %v3581
    %v3599 = vsel %vm3597, %v3587, 2102212464
    %v3600 = vsel %vm3596, %v3584, %v3599
    %v3601 = vsel %vm3595, %v3598, %v3600
    %v3602 = vsel %vm3594, %v3581, %v3584
    %v3603 = vsel %vm3597, %v3590, 920167782
    %v3604 = vsel %vm3596, %v3587, %v3603
    %v3605 = vsel %vm3595, %v3602, %v3604
    %v3606 = vsel %vm3594, %v3584, %v3587
    %v3607 = vsel %vm3597, %v3593, 1326507024
    %v3608 = vsel %vm3596, %v3590, %v3607
    %v3609 = vsel %vm3595, %v3606, %v3608
    %v3610 = vshll.u32 %v3570, 8
    %v3611 = vmul.u32.u64.compose %v3610, %v3609
    %v3612 = vextract.low.u32 %v3611
    %v3613 = vextract.high.u32 %v3611
    %v3614 = vmul.u32.u64.compose %v3610, %v3605
    %v3615 = vextract.low.u32 %v3614
    %v3616 = vextract.high.u32 %v3614
    %v3617 = vmul.u32 %v3610, %v3601
    %v3618 = vadd.s32 %v3613, %v3615
    %vm3619 = vc.u32 %v3613, %v3615
    %v3620 = vadd.s32 %v3616, 1
    %v3621 = vsel %vm3619, %v3620, %v3616
    %v3622 = vadd.s32 %v3617, %v3621
    %v3623 = vadd.s32 %v3622, 536870912
    %v3624 = vshrl.u32 %v3623, 30
    %v3625 = vshll.u32 %v3624, 30
    %v3626 = vsub.s32 %v3622, %v3625
    %vm3627 = vcmp.lt.s32.totalorder %v3626, 0
    %v3628 = vsub.s32 0, %v3626
    %v3629 = vsel %vm3627, %v3628, %v3626
    %v3630 = vclz %v3629
    %v3631 = vsub.s32 %v3630, 2
    %vm3632 = vcmp.gt.s32.totalorder 0, %v3631
    %v3633 = vsel %vm3632, 0, %v3631
    %v3634 = vsub.s32 32, %v3633
    %v3635 = vshll.u32 %v3626, %v3633
    %v3636 = vshrl.u32 %v3618, %v3634
    %v3637 = vor.u32 %v3635, %v3636
    %v3638 = vsub.s32 4294967266, %v3633
    %v3639 = vadd.s32 %v3638, 127
    %v3640 = vshll.u32 %v3639, 23
    %v3641 = vor.u32 4788187, %v3640
    %v3642 = vand.u32 2147483647, %v3641
    %v3644 = vcvt.s32.f32 %v3637
    %v3645 = vmul.f32 %v3644, %v3642
    %v3646 = vxor.u32 %v3645, 2147483648
    %v3647 = vsel %vm3564, %v3646, %v3645
    %v3648 = vsub.s32 4, %v3624
    %v3649 = vsel %vm3564, %v3648, %v3624
    %v3650 = vsel %vm3563, %v1665, %v3647
    %v3651 = vsel %vm3563, 0, %v3649
    %v3652 = vcosq.f32.pop %v3650
    %v3653 = vsinq.f32.pop %v3650
    %vm3654 = vweird.f32 %v1665
    %v3655 = vadd.s32 %v3651, 3
    %v3656 = vand.u32 %v3655, 3
    %vm3657 = vcmp.lt.s32.totalorder %v3656, 2
    %vm3658 = vcmp.eq.s32.totalorder %v3656, 0
    %v3659 = vxor.u32 %v3653, 2147483648
    %v3660 = vsel %vm3658, %v3652, %v3659
    %vm3661 = vcmp.eq.s32.totalorder %v3656, 2
    %v3662 = vxor.u32 %v3652, 2147483648
    %v3663 = vsel %vm3661, %v3662, %v3653
    %v3664 = vsel %vm3657, %v3660, %v3663
    %v3665 = vsel %vm3654, nan, %v3664
    %v3666 = vand.u32 2147483647, %v1667
    %vm3667 = vcmp.le.f32.partialorder %v3666, 0.7853982
    %vm3668 = vcmp.lt.s32.totalorder %v1667, 0
    %v3669 = vand.u32 %v1667, 2139095040
    %v3670 = vshrl.u32 %v3669, 23
    %v3671 = vsub.s32 %v3670, 127
    %v3672 = vand.u32 2147483647, %v1667
    %v3673 = vand.u32 %v3672, 8388607
    %v3674 = vor.u32 %v3673, 8388608
    %v3675 = vsub.s32 0, %v3674
    %v3676 = vadd.s32 %v3671, 1
    %vm3677 = vcmp.gt.s32.totalorder %v3676, 0
    %v3678 = vsel %vm3677, %v3676, 0
    %v3679 = vshrl.u32 %v3678, 5
    %v3680 = vand.u32 %v3678, 31
    %v3681 = vsub.s32 32, %v3680
    %v3682 = vshrl.u32 683565275, %v3681
    %v3683 = vshll.u32 683565275, %v3680
    %v3684 = vshrl.u32 2475754826, %v3681
    %v3685 = vor.u32 %v3683, %v3684
    %v3686 = vshll.u32 2475754826, %v3680
    %v3687 = vshrl.u32 2131351028, %v3681
    %v3688 = vor.u32 %v3686, %v3687
    %v3689 = vshll.u32 2131351028, %v3680
    %v3690 = vshrl.u32 2102212464, %v3681
    %v3691 = vor.u32 %v3689, %v3690
    %v3692 = vshll.u32 2102212464, %v3680
    %v3693 = vshrl.u32 920167782, %v3681
    %v3694 = vor.u32 %v3692, %v3693
    %v3695 = vshll.u32 920167782, %v3680
    %v3696 = vshrl.u32 1326507024, %v3681
    %v3697 = vor.u32 %v3695, %v3696
    %vm3698 = vcmp.lt.s32.totalorder %v3679, 1
    %vm3699 = vcmp.lt.s32.totalorder %v3679, 2
    %vm3700 = vcmp.lt.s32.totalorder %v3679, 3
    %vm3701 = vcmp.lt.s32.totalorder %v3679, 4
    %v3702 = vsel %vm3698, %v3682, %v3685
    %v3703 = vsel %vm3701, %v3691, 2102212464
    %v3704 = vsel %vm3700, %v3688, %v3703
    %v3705 = vsel %vm3699, %v3702, %v3704
    %v3706 = vsel %vm3698, %v3685, %v3688
    %v3707 = vsel %vm3701, %v3694, 920167782
    %v3708 = vsel %vm3700, %v3691, %v3707
    %v3709 = vsel %vm3699, %v3706, %v3708
    %v3710 = vsel %vm3698, %v3688, %v3691
    %v3711 = vsel %vm3701, %v3697, 1326507024
    %v3712 = vsel %vm3700, %v3694, %v3711
    %v3713 = vsel %vm3699, %v3710, %v3712
    %v3714 = vshll.u32 %v3674, 8
    %v3715 = vmul.u32.u64.compose %v3714, %v3713
    %v3716 = vextract.low.u32 %v3715
    %v3717 = vextract.high.u32 %v3715
    %v3718 = vmul.u32.u64.compose %v3714, %v3709
    %v3719 = vextract.low.u32 %v3718
    %v3720 = vextract.high.u32 %v3718
    %v3721 = vmul.u32 %v3714, %v3705
    %v3722 = vadd.s32 %v3717, %v3719
    %vm3723 = vc.u32 %v3717, %v3719
    %v3724 = vadd.s32 %v3720, 1
    %v3725 = vsel %vm3723, %v3724, %v3720
    %v3726 = vadd.s32 %v3721, %v3725
    %v3727 = vadd.s32 %v3726, 536870912
    %v3728 = vshrl.u32 %v3727, 30
    %v3729 = vshll.u32 %v3728, 30
    %v3730 = vsub.s32 %v3726, %v3729
    %vm3731 = vcmp.lt.s32.totalorder %v3730, 0
    %v3732 = vsub.s32 0, %v3730
    %v3733 = vsel %vm3731, %v3732, %v3730
    %v3734 = vclz %v3733
    %v3735 = vsub.s32 %v3734, 2
    %vm3736 = vcmp.gt.s32.totalorder 0, %v3735
    %v3737 = vsel %vm3736, 0, %v3735
    %v3738 = vsub.s32 32, %v3737
    %v3739 = vshll.u32 %v3730, %v3737
    %v3740 = vshrl.u32 %v3722, %v3738
    %v3741 = vor.u32 %v3739, %v3740
    %v3742 = vsub.s32 4294967266, %v3737
    %v3743 = vadd.s32 %v3742, 127
    %v3744 = vshll.u32 %v3743, 23
    %v3745 = vor.u32 4788187, %v3744
    %v3746 = vand.u32 2147483647, %v3745
    %v3748 = vcvt.s32.f32 %v3741
    %v3749 = vmul.f32 %v3748, %v3746
    %v3750 = vxor.u32 %v3749, 2147483648
    %v3751 = vsel %vm3668, %v3750, %v3749
    %v3752 = vsub.s32 4, %v3728
    %v3753 = vsel %vm3668, %v3752, %v3728
    %v3754 = vsel %vm3667, %v1667, %v3751
    %v3755 = vsel %vm3667, 0, %v3753
    %v3756 = vcosq.f32.pop %v3754
    %v3757 = vsinq.f32.pop %v3754
    %vm3758 = vweird.f32 %v1667
    %v3759 = vadd.s32 %v3755, 3
    %v3760 = vand.u32 %v3759, 3
    %vm3761 = vcmp.lt.s32.totalorder %v3760, 2
    %vm3762 = vcmp.eq.s32.totalorder %v3760, 0
    %v3763 = vxor.u32 %v3757, 2147483648
    %v3764 = vsel %vm3762, %v3756, %v3763
    %vm3765 = vcmp.eq.s32.totalorder %v3760, 2
    %v3766 = vxor.u32 %v3756, 2147483648
    %v3767 = vsel %vm3765, %v3766, %v3757
    %v3768 = vsel %vm3761, %v3764, %v3767
    %v3769 = vsel %vm3758, nan, %v3768
    %v3770 = vand.u32 2147483647, %v864
    %vm3771 = vcmp.le.f32.partialorder %v3770, 0.7853982
    %vm3772 = vcmp.lt.s32.totalorder %v864, 0
    %v3773 = vand.u32 %v864, 2139095040
    %v3774 = vshrl.u32 %v3773, 23
    %v3775 = vsub.s32 %v3774, 127
    %v3776 = vand.u32 2147483647, %v864
    %v3777 = vand.u32 %v3776, 8388607
    %v3778 = vor.u32 %v3777, 8388608
    %v3779 = vsub.s32 0, %v3778
    %v3780 = vadd.s32 %v3775, 1
    %vm3781 = vcmp.gt.s32.totalorder %v3780, 0
    %v3782 = vsel %vm3781, %v3780, 0
    %v3783 = vshrl.u32 %v3782, 5
    %v3784 = vand.u32 %v3782, 31
    %v3785 = vsub.s32 32, %v3784
    %v3786 = vshrl.u32 683565275, %v3785
    %v3787 = vshll.u32 683565275, %v3784
    %v3788 = vshrl.u32 2475754826, %v3785
    %v3789 = vor.u32 %v3787, %v3788
    %v3790 = vshll.u32 2475754826, %v3784
    %v3791 = vshrl.u32 2131351028, %v3785
    %v3792 = vor.u32 %v3790, %v3791
    %v3793 = vshll.u32 2131351028, %v3784
    %v3794 = vshrl.u32 2102212464, %v3785
    %v3795 = vor.u32 %v3793, %v3794
    %v3796 = vshll.u32 2102212464, %v3784
    %v3797 = vshrl.u32 920167782, %v3785
    %v3798 = vor.u32 %v3796, %v3797
    %v3799 = vshll.u32 920167782, %v3784
    %v3800 = vshrl.u32 1326507024, %v3785
    %v3801 = vor.u32 %v3799, %v3800
    %vm3802 = vcmp.lt.s32.totalorder %v3783, 1
    %vm3803 = vcmp.lt.s32.totalorder %v3783, 2
    %vm3804 = vcmp.lt.s32.totalorder %v3783, 3
    %vm3805 = vcmp.lt.s32.totalorder %v3783, 4
    %v3806 = vsel %vm3802, %v3786, %v3789
    %v3807 = vsel %vm3805, %v3795, 2102212464
    %v3808 = vsel %vm3804, %v3792, %v3807
    %v3809 = vsel %vm3803, %v3806, %v3808
    %v3810 = vsel %vm3802, %v3789, %v3792
    %v3811 = vsel %vm3805, %v3798, 920167782
    %v3812 = vsel %vm3804, %v3795, %v3811
    %v3813 = vsel %vm3803, %v3810, %v3812
    %v3814 = vsel %vm3802, %v3792, %v3795
    %v3815 = vsel %vm3805, %v3801, 1326507024
    %v3816 = vsel %vm3804, %v3798, %v3815
    %v3817 = vsel %vm3803, %v3814, %v3816
    %v3818 = vshll.u32 %v3778, 8
    %v3819 = vmul.u32.u64.compose %v3818, %v3817
    %v3820 = vextract.low.u32 %v3819
    %v3821 = vextract.high.u32 %v3819
    %v3822 = vmul.u32.u64.compose %v3818, %v3813
    %v3823 = vextract.low.u32 %v3822
    %v3824 = vextract.high.u32 %v3822
    %v3825 = vmul.u32 %v3818, %v3809
    %v3826 = vadd.s32 %v3821, %v3823
    %vm3827 = vc.u32 %v3821, %v3823
    %v3828 = vadd.s32 %v3824, 1
    %v3829 = vsel %vm3827, %v3828, %v3824
    %v3830 = vadd.s32 %v3825, %v3829
    %v3831 = vadd.s32 %v3830, 536870912
    %v3832 = vshrl.u32 %v3831, 30
    %v3833 = vshll.u32 %v3832, 30
    %v3834 = vsub.s32 %v3830, %v3833
    %vm3835 = vcmp.lt.s32.totalorder %v3834, 0
    %v3836 = vsub.s32 0, %v3834
    %v3837 = vsel %vm3835, %v3836, %v3834
    %v3838 = vclz %v3837
    %v3839 = vsub.s32 %v3838, 2
    %vm3840 = vcmp.gt.s32.totalorder 0, %v3839
    %v3841 = vsel %vm3840, 0, %v3839
    %v3842 = vsub.s32 32, %v3841
    %v3843 = vshll.u32 %v3834, %v3841
    %v3844 = vshrl.u32 %v3826, %v3842
    %v3845 = vor.u32 %v3843, %v3844
    %v3846 = vsub.s32 4294967266, %v3841
    %v3847 = vadd.s32 %v3846, 127
    %v3848 = vshll.u32 %v3847, 23
    %v3849 = vor.u32 4788187, %v3848
    %v3850 = vand.u32 2147483647, %v3849
    %v3852 = vcvt.s32.f32 %v3845
    %v3853 = vmul.f32 %v3852, %v3850
    %v3854 = vxor.u32 %v3853, 2147483648
    %v3855 = vsel %vm3772, %v3854, %v3853
    %v3856 = vsub.s32 4, %v3832
    %v3857 = vsel %vm3772, %v3856, %v3832
    %v3858 = vsel %vm3771, %v864, %v3855
    %v3859 = vsel %vm3771, 0, %v3857
    %v3860 = vcosq.f32.pop %v3858
    %v3861 = vsinq.f32.pop %v3858
    %vm3862 = vweird.f32 %v864
    %v3863 = vadd.s32 %v3859, 3
    %v3864 = vand.u32 %v3863, 3
    %vm3865 = vcmp.lt.s32.totalorder %v3864, 2
    %vm3866 = vcmp.eq.s32.totalorder %v3864, 0
    %v3867 = vxor.u32 %v3861, 2147483648
    %v3868 = vsel %vm3866, %v3860, %v3867
    %vm3869 = vcmp.eq.s32.totalorder %v3864, 2
    %v3870 = vxor.u32 %v3860, 2147483648
    %v3871 = vsel %vm3869, %v3870, %v3861
    %v3872 = vsel %vm3865, %v3868, %v3871
    %v3873 = vsel %vm3862, nan, %v3872
    %v3874 = vand.u32 2147483647, %v866
    %vm3875 = vcmp.le.f32.partialorder %v3874, 0.7853982
    %vm3876 = vcmp.lt.s32.totalorder %v866, 0
    %v3877 = vand.u32 %v866, 2139095040
    %v3878 = vshrl.u32 %v3877, 23
    %v3879 = vsub.s32 %v3878, 127
    %v3880 = vand.u32 2147483647, %v866
    %v3881 = vand.u32 %v3880, 8388607
    %v3882 = vor.u32 %v3881, 8388608
    %v3883 = vsub.s32 0, %v3882
    %v3884 = vadd.s32 %v3879, 1
    %vm3885 = vcmp.gt.s32.totalorder %v3884, 0
    %v3886 = vsel %vm3885, %v3884, 0
    %v3887 = vshrl.u32 %v3886, 5
    %v3888 = vand.u32 %v3886, 31
    %v3889 = vsub.s32 32, %v3888
    %v3890 = vshrl.u32 683565275, %v3889
    %v3891 = vshll.u32 683565275, %v3888
    %v3892 = vshrl.u32 2475754826, %v3889
    %v3893 = vor.u32 %v3891, %v3892
    %v3894 = vshll.u32 2475754826, %v3888
    %v3895 = vshrl.u32 2131351028, %v3889
    %v3896 = vor.u32 %v3894, %v3895
    %v3897 = vshll.u32 2131351028, %v3888
    %v3898 = vshrl.u32 2102212464, %v3889
    %v3899 = vor.u32 %v3897, %v3898
    %v3900 = vshll.u32 2102212464, %v3888
    %v3901 = vshrl.u32 920167782, %v3889
    %v3902 = vor.u32 %v3900, %v3901
    %v3903 = vshll.u32 920167782, %v3888
    %v3904 = vshrl.u32 1326507024, %v3889
    %v3905 = vor.u32 %v3903, %v3904
    %vm3906 = vcmp.lt.s32.totalorder %v3887, 1
    %vm3907 = vcmp.lt.s32.totalorder %v3887, 2
    %vm3908 = vcmp.lt.s32.totalorder %v3887, 3
    %vm3909 = vcmp.lt.s32.totalorder %v3887, 4
    %v3910 = vsel %vm3906, %v3890, %v3893
    %v3911 = vsel %vm3909, %v3899, 2102212464
    %v3912 = vsel %vm3908, %v3896, %v3911
    %v3913 = vsel %vm3907, %v3910, %v3912
    %v3914 = vsel %vm3906, %v3893, %v3896
    %v3915 = vsel %vm3909, %v3902, 920167782
    %v3916 = vsel %vm3908, %v3899, %v3915
    %v3917 = vsel %vm3907, %v3914, %v3916
    %v3918 = vsel %vm3906, %v3896, %v3899
    %v3919 = vsel %vm3909, %v3905, 1326507024
    %v3920 = vsel %vm3908, %v3902, %v3919
    %v3921 = vsel %vm3907, %v3918, %v3920
    %v3922 = vshll.u32 %v3882, 8
    %v3923 = vmul.u32.u64.compose %v3922, %v3921
    %v3924 = vextract.low.u32 %v3923
    %v3925 = vextract.high.u32 %v3923
    %v3926 = vmul.u32.u64.compose %v3922, %v3917
    %v3927 = vextract.low.u32 %v3926
    %v3928 = vextract.high.u32 %v3926
    %v3929 = vmul.u32 %v3922, %v3913
    %v3930 = vadd.s32 %v3925, %v3927
    %vm3931 = vc.u32 %v3925, %v3927
    %v3932 = vadd.s32 %v3928, 1
    %v3933 = vsel %vm3931, %v3932, %v3928
    %v3934 = vadd.s32 %v3929, %v3933
    %v3935 = vadd.s32 %v3934, 536870912
    %v3936 = vshrl.u32 %v3935, 30
    %v3937 = vshll.u32 %v3936, 30
    %v3938 = vsub.s32 %v3934, %v3937
    %vm3939 = vcmp.lt.s32.totalorder %v3938, 0
    %v3940 = vsub.s32 0, %v3938
    %v3941 = vsel %vm3939, %v3940, %v3938
    %v3942 = vclz %v3941
    %v3943 = vsub.s32 %v3942, 2
    %vm3944 = vcmp.gt.s32.totalorder 0, %v3943
    %v3945 = vsel %vm3944, 0, %v3943
    %v3946 = vsub.s32 32, %v3945
    %v3947 = vshll.u32 %v3938, %v3945
    %v3948 = vshrl.u32 %v3930, %v3946
    %v3949 = vor.u32 %v3947, %v3948
    %v3950 = vsub.s32 4294967266, %v3945
    %v3951 = vadd.s32 %v3950, 127
    %v3952 = vshll.u32 %v3951, 23
    %v3953 = vor.u32 4788187, %v3952
    %v3954 = vand.u32 2147483647, %v3953
    %v3956 = vcvt.s32.f32 %v3949
    %v3957 = vmul.f32 %v3956, %v3954
    %v3958 = vxor.u32 %v3957, 2147483648
    %v3959 = vsel %vm3876, %v3958, %v3957
    %v3960 = vsub.s32 4, %v3936
    %v3961 = vsel %vm3876, %v3960, %v3936
    %v3962 = vsel %vm3875, %v866, %v3959
    %v3963 = vsel %vm3875, 0, %v3961
    %v3964 = vcosq.f32.pop %v3962
    %v3965 = vsinq.f32.pop %v3962
    %vm3966 = vweird.f32 %v866
    %v3967 = vadd.s32 %v3963, 3
    %v3968 = vand.u32 %v3967, 3
    %vm3969 = vcmp.lt.s32.totalorder %v3968, 2
    %vm3970 = vcmp.eq.s32.totalorder %v3968, 0
    %v3971 = vxor.u32 %v3965, 2147483648
    %v3972 = vsel %vm3970, %v3964, %v3971
    %vm3973 = vcmp.eq.s32.totalorder %v3968, 2
    %v3974 = vxor.u32 %v3964, 2147483648
    %v3975 = vsel %vm3973, %v3974, %v3965
    %v3976 = vsel %vm3969, %v3972, %v3975
    %v3977 = vsel %vm3966, nan, %v3976
    %v3978 = vand.u32 2147483647, %v1672
    %vm3979 = vcmp.le.f32.partialorder %v3978, 0.7853982
    %vm3980 = vcmp.lt.s32.totalorder %v1672, 0
    %v3981 = vand.u32 %v1672, 2139095040
    %v3982 = vshrl.u32 %v3981, 23
    %v3983 = vsub.s32 %v3982, 127
    %v3984 = vand.u32 2147483647, %v1672
    %v3985 = vand.u32 %v3984, 8388607
    %v3986 = vor.u32 %v3985, 8388608
    %v3987 = vsub.s32 0, %v3986
    %v3988 = vadd.s32 %v3983, 1
    %vm3989 = vcmp.gt.s32.totalorder %v3988, 0
    %v3990 = vsel %vm3989, %v3988, 0
    %v3991 = vshrl.u32 %v3990, 5
    %v3992 = vand.u32 %v3990, 31
    %v3993 = vsub.s32 32, %v3992
    %v3994 = vshrl.u32 683565275, %v3993
    %v3995 = vshll.u32 683565275, %v3992
    %v3996 = vshrl.u32 2475754826, %v3993
    %v3997 = vor.u32 %v3995, %v3996
    %v3998 = vshll.u32 2475754826, %v3992
    %v3999 = vshrl.u32 2131351028, %v3993
    %v4000 = vor.u32 %v3998, %v3999
    %v4001 = vshll.u32 2131351028, %v3992
    %v4002 = vshrl.u32 2102212464, %v3993
    %v4003 = vor.u32 %v4001, %v4002
    %v4004 = vshll.u32 2102212464, %v3992
    %v4005 = vshrl.u32 920167782, %v3993
    %v4006 = vor.u32 %v4004, %v4005
    %v4007 = vshll.u32 920167782, %v3992
    %v4008 = vshrl.u32 1326507024, %v3993
    %v4009 = vor.u32 %v4007, %v4008
    %vm4010 = vcmp.lt.s32.totalorder %v3991, 1
    %vm4011 = vcmp.lt.s32.totalorder %v3991, 2
    %vm4012 = vcmp.lt.s32.totalorder %v3991, 3
    %vm4013 = vcmp.lt.s32.totalorder %v3991, 4
    %v4014 = vsel %vm4010, %v3994, %v3997
    %v4015 = vsel %vm4013, %v4003, 2102212464
    %v4016 = vsel %vm4012, %v4000, %v4015
    %v4017 = vsel %vm4011, %v4014, %v4016
    %v4018 = vsel %vm4010, %v3997, %v4000
    %v4019 = vsel %vm4013, %v4006, 920167782
    %v4020 = vsel %vm4012, %v4003, %v4019
    %v4021 = vsel %vm4011, %v4018, %v4020
    %v4022 = vsel %vm4010, %v4000, %v4003
    %v4023 = vsel %vm4013, %v4009, 1326507024
    %v4024 = vsel %vm4012, %v4006, %v4023
    %v4025 = vsel %vm4011, %v4022, %v4024
    %v4026 = vshll.u32 %v3986, 8
    %v4027 = vmul.u32.u64.compose %v4026, %v4025
    %v4028 = vextract.low.u32 %v4027
    %v4029 = vextract.high.u32 %v4027
    %v4030 = vmul.u32.u64.compose %v4026, %v4021
    %v4031 = vextract.low.u32 %v4030
    %v4032 = vextract.high.u32 %v4030
    %v4033 = vmul.u32 %v4026, %v4017
    %v4034 = vadd.s32 %v4029, %v4031
    %vm4035 = vc.u32 %v4029, %v4031
    %v4036 = vadd.s32 %v4032, 1
    %v4037 = vsel %vm4035, %v4036, %v4032
    %v4038 = vadd.s32 %v4033, %v4037
    %v4039 = vadd.s32 %v4038, 536870912
    %v4040 = vshrl.u32 %v4039, 30
    %v4041 = vshll.u32 %v4040, 30
    %v4042 = vsub.s32 %v4038, %v4041
    %vm4043 = vcmp.lt.s32.totalorder %v4042, 0
    %v4044 = vsub.s32 0, %v4042
    %v4045 = vsel %vm4043, %v4044, %v4042
    %v4046 = vclz %v4045
    %v4047 = vsub.s32 %v4046, 2
    %vm4048 = vcmp.gt.s32.totalorder 0, %v4047
    %v4049 = vsel %vm4048, 0, %v4047
    %v4050 = vsub.s32 32, %v4049
    %v4051 = vshll.u32 %v4042, %v4049
    %v4052 = vshrl.u32 %v4034, %v4050
    %v4053 = vor.u32 %v4051, %v4052
    %v4054 = vsub.s32 4294967266, %v4049
    %v4055 = vadd.s32 %v4054, 127
    %v4056 = vshll.u32 %v4055, 23
    %v4057 = vor.u32 4788187, %v4056
    %v4058 = vand.u32 2147483647, %v4057
    %v4060 = vcvt.s32.f32 %v4053
    %v4061 = vmul.f32 %v4060, %v4058
    %v4062 = vxor.u32 %v4061, 2147483648
    %v4063 = vsel %vm3980, %v4062, %v4061
    %v4064 = vsub.s32 4, %v4040
    %v4065 = vsel %vm3980, %v4064, %v4040
    %v4066 = vsel %vm3979, %v1672, %v4063
    %v4067 = vsel %vm3979, 0, %v4065
    %v4068 = vcosq.f32.pop %v4066
    %v4069 = vsinq.f32.pop %v4066
    %vm4070 = vweird.f32 %v1672
    %v4071 = vadd.s32 %v4067, 3
    %v4072 = vand.u32 %v4071, 3
    %vm4073 = vcmp.lt.s32.totalorder %v4072, 2
    %vm4074 = vcmp.eq.s32.totalorder %v4072, 0
    %v4075 = vxor.u32 %v4069, 2147483648
    %v4076 = vsel %vm4074, %v4068, %v4075
    %vm4077 = vcmp.eq.s32.totalorder %v4072, 2
    %v4078 = vxor.u32 %v4068, 2147483648
    %v4079 = vsel %vm4077, %v4078, %v4069
    %v4080 = vsel %vm4073, %v4076, %v4079
    %v4081 = vsel %vm4070, nan, %v4080
    %v4082 = vand.u32 2147483647, %v1674
    %vm4083 = vcmp.le.f32.partialorder %v4082, 0.7853982
    %vm4084 = vcmp.lt.s32.totalorder %v1674, 0
    %v4085 = vand.u32 %v1674, 2139095040
    %v4086 = vshrl.u32 %v4085, 23
    %v4087 = vsub.s32 %v4086, 127
    %v4088 = vand.u32 2147483647, %v1674
    %v4089 = vand.u32 %v4088, 8388607
    %v4090 = vor.u32 %v4089, 8388608
    %v4091 = vsub.s32 0, %v4090
    %v4092 = vadd.s32 %v4087, 1
    %vm4093 = vcmp.gt.s32.totalorder %v4092, 0
    %v4094 = vsel %vm4093, %v4092, 0
    %v4095 = vshrl.u32 %v4094, 5
    %v4096 = vand.u32 %v4094, 31
    %v4097 = vsub.s32 32, %v4096
    %v4098 = vshrl.u32 683565275, %v4097
    %v4099 = vshll.u32 683565275, %v4096
    %v4100 = vshrl.u32 2475754826, %v4097
    %v4101 = vor.u32 %v4099, %v4100
    %v4102 = vshll.u32 2475754826, %v4096
    %v4103 = vshrl.u32 2131351028, %v4097
    %v4104 = vor.u32 %v4102, %v4103
    %v4105 = vshll.u32 2131351028, %v4096
    %v4106 = vshrl.u32 2102212464, %v4097
    %v4107 = vor.u32 %v4105, %v4106
    %v4108 = vshll.u32 2102212464, %v4096
    %v4109 = vshrl.u32 920167782, %v4097
    %v4110 = vor.u32 %v4108, %v4109
    %v4111 = vshll.u32 920167782, %v4096
    %v4112 = vshrl.u32 1326507024, %v4097
    %v4113 = vor.u32 %v4111, %v4112
    %vm4114 = vcmp.lt.s32.totalorder %v4095, 1
    %vm4115 = vcmp.lt.s32.totalorder %v4095, 2
    %vm4116 = vcmp.lt.s32.totalorder %v4095, 3
    %vm4117 = vcmp.lt.s32.totalorder %v4095, 4
    %v4118 = vsel %vm4114, %v4098, %v4101
    %v4119 = vsel %vm4117, %v4107, 2102212464
    %v4120 = vsel %vm4116, %v4104, %v4119
    %v4121 = vsel %vm4115, %v4118, %v4120
    %v4122 = vsel %vm4114, %v4101, %v4104
    %v4123 = vsel %vm4117, %v4110, 920167782
    %v4124 = vsel %vm4116, %v4107, %v4123
    %v4125 = vsel %vm4115, %v4122, %v4124
    %v4126 = vsel %vm4114, %v4104, %v4107
    %v4127 = vsel %vm4117, %v4113, 1326507024
    %v4128 = vsel %vm4116, %v4110, %v4127
    %v4129 = vsel %vm4115, %v4126, %v4128
    %v4130 = vshll.u32 %v4090, 8
    %v4131 = vmul.u32.u64.compose %v4130, %v4129
    %v4132 = vextract.low.u32 %v4131
    %v4133 = vextract.high.u32 %v4131
    %v4134 = vmul.u32.u64.compose %v4130, %v4125
    %v4135 = vextract.low.u32 %v4134
    %v4136 = vextract.high.u32 %v4134
    %v4137 = vmul.u32 %v4130, %v4121
    %v4138 = vadd.s32 %v4133, %v4135
    %vm4139 = vc.u32 %v4133, %v4135
    %v4140 = vadd.s32 %v4136, 1
    %v4141 = vsel %vm4139, %v4140, %v4136
    %v4142 = vadd.s32 %v4137, %v4141
    %v4143 = vadd.s32 %v4142, 536870912
    %v4144 = vshrl.u32 %v4143, 30
    %v4145 = vshll.u32 %v4144, 30
    %v4146 = vsub.s32 %v4142, %v4145
    %vm4147 = vcmp.lt.s32.totalorder %v4146, 0
    %v4148 = vsub.s32 0, %v4146
    %v4149 = vsel %vm4147, %v4148, %v4146
    %v4150 = vclz %v4149
    %v4151 = vsub.s32 %v4150, 2
    %vm4152 = vcmp.gt.s32.totalorder 0, %v4151
    %v4153 = vsel %vm4152, 0, %v4151
    %v4154 = vsub.s32 32, %v4153
    %v4155 = vshll.u32 %v4146, %v4153
    %v4156 = vshrl.u32 %v4138, %v4154
    %v4157 = vor.u32 %v4155, %v4156
    %v4158 = vsub.s32 4294967266, %v4153
    %v4159 = vadd.s32 %v4158, 127
    %v4160 = vshll.u32 %v4159, 23
    %v4161 = vor.u32 4788187, %v4160
    %v4162 = vand.u32 2147483647, %v4161
    %v4164 = vcvt.s32.f32 %v4157
    %v4165 = vmul.f32 %v4164, %v4162
    %v4166 = vxor.u32 %v4165, 2147483648
    %v4167 = vsel %vm4084, %v4166, %v4165
    %v4168 = vsub.s32 4, %v4144
    %v4169 = vsel %vm4084, %v4168, %v4144
    %v4170 = vsel %vm4083, %v1674, %v4167
    %v4171 = vsel %vm4083, 0, %v4169
    %v4172 = vcosq.f32.pop %v4170
    %v4173 = vsinq.f32.pop %v4170
    %vm4174 = vweird.f32 %v1674
    %v4175 = vadd.s32 %v4171, 3
    %v4176 = vand.u32 %v4175, 3
    %vm4177 = vcmp.lt.s32.totalorder %v4176, 2
    %vm4178 = vcmp.eq.s32.totalorder %v4176, 0
    %v4179 = vxor.u32 %v4173, 2147483648
    %v4180 = vsel %vm4178, %v4172, %v4179
    %vm4181 = vcmp.eq.s32.totalorder %v4176, 2
    %v4182 = vxor.u32 %v4172, 2147483648
    %v4183 = vsel %vm4181, %v4182, %v4173
    %v4184 = vsel %vm4177, %v4180, %v4183
    %v4185 = vsel %vm4174, nan, %v4184
    %v4186 = vand.u32 2147483647, %v871
    %vm4187 = vcmp.le.f32.partialorder %v4186, 0.7853982
    %vm4188 = vcmp.lt.s32.totalorder %v871, 0
    %v4189 = vand.u32 %v871, 2139095040
    %v4190 = vshrl.u32 %v4189, 23
    %v4191 = vsub.s32 %v4190, 127
    %v4192 = vand.u32 2147483647, %v871
    %v4193 = vand.u32 %v4192, 8388607
    %v4194 = vor.u32 %v4193, 8388608
    %v4195 = vsub.s32 0, %v4194
    %v4196 = vadd.s32 %v4191, 1
    %vm4197 = vcmp.gt.s32.totalorder %v4196, 0
    %v4198 = vsel %vm4197, %v4196, 0
    %v4199 = vshrl.u32 %v4198, 5
    %v4200 = vand.u32 %v4198, 31
    %v4201 = vsub.s32 32, %v4200
    %v4202 = vshrl.u32 683565275, %v4201
    %v4203 = vshll.u32 683565275, %v4200
    %v4204 = vshrl.u32 2475754826, %v4201
    %v4205 = vor.u32 %v4203, %v4204
    %v4206 = vshll.u32 2475754826, %v4200
    %v4207 = vshrl.u32 2131351028, %v4201
    %v4208 = vor.u32 %v4206, %v4207
    %v4209 = vshll.u32 2131351028, %v4200
    %v4210 = vshrl.u32 2102212464, %v4201
    %v4211 = vor.u32 %v4209, %v4210
    %v4212 = vshll.u32 2102212464, %v4200
    %v4213 = vshrl.u32 920167782, %v4201
    %v4214 = vor.u32 %v4212, %v4213
    %v4215 = vshll.u32 920167782, %v4200
    %v4216 = vshrl.u32 1326507024, %v4201
    %v4217 = vor.u32 %v4215, %v4216
    %vm4218 = vcmp.lt.s32.totalorder %v4199, 1
    %vm4219 = vcmp.lt.s32.totalorder %v4199, 2
    %vm4220 = vcmp.lt.s32.totalorder %v4199, 3
    %vm4221 = vcmp.lt.s32.totalorder %v4199, 4
    %v4222 = vsel %vm4218, %v4202, %v4205
    %v4223 = vsel %vm4221, %v4211, 2102212464
    %v4224 = vsel %vm4220, %v4208, %v4223
    %v4225 = vsel %vm4219, %v4222, %v4224
    %v4226 = vsel %vm4218, %v4205, %v4208
    %v4227 = vsel %vm4221, %v4214, 920167782
    %v4228 = vsel %vm4220, %v4211, %v4227
    %v4229 = vsel %vm4219, %v4226, %v4228
    %v4230 = vsel %vm4218, %v4208, %v4211
    %v4231 = vsel %vm4221, %v4217, 1326507024
    %v4232 = vsel %vm4220, %v4214, %v4231
    %v4233 = vsel %vm4219, %v4230, %v4232
    %v4234 = vshll.u32 %v4194, 8
    %v4235 = vmul.u32.u64.compose %v4234, %v4233
    %v4236 = vextract.low.u32 %v4235
    %v4237 = vextract.high.u32 %v4235
    %v4238 = vmul.u32.u64.compose %v4234, %v4229
    %v4239 = vextract.low.u32 %v4238
    %v4240 = vextract.high.u32 %v4238
    %v4241 = vmul.u32 %v4234, %v4225
    %v4242 = vadd.s32 %v4237, %v4239
    %vm4243 = vc.u32 %v4237, %v4239
    %v4244 = vadd.s32 %v4240, 1
    %v4245 = vsel %vm4243, %v4244, %v4240
    %v4246 = vadd.s32 %v4241, %v4245
    %v4247 = vadd.s32 %v4246, 536870912
    %v4248 = vshrl.u32 %v4247, 30
    %v4249 = vshll.u32 %v4248, 30
    %v4250 = vsub.s32 %v4246, %v4249
    %vm4251 = vcmp.lt.s32.totalorder %v4250, 0
    %v4252 = vsub.s32 0, %v4250
    %v4253 = vsel %vm4251, %v4252, %v4250
    %v4254 = vclz %v4253
    %v4255 = vsub.s32 %v4254, 2
    %vm4256 = vcmp.gt.s32.totalorder 0, %v4255
    %v4257 = vsel %vm4256, 0, %v4255
    %v4258 = vsub.s32 32, %v4257
    %v4259 = vshll.u32 %v4250, %v4257
    %v4260 = vshrl.u32 %v4242, %v4258
    %v4261 = vor.u32 %v4259, %v4260
    %v4262 = vsub.s32 4294967266, %v4257
    %v4263 = vadd.s32 %v4262, 127
    %v4264 = vshll.u32 %v4263, 23
    %v4265 = vor.u32 4788187, %v4264
    %v4266 = vand.u32 2147483647, %v4265
    %v4268 = vcvt.s32.f32 %v4261
    %v4269 = vmul.f32 %v4268, %v4266
    %v4270 = vxor.u32 %v4269, 2147483648
    %v4271 = vsel %vm4188, %v4270, %v4269
    %v4272 = vsub.s32 4, %v4248
    %v4273 = vsel %vm4188, %v4272, %v4248
    %v4274 = vsel %vm4187, %v871, %v4271
    %v4275 = vsel %vm4187, 0, %v4273
    %v4276 = vcosq.f32.pop %v4274
    %v4277 = vsinq.f32.pop %v4274
    %vm4278 = vweird.f32 %v871
    %v4279 = vadd.s32 %v4275, 3
    %v4280 = vand.u32 %v4279, 3
    %vm4281 = vcmp.lt.s32.totalorder %v4280, 2
    %vm4282 = vcmp.eq.s32.totalorder %v4280, 0
    %v4283 = vxor.u32 %v4277, 2147483648
    %v4284 = vsel %vm4282, %v4276, %v4283
    %vm4285 = vcmp.eq.s32.totalorder %v4280, 2
    %v4286 = vxor.u32 %v4276, 2147483648
    %v4287 = vsel %vm4285, %v4286, %v4277
    %v4288 = vsel %vm4281, %v4284, %v4287
    %v4289 = vsel %vm4278, nan, %v4288
    %v4290 = vand.u32 2147483647, %v873
    %vm4291 = vcmp.le.f32.partialorder %v4290, 0.7853982
    %vm4292 = vcmp.lt.s32.totalorder %v873, 0
    %v4293 = vand.u32 %v873, 2139095040
    %v4294 = vshrl.u32 %v4293, 23
    %v4295 = vsub.s32 %v4294, 127
    %v4296 = vand.u32 2147483647, %v873
    %v4297 = vand.u32 %v4296, 8388607
    %v4298 = vor.u32 %v4297, 8388608
    %v4299 = vsub.s32 0, %v4298
    %v4300 = vadd.s32 %v4295, 1
    %vm4301 = vcmp.gt.s32.totalorder %v4300, 0
    %v4302 = vsel %vm4301, %v4300, 0
    %v4303 = vshrl.u32 %v4302, 5
    %v4304 = vand.u32 %v4302, 31
    %v4305 = vsub.s32 32, %v4304
    %v4306 = vshrl.u32 683565275, %v4305
    %v4307 = vshll.u32 683565275, %v4304
    %v4308 = vshrl.u32 2475754826, %v4305
    %v4309 = vor.u32 %v4307, %v4308
    %v4310 = vshll.u32 2475754826, %v4304
    %v4311 = vshrl.u32 2131351028, %v4305
    %v4312 = vor.u32 %v4310, %v4311
    %v4313 = vshll.u32 2131351028, %v4304
    %v4314 = vshrl.u32 2102212464, %v4305
    %v4315 = vor.u32 %v4313, %v4314
    %v4316 = vshll.u32 2102212464, %v4304
    %v4317 = vshrl.u32 920167782, %v4305
    %v4318 = vor.u32 %v4316, %v4317
    %v4319 = vshll.u32 920167782, %v4304
    %v4320 = vshrl.u32 1326507024, %v4305
    %v4321 = vor.u32 %v4319, %v4320
    %vm4322 = vcmp.lt.s32.totalorder %v4303, 1
    %vm4323 = vcmp.lt.s32.totalorder %v4303, 2
    %vm4324 = vcmp.lt.s32.totalorder %v4303, 3
    %vm4325 = vcmp.lt.s32.totalorder %v4303, 4
    %v4326 = vsel %vm4322, %v4306, %v4309
    %v4327 = vsel %vm4325, %v4315, 2102212464
    %v4328 = vsel %vm4324, %v4312, %v4327
    %v4329 = vsel %vm4323, %v4326, %v4328
    %v4330 = vsel %vm4322, %v4309, %v4312
    %v4331 = vsel %vm4325, %v4318, 920167782
    %v4332 = vsel %vm4324, %v4315, %v4331
    %v4333 = vsel %vm4323, %v4330, %v4332
    %v4334 = vsel %vm4322, %v4312, %v4315
    %v4335 = vsel %vm4325, %v4321, 1326507024
    %v4336 = vsel %vm4324, %v4318, %v4335
    %v4337 = vsel %vm4323, %v4334, %v4336
    %v4338 = vshll.u32 %v4298, 8
    %v4339 = vmul.u32.u64.compose %v4338, %v4337
    %v4340 = vextract.low.u32 %v4339
    %v4341 = vextract.high.u32 %v4339
    %v4342 = vmul.u32.u64.compose %v4338, %v4333
    %v4343 = vextract.low.u32 %v4342
    %v4344 = vextract.high.u32 %v4342
    %v4345 = vmul.u32 %v4338, %v4329
    %v4346 = vadd.s32 %v4341, %v4343
    %vm4347 = vc.u32 %v4341, %v4343
    %v4348 = vadd.s32 %v4344, 1
    %v4349 = vsel %vm4347, %v4348, %v4344
    %v4350 = vadd.s32 %v4345, %v4349
    %v4351 = vadd.s32 %v4350, 536870912
    %v4352 = vshrl.u32 %v4351, 30
    %v4353 = vshll.u32 %v4352, 30
    %v4354 = vsub.s32 %v4350, %v4353
    %vm4355 = vcmp.lt.s32.totalorder %v4354, 0
    %v4356 = vsub.s32 0, %v4354
    %v4357 = vsel %vm4355, %v4356, %v4354
    %v4358 = vclz %v4357
    %v4359 = vsub.s32 %v4358, 2
    %vm4360 = vcmp.gt.s32.totalorder 0, %v4359
    %v4361 = vsel %vm4360, 0, %v4359
    %v4362 = vsub.s32 32, %v4361
    %v4363 = vshll.u32 %v4354, %v4361
    %v4364 = vshrl.u32 %v4346, %v4362
    %v4365 = vor.u32 %v4363, %v4364
    %v4366 = vsub.s32 4294967266, %v4361
    %v4367 = vadd.s32 %v4366, 127
    %v4368 = vshll.u32 %v4367, 23
    %v4369 = vor.u32 4788187, %v4368
    %v4370 = vand.u32 2147483647, %v4369
    %v4372 = vcvt.s32.f32 %v4365
    %v4373 = vmul.f32 %v4372, %v4370
    %v4374 = vxor.u32 %v4373, 2147483648
    %v4375 = vsel %vm4292, %v4374, %v4373
    %v4376 = vsub.s32 4, %v4352
    %v4377 = vsel %vm4292, %v4376, %v4352
    %v4378 = vsel %vm4291, %v873, %v4375
    %v4379 = vsel %vm4291, 0, %v4377
    %v4380 = vcosq.f32.pop %v4378
    %v4381 = vsinq.f32.pop %v4378
    %vm4382 = vweird.f32 %v873
    %v4383 = vadd.s32 %v4379, 3
    %v4384 = vand.u32 %v4383, 3
    %vm4385 = vcmp.lt.s32.totalorder %v4384, 2
    %vm4386 = vcmp.eq.s32.totalorder %v4384, 0
    %v4387 = vxor.u32 %v4381, 2147483648
    %v4388 = vsel %vm4386, %v4380, %v4387
    %vm4389 = vcmp.eq.s32.totalorder %v4384, 2
    %v4390 = vxor.u32 %v4380, 2147483648
    %v4391 = vsel %vm4389, %v4390, %v4381
    %v4392 = vsel %vm4385, %v4388, %v4391
    %v4393 = vsel %vm4382, nan, %v4392
    %v4394 = vand.u32 2147483647, %v1679
    %vm4395 = vcmp.le.f32.partialorder %v4394, 0.7853982
    %vm4396 = vcmp.lt.s32.totalorder %v1679, 0
    %v4397 = vand.u32 %v1679, 2139095040
    %v4398 = vshrl.u32 %v4397, 23
    %v4399 = vsub.s32 %v4398, 127
    %v4400 = vand.u32 2147483647, %v1679
    %v4401 = vand.u32 %v4400, 8388607
    %v4402 = vor.u32 %v4401, 8388608
    %v4403 = vsub.s32 0, %v4402
    %v4404 = vadd.s32 %v4399, 1
    %vm4405 = vcmp.gt.s32.totalorder %v4404, 0
    %v4406 = vsel %vm4405, %v4404, 0
    %v4407 = vshrl.u32 %v4406, 5
    %v4408 = vand.u32 %v4406, 31
    %v4409 = vsub.s32 32, %v4408
    %v4410 = vshrl.u32 683565275, %v4409
    %v4411 = vshll.u32 683565275, %v4408
    %v4412 = vshrl.u32 2475754826, %v4409
    %v4413 = vor.u32 %v4411, %v4412
    %v4414 = vshll.u32 2475754826, %v4408
    %v4415 = vshrl.u32 2131351028, %v4409
    %v4416 = vor.u32 %v4414, %v4415
    %v4417 = vshll.u32 2131351028, %v4408
    %v4418 = vshrl.u32 2102212464, %v4409
    %v4419 = vor.u32 %v4417, %v4418
    %v4420 = vshll.u32 2102212464, %v4408
    %v4421 = vshrl.u32 920167782, %v4409
    %v4422 = vor.u32 %v4420, %v4421
    %v4423 = vshll.u32 920167782, %v4408
    %v4424 = vshrl.u32 1326507024, %v4409
    %v4425 = vor.u32 %v4423, %v4424
    %vm4426 = vcmp.lt.s32.totalorder %v4407, 1
    %vm4427 = vcmp.lt.s32.totalorder %v4407, 2
    %vm4428 = vcmp.lt.s32.totalorder %v4407, 3
    %vm4429 = vcmp.lt.s32.totalorder %v4407, 4
    %v4430 = vsel %vm4426, %v4410, %v4413
    %v4431 = vsel %vm4429, %v4419, 2102212464
    %v4432 = vsel %vm4428, %v4416, %v4431
    %v4433 = vsel %vm4427, %v4430, %v4432
    %v4434 = vsel %vm4426, %v4413, %v4416
    %v4435 = vsel %vm4429, %v4422, 920167782
    %v4436 = vsel %vm4428, %v4419, %v4435
    %v4437 = vsel %vm4427, %v4434, %v4436
    %v4438 = vsel %vm4426, %v4416, %v4419
    %v4439 = vsel %vm4429, %v4425, 1326507024
    %v4440 = vsel %vm4428, %v4422, %v4439
    %v4441 = vsel %vm4427, %v4438, %v4440
    %v4442 = vshll.u32 %v4402, 8
    %v4443 = vmul.u32.u64.compose %v4442, %v4441
    %v4444 = vextract.low.u32 %v4443
    %v4445 = vextract.high.u32 %v4443
    %v4446 = vmul.u32.u64.compose %v4442, %v4437
    %v4447 = vextract.low.u32 %v4446
    %v4448 = vextract.high.u32 %v4446
    %v4449 = vmul.u32 %v4442, %v4433
    %v4450 = vadd.s32 %v4445, %v4447
    %vm4451 = vc.u32 %v4445, %v4447
    %v4452 = vadd.s32 %v4448, 1
    %v4453 = vsel %vm4451, %v4452, %v4448
    %v4454 = vadd.s32 %v4449, %v4453
    %v4455 = vadd.s32 %v4454, 536870912
    %v4456 = vshrl.u32 %v4455, 30
    %v4457 = vshll.u32 %v4456, 30
    %v4458 = vsub.s32 %v4454, %v4457
    %vm4459 = vcmp.lt.s32.totalorder %v4458, 0
    %v4460 = vsub.s32 0, %v4458
    %v4461 = vsel %vm4459, %v4460, %v4458
    %v4462 = vclz %v4461
    %v4463 = vsub.s32 %v4462, 2
    %vm4464 = vcmp.gt.s32.totalorder 0, %v4463
    %v4465 = vsel %vm4464, 0, %v4463
    %v4466 = vsub.s32 32, %v4465
    %v4467 = vshll.u32 %v4458, %v4465
    %v4468 = vshrl.u32 %v4450, %v4466
    %v4469 = vor.u32 %v4467, %v4468
    %v4470 = vsub.s32 4294967266, %v4465
    %v4471 = vadd.s32 %v4470, 127
    %v4472 = vshll.u32 %v4471, 23
    %v4473 = vor.u32 4788187, %v4472
    %v4474 = vand.u32 2147483647, %v4473
    %v4476 = vcvt.s32.f32 %v4469
    %v4477 = vmul.f32 %v4476, %v4474
    %v4478 = vxor.u32 %v4477, 2147483648
    %v4479 = vsel %vm4396, %v4478, %v4477
    %v4480 = vsub.s32 4, %v4456
    %v4481 = vsel %vm4396, %v4480, %v4456
    %v4482 = vsel %vm4395, %v1679, %v4479
    %v4483 = vsel %vm4395, 0, %v4481
    %v4484 = vcosq.f32.pop %v4482
    %v4485 = vsinq.f32.pop %v4482
    %vm4486 = vweird.f32 %v1679
    %v4487 = vadd.s32 %v4483, 3
    %v4488 = vand.u32 %v4487, 3
    %vm4489 = vcmp.lt.s32.totalorder %v4488, 2
    %vm4490 = vcmp.eq.s32.totalorder %v4488, 0
    %v4491 = vxor.u32 %v4485, 2147483648
    %v4492 = vsel %vm4490, %v4484, %v4491
    %vm4493 = vcmp.eq.s32.totalorder %v4488, 2
    %v4494 = vxor.u32 %v4484, 2147483648
    %v4495 = vsel %vm4493, %v4494, %v4485
    %v4496 = vsel %vm4489, %v4492, %v4495
    %v4497 = vsel %vm4486, nan, %v4496
    %v4498 = vand.u32 2147483647, %v1681
    %vm4499 = vcmp.le.f32.partialorder %v4498, 0.7853982
    %vm4500 = vcmp.lt.s32.totalorder %v1681, 0
    %v4501 = vand.u32 %v1681, 2139095040
    %v4502 = vshrl.u32 %v4501, 23
    %v4503 = vsub.s32 %v4502, 127
    %v4504 = vand.u32 2147483647, %v1681
    %v4505 = vand.u32 %v4504, 8388607
    %v4506 = vor.u32 %v4505, 8388608
    %v4507 = vsub.s32 0, %v4506
    %v4508 = vadd.s32 %v4503, 1
    %vm4509 = vcmp.gt.s32.totalorder %v4508, 0
    %v4510 = vsel %vm4509, %v4508, 0
    %v4511 = vshrl.u32 %v4510, 5
    %v4512 = vand.u32 %v4510, 31
    %v4513 = vsub.s32 32, %v4512
    %v4514 = vshrl.u32 683565275, %v4513
    %v4515 = vshll.u32 683565275, %v4512
    %v4516 = vshrl.u32 2475754826, %v4513
    %v4517 = vor.u32 %v4515, %v4516
    %v4518 = vshll.u32 2475754826, %v4512
    %v4519 = vshrl.u32 2131351028, %v4513
    %v4520 = vor.u32 %v4518, %v4519
    %v4521 = vshll.u32 2131351028, %v4512
    %v4522 = vshrl.u32 2102212464, %v4513
    %v4523 = vor.u32 %v4521, %v4522
    %v4524 = vshll.u32 2102212464, %v4512
    %v4525 = vshrl.u32 920167782, %v4513
    %v4526 = vor.u32 %v4524, %v4525
    %v4527 = vshll.u32 920167782, %v4512
    %v4528 = vshrl.u32 1326507024, %v4513
    %v4529 = vor.u32 %v4527, %v4528
    %vm4530 = vcmp.lt.s32.totalorder %v4511, 1
    %vm4531 = vcmp.lt.s32.totalorder %v4511, 2
    %vm4532 = vcmp.lt.s32.totalorder %v4511, 3
    %vm4533 = vcmp.lt.s32.totalorder %v4511, 4
    %v4534 = vsel %vm4530, %v4514, %v4517
    %v4535 = vsel %vm4533, %v4523, 2102212464
    %v4536 = vsel %vm4532, %v4520, %v4535
    %v4537 = vsel %vm4531, %v4534, %v4536
    %v4538 = vsel %vm4530, %v4517, %v4520
    %v4539 = vsel %vm4533, %v4526, 920167782
    %v4540 = vsel %vm4532, %v4523, %v4539
    %v4541 = vsel %vm4531, %v4538, %v4540
    %v4542 = vsel %vm4530, %v4520, %v4523
    %v4543 = vsel %vm4533, %v4529, 1326507024
    %v4544 = vsel %vm4532, %v4526, %v4543
    %v4545 = vsel %vm4531, %v4542, %v4544
    %v4546 = vshll.u32 %v4506, 8
    %v4547 = vmul.u32.u64.compose %v4546, %v4545
    %v4548 = vextract.low.u32 %v4547
    %v4549 = vextract.high.u32 %v4547
    %v4550 = vmul.u32.u64.compose %v4546, %v4541
    %v4551 = vextract.low.u32 %v4550
    %v4552 = vextract.high.u32 %v4550
    %v4553 = vmul.u32 %v4546, %v4537
    %v4554 = vadd.s32 %v4549, %v4551
    %vm4555 = vc.u32 %v4549, %v4551
    %v4556 = vadd.s32 %v4552, 1
    %v4557 = vsel %vm4555, %v4556, %v4552
    %v4558 = vadd.s32 %v4553, %v4557
    %v4559 = vadd.s32 %v4558, 536870912
    %v4560 = vshrl.u32 %v4559, 30
    %v4561 = vshll.u32 %v4560, 30
    %v4562 = vsub.s32 %v4558, %v4561
    %vm4563 = vcmp.lt.s32.totalorder %v4562, 0
    %v4564 = vsub.s32 0, %v4562
    %v4565 = vsel %vm4563, %v4564, %v4562
    %v4566 = vclz %v4565
    %v4567 = vsub.s32 %v4566, 2
    %vm4568 = vcmp.gt.s32.totalorder 0, %v4567
    %v4569 = vsel %vm4568, 0, %v4567
    %v4570 = vsub.s32 32, %v4569
    %v4571 = vshll.u32 %v4562, %v4569
    %v4572 = vshrl.u32 %v4554, %v4570
    %v4573 = vor.u32 %v4571, %v4572
    %v4574 = vsub.s32 4294967266, %v4569
    %v4575 = vadd.s32 %v4574, 127
    %v4576 = vshll.u32 %v4575, 23
    %v4577 = vor.u32 4788187, %v4576
    %v4578 = vand.u32 2147483647, %v4577
    %v4580 = vcvt.s32.f32 %v4573
    %v4581 = vmul.f32 %v4580, %v4578
    %v4582 = vxor.u32 %v4581, 2147483648
    %v4583 = vsel %vm4500, %v4582, %v4581
    %v4584 = vsub.s32 4, %v4560
    %v4585 = vsel %vm4500, %v4584, %v4560
    %v4586 = vsel %vm4499, %v1681, %v4583
    %v4587 = vsel %vm4499, 0, %v4585
    %v4588 = vcosq.f32.pop %v4586
    %v4589 = vsinq.f32.pop %v4586
    %vm4590 = vweird.f32 %v1681
    %v4591 = vadd.s32 %v4587, 3
    %v4592 = vand.u32 %v4591, 3
    %vm4593 = vcmp.lt.s32.totalorder %v4592, 2
    %vm4594 = vcmp.eq.s32.totalorder %v4592, 0
    %v4595 = vxor.u32 %v4589, 2147483648
    %v4596 = vsel %vm4594, %v4588, %v4595
    %vm4597 = vcmp.eq.s32.totalorder %v4592, 2
    %v4598 = vxor.u32 %v4588, 2147483648
    %v4599 = vsel %vm4597, %v4598, %v4589
    %v4600 = vsel %vm4593, %v4596, %v4599
    %v4601 = vsel %vm4590, nan, %v4600
    %v4602 = vand.u32 2147483647, %v878
    %vm4603 = vcmp.le.f32.partialorder %v4602, 0.7853982
    %vm4604 = vcmp.lt.s32.totalorder %v878, 0
    %v4605 = vand.u32 %v878, 2139095040
    %v4606 = vshrl.u32 %v4605, 23
    %v4607 = vsub.s32 %v4606, 127
    %v4608 = vand.u32 2147483647, %v878
    %v4609 = vand.u32 %v4608, 8388607
    %v4610 = vor.u32 %v4609, 8388608
    %v4611 = vsub.s32 0, %v4610
    %v4612 = vadd.s32 %v4607, 1
    %vm4613 = vcmp.gt.s32.totalorder %v4612, 0
    %v4614 = vsel %vm4613, %v4612, 0
    %v4615 = vshrl.u32 %v4614, 5
    %v4616 = vand.u32 %v4614, 31
    %v4617 = vsub.s32 32, %v4616
    %v4618 = vshrl.u32 683565275, %v4617
    %v4619 = vshll.u32 683565275, %v4616
    %v4620 = vshrl.u32 2475754826, %v4617
    %v4621 = vor.u32 %v4619, %v4620
    %v4622 = vshll.u32 2475754826, %v4616
    %v4623 = vshrl.u32 2131351028, %v4617
    %v4624 = vor.u32 %v4622, %v4623
    %v4625 = vshll.u32 2131351028, %v4616
    %v4626 = vshrl.u32 2102212464, %v4617
    %v4627 = vor.u32 %v4625, %v4626
    %v4628 = vshll.u32 2102212464, %v4616
    %v4629 = vshrl.u32 920167782, %v4617
    %v4630 = vor.u32 %v4628, %v4629
    %v4631 = vshll.u32 920167782, %v4616
    %v4632 = vshrl.u32 1326507024, %v4617
    %v4633 = vor.u32 %v4631, %v4632
    %vm4634 = vcmp.lt.s32.totalorder %v4615, 1
    %vm4635 = vcmp.lt.s32.totalorder %v4615, 2
    %vm4636 = vcmp.lt.s32.totalorder %v4615, 3
    %vm4637 = vcmp.lt.s32.totalorder %v4615, 4
    %v4638 = vsel %vm4634, %v4618, %v4621
    %v4639 = vsel %vm4637, %v4627, 2102212464
    %v4640 = vsel %vm4636, %v4624, %v4639
    %v4641 = vsel %vm4635, %v4638, %v4640
    %v4642 = vsel %vm4634, %v4621, %v4624
    %v4643 = vsel %vm4637, %v4630, 920167782
    %v4644 = vsel %vm4636, %v4627, %v4643
    %v4645 = vsel %vm4635, %v4642, %v4644
    %v4646 = vsel %vm4634, %v4624, %v4627
    %v4647 = vsel %vm4637, %v4633, 1326507024
    %v4648 = vsel %vm4636, %v4630, %v4647
    %v4649 = vsel %vm4635, %v4646, %v4648
    %v4650 = vshll.u32 %v4610, 8
    %v4651 = vmul.u32.u64.compose %v4650, %v4649
    %v4652 = vextract.low.u32 %v4651
    %v4653 = vextract.high.u32 %v4651
    %v4654 = vmul.u32.u64.compose %v4650, %v4645
    %v4655 = vextract.low.u32 %v4654
    %v4656 = vextract.high.u32 %v4654
    %v4657 = vmul.u32 %v4650, %v4641
    %v4658 = vadd.s32 %v4653, %v4655
    %vm4659 = vc.u32 %v4653, %v4655
    %v4660 = vadd.s32 %v4656, 1
    %v4661 = vsel %vm4659, %v4660, %v4656
    %v4662 = vadd.s32 %v4657, %v4661
    %v4663 = vadd.s32 %v4662, 536870912
    %v4664 = vshrl.u32 %v4663, 30
    %v4665 = vshll.u32 %v4664, 30
    %v4666 = vsub.s32 %v4662, %v4665
    %vm4667 = vcmp.lt.s32.totalorder %v4666, 0
    %v4668 = vsub.s32 0, %v4666
    %v4669 = vsel %vm4667, %v4668, %v4666
    %v4670 = vclz %v4669
    %v4671 = vsub.s32 %v4670, 2
    %vm4672 = vcmp.gt.s32.totalorder 0, %v4671
    %v4673 = vsel %vm4672, 0, %v4671
    %v4674 = vsub.s32 32, %v4673
    %v4675 = vshll.u32 %v4666, %v4673
    %v4676 = vshrl.u32 %v4658, %v4674
    %v4677 = vor.u32 %v4675, %v4676
    %v4678 = vsub.s32 4294967266, %v4673
    %v4679 = vadd.s32 %v4678, 127
    %v4680 = vshll.u32 %v4679, 23
    %v4681 = vor.u32 4788187, %v4680
    %v4682 = vand.u32 2147483647, %v4681
    %v4684 = vcvt.s32.f32 %v4677
    %v4685 = vmul.f32 %v4684, %v4682
    %v4686 = vxor.u32 %v4685, 2147483648
    %v4687 = vsel %vm4604, %v4686, %v4685
    %v4688 = vsub.s32 4, %v4664
    %v4689 = vsel %vm4604, %v4688, %v4664
    %v4690 = vsel %vm4603, %v878, %v4687
    %v4691 = vsel %vm4603, 0, %v4689
    %v4692 = vcosq.f32.pop %v4690
    %v4693 = vsinq.f32.pop %v4690
    %vm4694 = vweird.f32 %v878
    %v4695 = vadd.s32 %v4691, 3
    %v4696 = vand.u32 %v4695, 3
    %vm4697 = vcmp.lt.s32.totalorder %v4696, 2
    %vm4698 = vcmp.eq.s32.totalorder %v4696, 0
    %v4699 = vxor.u32 %v4693, 2147483648
    %v4700 = vsel %vm4698, %v4692, %v4699
    %vm4701 = vcmp.eq.s32.totalorder %v4696, 2
    %v4702 = vxor.u32 %v4692, 2147483648
    %v4703 = vsel %vm4701, %v4702, %v4693
    %v4704 = vsel %vm4697, %v4700, %v4703
    %v4705 = vsel %vm4694, nan, %v4704
    %v4706 = vand.u32 2147483647, %v880
    %vm4707 = vcmp.le.f32.partialorder %v4706, 0.7853982
    %vm4708 = vcmp.lt.s32.totalorder %v880, 0
    %v4709 = vand.u32 %v880, 2139095040
    %v4710 = vshrl.u32 %v4709, 23
    %v4711 = vsub.s32 %v4710, 127
    %v4712 = vand.u32 2147483647, %v880
    %v4713 = vand.u32 %v4712, 8388607
    %v4714 = vor.u32 %v4713, 8388608
    %v4715 = vsub.s32 0, %v4714
    %v4716 = vadd.s32 %v4711, 1
    %vm4717 = vcmp.gt.s32.totalorder %v4716, 0
    %v4718 = vsel %vm4717, %v4716, 0
    %v4719 = vshrl.u32 %v4718, 5
    %v4720 = vand.u32 %v4718, 31
    %v4721 = vsub.s32 32, %v4720
    %v4722 = vshrl.u32 683565275, %v4721
    %v4723 = vshll.u32 683565275, %v4720
    %v4724 = vshrl.u32 2475754826, %v4721
    %v4725 = vor.u32 %v4723, %v4724
    %v4726 = vshll.u32 2475754826, %v4720
    %v4727 = vshrl.u32 2131351028, %v4721
    %v4728 = vor.u32 %v4726, %v4727
    %v4729 = vshll.u32 2131351028, %v4720
    %v4730 = vshrl.u32 2102212464, %v4721
    %v4731 = vor.u32 %v4729, %v4730
    %v4732 = vshll.u32 2102212464, %v4720
    %v4733 = vshrl.u32 920167782, %v4721
    %v4734 = vor.u32 %v4732, %v4733
    %v4735 = vshll.u32 920167782, %v4720
    %v4736 = vshrl.u32 1326507024, %v4721
    %v4737 = vor.u32 %v4735, %v4736
    %vm4738 = vcmp.lt.s32.totalorder %v4719, 1
    %vm4739 = vcmp.lt.s32.totalorder %v4719, 2
    %vm4740 = vcmp.lt.s32.totalorder %v4719, 3
    %vm4741 = vcmp.lt.s32.totalorder %v4719, 4
    %v4742 = vsel %vm4738, %v4722, %v4725
    %v4743 = vsel %vm4741, %v4731, 2102212464
    %v4744 = vsel %vm4740, %v4728, %v4743
    %v4745 = vsel %vm4739, %v4742, %v4744
    %v4746 = vsel %vm4738, %v4725, %v4728
    %v4747 = vsel %vm4741, %v4734, 920167782
    %v4748 = vsel %vm4740, %v4731, %v4747
    %v4749 = vsel %vm4739, %v4746, %v4748
    %v4750 = vsel %vm4738, %v4728, %v4731
    %v4751 = vsel %vm4741, %v4737, 1326507024
    %v4752 = vsel %vm4740, %v4734, %v4751
    %v4753 = vsel %vm4739, %v4750, %v4752
    %v4754 = vshll.u32 %v4714, 8
    %v4755 = vmul.u32.u64.compose %v4754, %v4753
    %v4756 = vextract.low.u32 %v4755
    %v4757 = vextract.high.u32 %v4755
    %v4758 = vmul.u32.u64.compose %v4754, %v4749
    %v4759 = vextract.low.u32 %v4758
    %v4760 = vextract.high.u32 %v4758
    %v4761 = vmul.u32 %v4754, %v4745
    %v4762 = vadd.s32 %v4757, %v4759
    %vm4763 = vc.u32 %v4757, %v4759
    %v4764 = vadd.s32 %v4760, 1
    %v4765 = vsel %vm4763, %v4764, %v4760
    %v4766 = vadd.s32 %v4761, %v4765
    %v4767 = vadd.s32 %v4766, 536870912
    %v4768 = vshrl.u32 %v4767, 30
    %v4769 = vshll.u32 %v4768, 30
    %v4770 = vsub.s32 %v4766, %v4769
    %vm4771 = vcmp.lt.s32.totalorder %v4770, 0
    %v4772 = vsub.s32 0, %v4770
    %v4773 = vsel %vm4771, %v4772, %v4770
    %v4774 = vclz %v4773
    %v4775 = vsub.s32 %v4774, 2
    %vm4776 = vcmp.gt.s32.totalorder 0, %v4775
    %v4777 = vsel %vm4776, 0, %v4775
    %v4778 = vsub.s32 32, %v4777
    %v4779 = vshll.u32 %v4770, %v4777
    %v4780 = vshrl.u32 %v4762, %v4778
    %v4781 = vor.u32 %v4779, %v4780
    %v4782 = vsub.s32 4294967266, %v4777
    %v4783 = vadd.s32 %v4782, 127
    %v4784 = vshll.u32 %v4783, 23
    %v4785 = vor.u32 4788187, %v4784
    %v4786 = vand.u32 2147483647, %v4785
    %v4788 = vcvt.s32.f32 %v4781
    %v4789 = vmul.f32 %v4788, %v4786
    %v4790 = vxor.u32 %v4789, 2147483648
    %v4791 = vsel %vm4708, %v4790, %v4789
    %v4792 = vsub.s32 4, %v4768
    %v4793 = vsel %vm4708, %v4792, %v4768
    %v4794 = vsel %vm4707, %v880, %v4791
    %v4795 = vsel %vm4707, 0, %v4793
    %v4796 = vcosq.f32.pop %v4794
    %v4797 = vsinq.f32.pop %v4794
    %vm4798 = vweird.f32 %v880
    %v4799 = vadd.s32 %v4795, 3
    %v4800 = vand.u32 %v4799, 3
    %vm4801 = vcmp.lt.s32.totalorder %v4800, 2
    %vm4802 = vcmp.eq.s32.totalorder %v4800, 0
    %v4803 = vxor.u32 %v4797, 2147483648
    %v4804 = vsel %vm4802, %v4796, %v4803
    %vm4805 = vcmp.eq.s32.totalorder %v4800, 2
    %v4806 = vxor.u32 %v4796, 2147483648
    %v4807 = vsel %vm4805, %v4806, %v4797
    %v4808 = vsel %vm4801, %v4804, %v4807
    %v4809 = vsel %vm4798, nan, %v4808
    %v4810 = vand.u32 2147483647, %v1686
    %vm4811 = vcmp.le.f32.partialorder %v4810, 0.7853982
    %vm4812 = vcmp.lt.s32.totalorder %v1686, 0
    %v4813 = vand.u32 %v1686, 2139095040
    %v4814 = vshrl.u32 %v4813, 23
    %v4815 = vsub.s32 %v4814, 127
    %v4816 = vand.u32 2147483647, %v1686
    %v4817 = vand.u32 %v4816, 8388607
    %v4818 = vor.u32 %v4817, 8388608
    %v4819 = vsub.s32 0, %v4818
    %v4820 = vadd.s32 %v4815, 1
    %vm4821 = vcmp.gt.s32.totalorder %v4820, 0
    %v4822 = vsel %vm4821, %v4820, 0
    %v4823 = vshrl.u32 %v4822, 5
    %v4824 = vand.u32 %v4822, 31
    %v4825 = vsub.s32 32, %v4824
    %v4826 = vshrl.u32 683565275, %v4825
    %v4827 = vshll.u32 683565275, %v4824
    %v4828 = vshrl.u32 2475754826, %v4825
    %v4829 = vor.u32 %v4827, %v4828
    %v4830 = vshll.u32 2475754826, %v4824
    %v4831 = vshrl.u32 2131351028, %v4825
    %v4832 = vor.u32 %v4830, %v4831
    %v4833 = vshll.u32 2131351028, %v4824
    %v4834 = vshrl.u32 2102212464, %v4825
    %v4835 = vor.u32 %v4833, %v4834
    %v4836 = vshll.u32 2102212464, %v4824
    %v4837 = vshrl.u32 920167782, %v4825
    %v4838 = vor.u32 %v4836, %v4837
    %v4839 = vshll.u32 920167782, %v4824
    %v4840 = vshrl.u32 1326507024, %v4825
    %v4841 = vor.u32 %v4839, %v4840
    %vm4842 = vcmp.lt.s32.totalorder %v4823, 1
    %vm4843 = vcmp.lt.s32.totalorder %v4823, 2
    %vm4844 = vcmp.lt.s32.totalorder %v4823, 3
    %vm4845 = vcmp.lt.s32.totalorder %v4823, 4
    %v4846 = vsel %vm4842, %v4826, %v4829
    %v4847 = vsel %vm4845, %v4835, 2102212464
    %v4848 = vsel %vm4844, %v4832, %v4847
    %v4849 = vsel %vm4843, %v4846, %v4848
    %v4850 = vsel %vm4842, %v4829, %v4832
    %v4851 = vsel %vm4845, %v4838, 920167782
    %v4852 = vsel %vm4844, %v4835, %v4851
    %v4853 = vsel %vm4843, %v4850, %v4852
    %v4854 = vsel %vm4842, %v4832, %v4835
    %v4855 = vsel %vm4845, %v4841, 1326507024
    %v4856 = vsel %vm4844, %v4838, %v4855
    %v4857 = vsel %vm4843, %v4854, %v4856
    %v4858 = vshll.u32 %v4818, 8
    %v4859 = vmul.u32.u64.compose %v4858, %v4857
    %v4860 = vextract.low.u32 %v4859
    %v4861 = vextract.high.u32 %v4859
    %v4862 = vmul.u32.u64.compose %v4858, %v4853
    %v4863 = vextract.low.u32 %v4862
    %v4864 = vextract.high.u32 %v4862
    %v4865 = vmul.u32 %v4858, %v4849
    %v4866 = vadd.s32 %v4861, %v4863
    %vm4867 = vc.u32 %v4861, %v4863
    %v4868 = vadd.s32 %v4864, 1
    %v4869 = vsel %vm4867, %v4868, %v4864
    %v4870 = vadd.s32 %v4865, %v4869
    %v4871 = vadd.s32 %v4870, 536870912
    %v4872 = vshrl.u32 %v4871, 30
    %v4873 = vshll.u32 %v4872, 30
    %v4874 = vsub.s32 %v4870, %v4873
    %vm4875 = vcmp.lt.s32.totalorder %v4874, 0
    %v4876 = vsub.s32 0, %v4874
    %v4877 = vsel %vm4875, %v4876, %v4874
    %v4878 = vclz %v4877
    %v4879 = vsub.s32 %v4878, 2
    %vm4880 = vcmp.gt.s32.totalorder 0, %v4879
    %v4881 = vsel %vm4880, 0, %v4879
    %v4882 = vsub.s32 32, %v4881
    %v4883 = vshll.u32 %v4874, %v4881
    %v4884 = vshrl.u32 %v4866, %v4882
    %v4885 = vor.u32 %v4883, %v4884
    %v4886 = vsub.s32 4294967266, %v4881
    %v4887 = vadd.s32 %v4886, 127
    %v4888 = vshll.u32 %v4887, 23
    %v4889 = vor.u32 4788187, %v4888
    %v4890 = vand.u32 2147483647, %v4889
    %v4892 = vcvt.s32.f32 %v4885
    %v4893 = vmul.f32 %v4892, %v4890
    %v4894 = vxor.u32 %v4893, 2147483648
    %v4895 = vsel %vm4812, %v4894, %v4893
    %v4896 = vsub.s32 4, %v4872
    %v4897 = vsel %vm4812, %v4896, %v4872
    %v4898 = vsel %vm4811, %v1686, %v4895
    %v4899 = vsel %vm4811, 0, %v4897
    %v4900 = vcosq.f32.pop %v4898
    %v4901 = vsinq.f32.pop %v4898
    %vm4902 = vweird.f32 %v1686
    %v4903 = vadd.s32 %v4899, 3
    %v4904 = vand.u32 %v4903, 3
    %vm4905 = vcmp.lt.s32.totalorder %v4904, 2
    %vm4906 = vcmp.eq.s32.totalorder %v4904, 0
    %v4907 = vxor.u32 %v4901, 2147483648
    %v4908 = vsel %vm4906, %v4900, %v4907
    %vm4909 = vcmp.eq.s32.totalorder %v4904, 2
    %v4910 = vxor.u32 %v4900, 2147483648
    %v4911 = vsel %vm4909, %v4910, %v4901
    %v4912 = vsel %vm4905, %v4908, %v4911
    %v4913 = vsel %vm4902, nan, %v4912
    %v4914 = vand.u32 2147483647, %v1688
    %vm4915 = vcmp.le.f32.partialorder %v4914, 0.7853982
    %vm4916 = vcmp.lt.s32.totalorder %v1688, 0
    %v4917 = vand.u32 %v1688, 2139095040
    %v4918 = vshrl.u32 %v4917, 23
    %v4919 = vsub.s32 %v4918, 127
    %v4920 = vand.u32 2147483647, %v1688
    %v4921 = vand.u32 %v4920, 8388607
    %v4922 = vor.u32 %v4921, 8388608
    %v4923 = vsub.s32 0, %v4922
    %v4924 = vadd.s32 %v4919, 1
    %vm4925 = vcmp.gt.s32.totalorder %v4924, 0
    %v4926 = vsel %vm4925, %v4924, 0
    %v4927 = vshrl.u32 %v4926, 5
    %v4928 = vand.u32 %v4926, 31
    %v4929 = vsub.s32 32, %v4928
    %v4930 = vshrl.u32 683565275, %v4929
    %v4931 = vshll.u32 683565275, %v4928
    %v4932 = vshrl.u32 2475754826, %v4929
    %v4933 = vor.u32 %v4931, %v4932
    %v4934 = vshll.u32 2475754826, %v4928
    %v4935 = vshrl.u32 2131351028, %v4929
    %v4936 = vor.u32 %v4934, %v4935
    %v4937 = vshll.u32 2131351028, %v4928
    %v4938 = vshrl.u32 2102212464, %v4929
    %v4939 = vor.u32 %v4937, %v4938
    %v4940 = vshll.u32 2102212464, %v4928
    %v4941 = vshrl.u32 920167782, %v4929
    %v4942 = vor.u32 %v4940, %v4941
    %v4943 = vshll.u32 920167782, %v4928
    %v4944 = vshrl.u32 1326507024, %v4929
    %v4945 = vor.u32 %v4943, %v4944
    %vm4946 = vcmp.lt.s32.totalorder %v4927, 1
    %vm4947 = vcmp.lt.s32.totalorder %v4927, 2
    %vm4948 = vcmp.lt.s32.totalorder %v4927, 3
    %vm4949 = vcmp.lt.s32.totalorder %v4927, 4
    %v4950 = vsel %vm4946, %v4930, %v4933
    %v4951 = vsel %vm4949, %v4939, 2102212464
    %v4952 = vsel %vm4948, %v4936, %v4951
    %v4953 = vsel %vm4947, %v4950, %v4952
    %v4954 = vsel %vm4946, %v4933, %v4936
    %v4955 = vsel %vm4949, %v4942, 920167782
    %v4956 = vsel %vm4948, %v4939, %v4955
    %v4957 = vsel %vm4947, %v4954, %v4956
    %v4958 = vsel %vm4946, %v4936, %v4939
    %v4959 = vsel %vm4949, %v4945, 1326507024
    %v4960 = vsel %vm4948, %v4942, %v4959
    %v4961 = vsel %vm4947, %v4958, %v4960
    %v4962 = vshll.u32 %v4922, 8
    %v4963 = vmul.u32.u64.compose %v4962, %v4961
    %v4964 = vextract.low.u32 %v4963
    %v4965 = vextract.high.u32 %v4963
    %v4966 = vmul.u32.u64.compose %v4962, %v4957
    %v4967 = vextract.low.u32 %v4966
    %v4968 = vextract.high.u32 %v4966
    %v4969 = vmul.u32 %v4962, %v4953
    %v4970 = vadd.s32 %v4965, %v4967
    %vm4971 = vc.u32 %v4965, %v4967
    %v4972 = vadd.s32 %v4968, 1
    %v4973 = vsel %vm4971, %v4972, %v4968
    %v4974 = vadd.s32 %v4969, %v4973
    %v4975 = vadd.s32 %v4974, 536870912
    %v4976 = vshrl.u32 %v4975, 30
    %v4977 = vshll.u32 %v4976, 30
    %v4978 = vsub.s32 %v4974, %v4977
    %vm4979 = vcmp.lt.s32.totalorder %v4978, 0
    %v4980 = vsub.s32 0, %v4978
    %v4981 = vsel %vm4979, %v4980, %v4978
    %v4982 = vclz %v4981
    %v4983 = vsub.s32 %v4982, 2
    %vm4984 = vcmp.gt.s32.totalorder 0, %v4983
    %v4985 = vsel %vm4984, 0, %v4983
    %v4986 = vsub.s32 32, %v4985
    %v4987 = vshll.u32 %v4978, %v4985
    %v4988 = vshrl.u32 %v4970, %v4986
    %v4989 = vor.u32 %v4987, %v4988
    %v4990 = vsub.s32 4294967266, %v4985
    %v4991 = vadd.s32 %v4990, 127
    %v4992 = vshll.u32 %v4991, 23
    %v4993 = vor.u32 4788187, %v4992
    %v4994 = vand.u32 2147483647, %v4993
    %v4996 = vcvt.s32.f32 %v4989
    %v4997 = vmul.f32 %v4996, %v4994
    %v4998 = vxor.u32 %v4997, 2147483648
    %v4999 = vsel %vm4916, %v4998, %v4997
    %v5000 = vsub.s32 4, %v4976
    %v5001 = vsel %vm4916, %v5000, %v4976
    %v5002 = vsel %vm4915, %v1688, %v4999
    %v5003 = vsel %vm4915, 0, %v5001
    %v5004 = vcosq.f32.pop %v5002
    %v5005 = vsinq.f32.pop %v5002
    %vm5006 = vweird.f32 %v1688
    %v5007 = vadd.s32 %v5003, 3
    %v5008 = vand.u32 %v5007, 3
    %vm5009 = vcmp.lt.s32.totalorder %v5008, 2
    %vm5010 = vcmp.eq.s32.totalorder %v5008, 0
    %v5011 = vxor.u32 %v5005, 2147483648
    %v5012 = vsel %vm5010, %v5004, %v5011
    %vm5013 = vcmp.eq.s32.totalorder %v5008, 2
    %v5014 = vxor.u32 %v5004, 2147483648
    %v5015 = vsel %vm5013, %v5014, %v5005
    %v5016 = vsel %vm5009, %v5012, %v5015
    %v5017 = vsel %vm5006, nan, %v5016
    %5018 = vst [vmem:[#allocation2] sm:$0xff] %v1793
    %5019 = vst [vmem:[#allocation2 + $0x8] sm:$0xff] %v1897
    %5020 = vst [vmem:[#allocation2 + $0x10] sm:$0xff] %v2001
    %5021 = vst [vmem:[#allocation2 + $0x18] sm:$0xff] %v2105
    %5022 = vst [vmem:[#allocation2 + $0x20] sm:$0xff] %v2209
    %5023 = vst [vmem:[#allocation2 + $0x28] sm:$0xff] %v2313
    %5024 = vst [vmem:[#allocation2 + $0x30] sm:$0xff] %v2417
    %5025 = vst [vmem:[#allocation2 + $0x38] sm:$0xff] %v2521
    %5026 = vst [vmem:[#allocation2 + $0x40] sm:$0xff] %v2625
    %5027 = vst [vmem:[#allocation2 + $0x48] sm:$0xff] %v2729
    %5028 = vst [vmem:[#allocation2 + $0x50] sm:$0xff] %v2833
    %5029 = vst [vmem:[#allocation2 + $0x58] sm:$0xff] %v2937
    %5030 = vst [vmem:[#allocation2 + $0x60] sm:$0xff] %v3041
    %5031 = vst [vmem:[#allocation2 + $0x68] sm:$0xff] %v3145
    %5032 = vst [vmem:[#allocation2 + $0x70] sm:$0xff] %v3249
    %5033 = vst [vmem:[#allocation2 + $0x78] sm:$0xff] %v3353
    %5034 = vst [vmem:[#allocation2 + $0x80] sm:$0xff] %v3457
    %5035 = vst [vmem:[#allocation2 + $0x88] sm:$0xff] %v3561
    %5036 = vst [vmem:[#allocation2 + $0x90] sm:$0xff] %v3665
    %5037 = vst [vmem:[#allocation2 + $0x98] sm:$0xff] %v3769
    %5038 = vst [vmem:[#allocation2 + $0xa0] sm:$0xff] %v3873
    %5039 = vst [vmem:[#allocation2 + $0xa8] sm:$0xff] %v3977
    %5040 = vst [vmem:[#allocation2 + $0xb0] sm:$0xff] %v4081
    %5041 = vst [vmem:[#allocation2 + $0xb8] sm:$0xff] %v4185
    %5042 = vst [vmem:[#allocation2 + $0xc0] sm:$0xff] %v4289
    %5043 = vst [vmem:[#allocation2 + $0xc8] sm:$0xff] %v4393
    %5044 = vst [vmem:[#allocation2 + $0xd0] sm:$0xff] %v4497
    %5045 = vst [vmem:[#allocation2 + $0xd8] sm:$0xff] %v4601
    %5046 = vst [vmem:[#allocation2 + $0xe0] sm:$0xff] %v4705
    %5047 = vst [vmem:[#allocation2 + $0xe8] sm:$0xff] %v4809
    %5048 = vst [vmem:[#allocation2 + $0xf0] sm:$0xff] %v4913
    %5049 = vst [vmem:[#allocation2 + $0xf8] sm:$0xff] %v5017
    // Predicated region
    $region14: #{tpu_custom_call.1} parent=1 // pred_check
      _
    $region15: #{tpu_custom_call.1} parent=1 // pred_check_branch
      %5051 = sbr.rel (0) target = $region17
    $region16: #{tpu_custom_call.1} parent=1 // pred_region
      %s5053 = ssub.s32 4096, 4096
      %5054 = vsyncadd [#allocation3], %s5053
      %s5055 = sshll.u32 [#allocation2], 4
      %s5056 = int_to_ptr.vmem [resolvable:$true] %s5055
      %5061 = dma.vmem_to_hbm [thread:$0]  %s5056, 4096, %s3, [#allocation3], 512, 512, 32
    $region17: #{tpu_custom_call.1} parent=1 // pred_fallthru
      _
    // Predicated region
    $region18: #{tpu_custom_call.1} parent=1 // pred_check
      _
    $region19: #{tpu_custom_call.1} parent=1 // pred_check_branch
      %5063 = sbr.rel (0) target = $region21
    $region20: #{tpu_custom_call.1} parent=1 // pred_region
      %5064 = dma.done [#allocation3], 4096
    $region21: #{tpu_custom_call.1} parent=1 // pred_fallthru
      _
    %5065 = vsyncpa [#allocation3], 1

</llo_original>
